<compile_context>
chip_gen: v7x
topology: tpu7x:2x2x1
jax: 0.10.0
libtpu: 0.0.40
codegen_flags: <defaults>
</compile_context>

<pallas_src>
import functools

import jax
import jax.numpy as jnp
import numpy as np
from jax.experimental import pallas as pl
from jax.experimental.pallas import tpu as pltpu

KSIZE = 7
PAD = (KSIZE - 1) // 2
BN_EPS = 1e-5


def _pick_block(total, unit_bytes, budget_bytes, tile):
    """Largest divisor of `total` that is `total` itself or a multiple of `tile`
    (Mosaic block-shape alignment) and whose block fits in `budget_bytes`."""
    cands = [d for d in range(1, total + 1)
             if total % d == 0 and (d == total or d % tile == 0)]
    fits = [d for d in cands if d * unit_bytes <= budget_bytes]
    return max(fits) if fits else min(cands)


def _vmem_limit_bytes():
    # Clamp to the actual per-core VMEM (v7x has only 64 MiB) minus headroom.
    try:
        cap = int(pltpu.get_tpu_info().vmem_capacity_bytes)
    except Exception:
        cap = 64 * 1024 * 1024
    return int(min(48 * 1024 * 1024, max(16 * 1024 * 1024, cap - 16 * 1024 * 1024)))


# --------------------------- Phase 1: stats / gates -----------------------------


def cbam_stage1_kernel(x_ref, w1_ref, b1_ref, w2_ref, b2_ref, cw_ref,
                       rmask_ref, cmask_ref, ca_ref, conv_ref,
                       *, W, HW, C_CHUNK):
    nb, C, HWp = x_ref.shape           # (block_N, C, padded H*W)
    padded = HWp != HW

    # ---- Channel attention: avg/max pool over H*W, streamed over C chunks.
    sum_parts, max_parts = [], []
    if padded:
        valid = rmask_ref[PAD:PAD + 1, :]          # (1, HWp): (flat < HW) mask
    for c0 in range(0, C, C_CHUNK):
        c1 = min(C, c0 + C_CHUNK)
        xs = x_ref[:, c0:c1, :]                    # (nb, cc, HWp)
        sum_parts.append(jnp.sum(xs, axis=2))
        xm = jnp.where(valid[None] > 0.0, xs, -jnp.inf) if padded else xs
        max_parts.append(jnp.max(xm, axis=2))
    avg_pool = jnp.concatenate(sum_parts, axis=1) * (1.0 / HW)       # (nb, C)
    max_pool = jnp.concatenate(max_parts, axis=1)                    # (nb, C)

    # Fused shared MLP: both pooling branches through one pair of dots (tiny; MXU).
    pooled = jnp.concatenate([avg_pool, max_pool], axis=0)           # (2nb, C)
    h = jnp.dot(pooled, w1_ref[...], preferred_element_type=jnp.float32) + b1_ref[...]
    h = jnp.maximum(h, 0.0)
    logits = jnp.dot(h, w2_ref[...], preferred_element_type=jnp.float32) + b2_ref[...]
    ca = jax.nn.sigmoid(logits[:nb] + logits[nb:])                   # (nb, C)
    ca_ref[...] = ca

    # ---- ChannelPool of x*ca (max / mean over C) WITHOUT materializing x1.
    sum_c = jnp.zeros((nb, HWp), jnp.float32)
    max_c = jnp.full((nb, HWp), -jnp.inf, dtype=jnp.float32)
    for c0 in range(0, C, C_CHUNK):
        c1 = min(C, c0 + C_CHUNK)
        x1c = x_ref[:, c0:c1, :] * ca[:, c0:c1, None]
        sum_c = sum_c + jnp.sum(x1c, axis=1)
        max_c = jnp.maximum(max_c, jnp.max(x1c, axis=1))
    cp = jnp.concatenate([max_c, sum_c * (1.0 / C)], axis=0)         # (2nb, HWp)

    # ---- 7x7 conv (2 -> 1 channels, "same" padding, no bias) via XLU lane rolls.
    # TODO(synk): for W >= 128 keep the pool maps as (2nb*H, W) and use 6 column rolls
    # + sublane-shifted reads instead of 48 flattened-HW rolls (v6e XLU pressure).
    rmask = rmask_ref[...]                                           # (7, HWp)
    cmask = cmask_ref[...]                                           # (7, HWp)
    conv = jnp.zeros((nb, HWp), jnp.float32)
    for di in range(KSIZE):
        dr = di - PAD
        acc = jnp.zeros((nb, HWp), jnp.float32)
        for dj in range(KSIZE):
            dc = dj - PAD
            s = dr * W + dc                        # flat source offset of this tap
            shifted = cp if s == 0 else pltpu.roll(cp, (-s) % HWp, 1)
            tap = (shifted[:nb] * cw_ref[0, di * KSIZE + dj]
                   + shifted[nb:] * cw_ref[1, di * KSIZE + dj])
            acc = acc + tap * cmask[dj:dj + 1, :]  # column mask per tap
        conv = conv + acc * rmask[di:di + 1, :]    # row mask hoisted out of dj loop
    conv_ref[...] = conv


# --------------------------- Phase 2: apply both gates --------------------------


def cbam_stage2_kernel(x_ref, ca_ref, conv_ref, bnp_ref, o_ref):
    scale = bnp_ref[0, 0]                                            # gamma / sqrt(var+eps)
    shift = bnp_ref[0, 1]                                            # beta  - mu * scale
    sa = jax.nn.sigmoid(conv_ref[...] * scale + shift)               # (nb, HWp)
    # Single fused lane-dense store; x1 = x*ca is never written to HBM.
    o_ref[...] = x_ref[...] * ca_ref[...][:, :, None] * sa[:, None, :]


# --------------------------------- Wrapper --------------------------------------


@jax.jit
def cbam_pallas(x, w1, b1, w2, b2, conv_w_2x49, gamma, beta):
    N, C, H, W = x.shape
    HW = H * W
    HWp = ((HW + 127) // 128) * 128                # lane-dense stores at any H*W
    x2 = x.reshape(N, C, HW)
    if HWp != HW:
        x2 = jnp.pad(x2, ((0, 0), (0, 0), (0, HWp - HW)))

    # Conv boundary masks: independent of N, built once at (7, HWp) with integer math.
    flat = jnp.arange(HWp, dtype=jnp.int32)
    row = flat // W
    col = flat - row * W
    in_img = flat < HW
    rmask = jnp.stack([((row + d) >= 0) & ((row + d) <= H - 1) & in_img
                       for d in range(-PAD, PAD + 1)]).astype(jnp.float32)
    cmask = jnp.stack([((col + d) >= 0) & ((col + d) <= W - 1)
                       for d in range(-PAD, PAD + 1)]).astype(jnp.float32)

    vmem_limit = _vmem_limit_bytes()
    f32 = jnp.float32

    # ---------------- Phase 1: grid over N (parallel). ----------------
    bn1 = _pick_block(N, C * HWp * 4, 4 * 1024 * 1024, 8)
    c_chunk = min(C, max(8, (512 * 1024) // max(1, bn1 * HWp * 4)))

    def full1(shape):
        return pl.BlockSpec(shape, lambda i: (0,) * len(shape))

    ca, conv = pl.pallas_call(
        functools.partial(cbam_stage1_kernel, W=W, HW=HW, C_CHUNK=c_chunk),
        out_shape=(jax.ShapeDtypeStruct((N, C), f32),
                   jax.ShapeDtypeStruct((N, HWp), f32)),
        grid=(N // bn1,),
        in_specs=[pl.BlockSpec((bn1, C, HWp), lambda i: (i, 0, 0)),
                  full1(w1.shape), full1(b1.shape), full1(w2.shape), full1(b2.shape),
                  pl.BlockSpec(memory_space=pltpu.MemorySpace.SMEM),   # conv weights
                  full1(rmask.shape), full1(cmask.shape)],
        out_specs=(pl.BlockSpec((bn1, C), lambda i: (i, 0)),
                   pl.BlockSpec((bn1, HWp), lambda i: (i, 0))),
        compiler_params=pltpu.CompilerParams(
            dimension_semantics=("parallel",), vmem_limit_bytes=vmem_limit),
    )(x2, w1, b1, w2, b2, conv_w_2x49, rmask, cmask)

    # Cross-batch BatchNorm statistics (training mode) couple every sample, so this
    # tiny O(N*HW) reduction runs between the two pallas_calls (stable two-pass var).
    conv_valid = conv[:, :HW] if HWp != HW else conv
    mu = jnp.mean(conv_valid)
    var = jnp.mean(jnp.square(conv_valid - mu))
    scale = gamma[0, 0] * jax.lax.rsqrt(var + BN_EPS)
    shift = beta[0, 0] - mu * scale
    bn_params = jnp.stack([scale, shift]).reshape(1, 2).astype(f32)

    # ---------------- Phase 2: grid over (N, C) blocks (parallel x parallel). -----
    bc = _pick_block(C, HWp * 4, 1 * 1024 * 1024, 128)
    bn2 = _pick_block(N, bc * HWp * 4, 2 * 1024 * 1024, 8)

    out = pl.pallas_call(
        cbam_stage2_kernel,
        out_shape=jax.ShapeDtypeStruct((N, C, HWp), f32),
        grid=(N // bn2, C // bc),
        in_specs=[pl.BlockSpec((bn2, bc, HWp), lambda i, j: (i, j, 0)),
                  pl.BlockSpec((bn2, bc), lambda i, j: (i, j)),
                  pl.BlockSpec((bn2, HWp), lambda i, j: (i, 0)),
                  pl.BlockSpec(memory_space=pltpu.MemorySpace.SMEM)],  # (scale, shift)
        out_specs=pl.BlockSpec((bn2, bc, HWp), lambda i, j: (i, j, 0)),
        compiler_params=pltpu.CompilerParams(
            dimension_semantics=("parallel", "parallel"),
            vmem_limit_bytes=vmem_limit),
    )(x2, ca, conv, bn_params)

    out = out[:, :, :HW] if HWp != HW else out
    return out.reshape(N, C, H, W)


# --------------------------------- Reference ------------------------------------


def cbam_reference(x, w1, b1, w2, b2, conv_w_2x49, gamma, beta):
    """Pure-JAX reference mirroring the PyTorch forward (training-mode BN)."""
    N, C, H, W = x.shape
    avg_pool = x.mean(axis=(2, 3))
    max_pool = x.max(axis=(2, 3))

    def mlp(p):
        return jnp.maximum(p @ w1 + b1, 0.0) @ w2 + b2

    ca = jax.nn.sigmoid(mlp(avg_pool) + mlp(max_pool))
    x1 = x * ca[:, :, None, None]

    cp = jnp.stack([x1.max(axis=1), x1.mean(axis=1)], axis=1)          # (N, 2, H, W)
    w_oihw = conv_w_2x49.reshape(2, KSIZE, KSIZE)[None]                # (1, 2, 7, 7)
    conv = jax.lax.conv_general_dilated(
        cp, w_oihw, window_strides=(1, 1),
        padding=[(PAD, PAD), (PAD, PAD)],
        dimension_numbers=("NCHW", "OIHW", "NCHW"))[:, 0]              # (N, H, W)

    mu = conv.mean()
    var = ((conv - mu) ** 2).mean()
    y = (conv - mu) / jnp.sqrt(var + BN_EPS) * gamma[0, 0] + beta[0, 0]
    sa = jax.nn.sigmoid(y)
    return x1 * sa[:, None, :, :]


if __name__ == "__main__":
    # Small shapes consistent with the module: reduction_ratio=16 => C must be >= 16.
    N, C, H, W = 2, 32, 16, 16
    RR = 16
    CR = C // RR

    key = jax.random.PRNGKey(0)
    kx, kw1, kb1, kw2, kb2, kcw = jax.random.split(key, 6)

    x = jax.random.normal(kx, (N, C, H, W), dtype=jnp.float32)

    # Deterministic synthetic parameters (shapes from Channel_Attention / Spatial_Attention).
    w1 = 0.1 * jax.random.normal(kw1, (C, CR), dtype=jnp.float32)      # Linear(C, C//r).weight.T
    b1 = 0.1 * jax.random.normal(kb1, (1, CR), dtype=jnp.float32)
    w2 = 0.1 * jax.random.normal(kw2, (CR, C), dtype=jnp.float32)      # Linear(C//r, C).weight.T
    b2 = 0.1 * jax.random.normal(kb2, (1, C), dtype=jnp.float32)
    conv_w = 0.1 * jax.random.normal(kcw, (2, KSIZE * KSIZE), dtype=jnp.float32)  # Conv2d(2,1,7) flat
    gamma = jnp.ones((1, 1), dtype=jnp.float32)                        # BatchNorm2d(1) affine init
    beta = jnp.zeros((1, 1), dtype=jnp.float32)

    out = cbam_pallas(x, w1, b1, w2, b2, conv_w, gamma, beta)
    out = jax.block_until_ready(out)

    ref = cbam_reference(x, w1, b1, w2, b2, conv_w, gamma, beta)
    np.testing.assert_allclose(np.asarray(out), np.asarray(ref), rtol=1e-4, atol=1e-4)

    print("KERNEL_OK")
</pallas_src>

<mosaic_0001>
module attributes {stable_mosaic.version = 11 : i64} {
  func.func @cbam_stage2_kernel(%arg0: i32, %arg1: i32, %arg2: memref<2x32x256xf32, #tpu.memory_space<vmem>>, %arg3: memref<2x32xf32, #tpu.memory_space<vmem>>, %arg4: memref<2x256xf32, #tpu.memory_space<vmem>>, %arg5: memref<1x2xf32, #tpu.memory_space<smem>>, %arg6: memref<2x32x256xf32, #tpu.memory_space<vmem>>) attributes {dimension_semantics = [#tpu.dimension_semantics<parallel>, #tpu.dimension_semantics<parallel>], iteration_bounds = array<i64: 1, 1>, scalar_prefetch = 0 : i64, scratch_operands = 0 : i64, tpu.core_type = #tpu.core_type<tc>, window_params = [{transform_indices = @transform_0, window_bounds = array<i64: 2, 32, 256>}, {transform_indices = @transform_1, window_bounds = array<i64: 2, 32>}, {transform_indices = @transform_2, window_bounds = array<i64: 2, 256>}, {transform_indices = @transform_3, window_bounds = array<i64: 1, 2>}, {transform_indices = @transform_4, window_bounds = array<i64: 2, 32, 256>}]} {
    %c0 = arith.constant 0 : index
    %c0_0 = arith.constant 0 : index
    %0 = memref.load %arg5[%c0, %c0_0] : memref<1x2xf32, #tpu.memory_space<smem>>
    %c0_1 = arith.constant 0 : index
    %c1 = arith.constant 1 : index
    %1 = memref.load %arg5[%c0_1, %c1] : memref<1x2xf32, #tpu.memory_space<smem>>
    %c0_2 = arith.constant 0 : index
    %c0_3 = arith.constant 0 : index
    %2 = vector.load %arg4[%c0_2, %c0_3] : memref<2x256xf32, #tpu.memory_space<vmem>>, vector<2x256xf32>
    %3 = vector.broadcast %0 : f32 to vector<2x256xf32>
    %4 = arith.mulf %2, %3 : vector<2x256xf32>
    %5 = vector.broadcast %1 : f32 to vector<2x256xf32>
    %6 = arith.addf %4, %5 : vector<2x256xf32>
    %7 = arith.negf %6 : vector<2x256xf32>
    %8 = math.exp %7 : vector<2x256xf32>
    %cst = arith.constant 1.000000e+00 : f32
    %9 = vector.broadcast %cst : f32 to vector<2x256xf32>
    %10 = arith.addf %9, %8 : vector<2x256xf32>
    %11 = arith.divf %9, %10 : vector<2x256xf32>
    %c0_4 = arith.constant 0 : index
    %c0_5 = arith.constant 0 : index
    %c0_6 = arith.constant 0 : index
    %12 = vector.load %arg2[%c0_4, %c0_5, %c0_6] : memref<2x32x256xf32, #tpu.memory_space<vmem>>, vector<2x32x256xf32>
    %c0_7 = arith.constant 0 : index
    %c0_8 = arith.constant 0 : index
    %13 = vector.load %arg3[%c0_7, %c0_8] : memref<2x32xf32, #tpu.memory_space<vmem>>, vector<2x32xf32>
    %14 = vector.shape_cast %13 : vector<2x32xf32> to vector<2x32x1xf32>
    %15 = vector.broadcast %14 : vector<2x32x1xf32> to vector<2x32x256xf32>
    %16 = arith.mulf %12, %15 : vector<2x32x256xf32>
    %17 = vector.shape_cast %11 : vector<2x256xf32> to vector<2x1x256xf32>
    %18 = vector.broadcast %17 : vector<2x1x256xf32> to vector<2x32x256xf32>
    %19 = arith.mulf %16, %18 : vector<2x32x256xf32>
    %c0_9 = arith.constant 0 : index
    %c0_10 = arith.constant 0 : index
    %c0_11 = arith.constant 0 : index
    %20 = vector.load %arg6[%c0_9, %c0_10, %c0_11] : memref<2x32x256xf32, #tpu.memory_space<vmem>>, vector<2x32x256xf32>
    tpu.vector_store %arg6[%c0_9, %c0_10, %c0_11], %19 {strides = array<i32>} : memref<2x32x256xf32, #tpu.memory_space<vmem>>, vector<2x32x256xf32>,
    return
  }
  func.func @transform_0(%arg0: i32, %arg1: i32) -> (i32, i32, i32) {
    %c0_i32 = arith.constant 0 : i32
    %c0_i32_0 = arith.constant 0 : i32
    return %arg0, %arg1, %c0_i32 : i32, i32, i32
  }
  func.func @transform_1(%arg0: i32, %arg1: i32) -> (i32, i32) {
    %c0_i32 = arith.constant 0 : i32
    return %arg0, %arg1 : i32, i32
  }
  func.func @transform_2(%arg0: i32, %arg1: i32) -> (i32, i32) {
    %c0_i32 = arith.constant 0 : i32
    %c0_i32_0 = arith.constant 0 : i32
    return %arg0, %c0_i32 : i32, i32
  }
  func.func @transform_3(%arg0: i32, %arg1: i32) -> (i32, i32) {
    %c0_i32 = arith.constant 0 : i32
    %c0_i32_0 = arith.constant 0 : i32
    %c0_i32_1 = arith.constant 0 : i32
    return %c0_i32, %c0_i32_0 : i32, i32
  }
  func.func @transform_4(%arg0: i32, %arg1: i32) -> (i32, i32, i32) {
    %c0_i32 = arith.constant 0 : i32
    %c0_i32_0 = arith.constant 0 : i32
    return %arg0, %arg1, %c0_i32 : i32, i32, i32
  }
}

module attributes {stable_mosaic.version = 11 : i64} {
  func.func @cbam_stage1_kernel(%arg0: i32, %arg1: memref<2x32x256xf32, #tpu.memory_space<vmem>>, %arg2: memref<32x2xf32, #tpu.memory_space<vmem>>, %arg3: memref<1x2xf32, #tpu.memory_space<vmem>>, %arg4: memref<2x32xf32, #tpu.memory_space<vmem>>, %arg5: memref<1x32xf32, #tpu.memory_space<vmem>>, %arg6: memref<2x49xf32, #tpu.memory_space<smem>>, %arg7: memref<7x256xf32, #tpu.memory_space<vmem>>, %arg8: memref<7x256xf32, #tpu.memory_space<vmem>>, %arg9: memref<2x32xf32, #tpu.memory_space<vmem>>, %arg10: memref<2x256xf32, #tpu.memory_space<vmem>>) attributes {dimension_semantics = [#tpu.dimension_semantics<parallel>], iteration_bounds = array<i64: 1>, scalar_prefetch = 0 : i64, scratch_operands = 0 : i64, tpu.core_type = #tpu.core_type<tc>, window_params = [{transform_indices = @transform_0, window_bounds = array<i64: 2, 32, 256>}, {pipeline_mode = #tpu.pipeline_mode<synchronous>, transform_indices = @transform_1, window_bounds = array<i64: 32, 2>}, {pipeline_mode = #tpu.pipeline_mode<synchronous>, transform_indices = @transform_2, window_bounds = array<i64: 1, 2>}, {pipeline_mode = #tpu.pipeline_mode<synchronous>, transform_indices = @transform_3, window_bounds = array<i64: 2, 32>}, {pipeline_mode = #tpu.pipeline_mode<synchronous>, transform_indices = @transform_4, window_bounds = array<i64: 1, 32>}, {transform_indices = @transform_5, window_bounds = array<i64: 2, 49>}, {pipeline_mode = #tpu.pipeline_mode<synchronous>, transform_indices = @transform_6, window_bounds = array<i64: 7, 256>}, {pipeline_mode = #tpu.pipeline_mode<synchronous>, transform_indices = @transform_7, window_bounds = array<i64: 7, 256>}, {transform_indices = @transform_8, window_bounds = array<i64: 2, 32>}, {transform_indices = @transform_9, window_bounds = array<i64: 2, 256>}]} {
    %c0 = arith.constant 0 : index
    %c0_0 = arith.constant 0 : index
    %c0_1 = arith.constant 0 : index
    %0 = vector.load %arg1[%c0, %c0_0, %c0_1] : memref<2x32x256xf32, #tpu.memory_space<vmem>>, vector<2x32x256xf32>
    %cst = arith.constant dense<0.000000e+00> : vector<2x32xf32>
    %1 = vector.multi_reduction <add>, %0, %cst [2] : vector<2x32x256xf32> to vector<2x32xf32>
    %cst_2 = arith.constant dense<0xFF800000> : vector<2x32xf32>
    %2 = vector.multi_reduction <maximumf>, %0, %cst_2 [2] : vector<2x32x256xf32> to vector<2x32xf32>
    %cst_3 = arith.constant 3.906250e-03 : f32
    %3 = vector.broadcast %cst_3 : f32 to vector<2x32xf32>
    %4 = arith.mulf %1, %3 : vector<2x32xf32>
    %5 = tpu.concatenate %4, %2 in 0 : vector<2x32xf32>, vector<2x32xf32> -> vector<4x32xf32>
    %c0_4 = arith.constant 0 : index
    %c0_5 = arith.constant 0 : index
    %6 = vector.load %arg2[%c0_4, %c0_5] : memref<32x2xf32, #tpu.memory_space<vmem>>, vector<32x2xf32>
    %cst_6 = arith.constant dense<0.000000e+00> : vector<4x2xf32>
    %7 = tpu.matmul %5, %6, %cst_6 {dimension_numbers = #tpu.dot_dimension_numbers<[1], [0], [0], [1], [0, 0, 1, 1], [], []>} : vector<4x32xf32>, vector<32x2xf32>, vector<4x2xf32> -> vector<4x2xf32>
    %c0_7 = arith.constant 0 : index
    %c0_8 = arith.constant 0 : index
    %8 = vector.load %arg3[%c0_7, %c0_8] : memref<1x2xf32, #tpu.memory_space<vmem>>, vector<1x2xf32>
    %9 = vector.broadcast %8 : vector<1x2xf32> to vector<4x2xf32>
    %10 = arith.addf %7, %9 : vector<4x2xf32>
    %cst_9 = arith.constant 0.000000e+00 : f32
    %11 = vector.broadcast %cst_9 : f32 to vector<4x2xf32>
    %12 = arith.maximumf %10, %11 : vector<4x2xf32>
    %c0_10 = arith.constant 0 : index
    %c0_11 = arith.constant 0 : index
    %13 = vector.load %arg4[%c0_10, %c0_11] : memref<2x32xf32, #tpu.memory_space<vmem>>, vector<2x32xf32>
    %cst_12 = arith.constant dense<0.000000e+00> : vector<4x32xf32>
    %14 = tpu.matmul %12, %13, %cst_12 {dimension_numbers = #tpu.dot_dimension_numbers<[1], [0], [0], [1], [0, 0, 1, 1], [], []>} : vector<4x2xf32>, vector<2x32xf32>, vector<4x32xf32> -> vector<4x32xf32>
    %c0_13 = arith.constant 0 : index
    %c0_14 = arith.constant 0 : index
    %15 = vector.load %arg5[%c0_13, %c0_14] : memref<1x32xf32, #tpu.memory_space<vmem>>, vector<1x32xf32>
    %16 = vector.broadcast %15 : vector<1x32xf32> to vector<4x32xf32>
    %17 = arith.addf %14, %16 : vector<4x32xf32>
    %18 = vector.extract_strided_slice %17 {offsets = [0, 0], sizes = [2, 32], strides = [1, 1]} : vector<4x32xf32> to vector<2x32xf32>
    %19 = vector.extract_strided_slice %17 {offsets = [2, 0], sizes = [2, 32], strides = [1, 1]} : vector<4x32xf32> to vector<2x32xf32>
    %20 = arith.addf %18, %19 : vector<2x32xf32>
    %21 = arith.negf %20 : vector<2x32xf32>
    %22 = math.exp %21 : vector<2x32xf32>
    %cst_15 = arith.constant 1.000000e+00 : f32
    %23 = vector.broadcast %cst_15 : f32 to vector<2x32xf32>
    %24 = arith.addf %23, %22 : vector<2x32xf32>
    %25 = arith.divf %23, %24 : vector<2x32xf32>
    %c0_16 = arith.constant 0 : index
    %c0_17 = arith.constant 0 : index
    %26 = vector.load %arg9[%c0_16, %c0_17] : memref<2x32xf32, #tpu.memory_space<vmem>>, vector<2x32xf32>
    tpu.vector_store %arg9[%c0_16, %c0_17], %25 {strides = array<i32>} : memref<2x32xf32, #tpu.memory_space<vmem>>, vector<2x32xf32>,
    %cst_18 = arith.constant 0.000000e+00 : f32
    %27 = vector.broadcast %cst_18 : f32 to vector<2x256xf32>
    %cst_19 = arith.constant 0xFF800000 : f32
    %28 = vector.broadcast %cst_19 : f32 to vector<2x256xf32>
    %c0_20 = arith.constant 0 : index
    %c0_21 = arith.constant 0 : index
    %c0_22 = arith.constant 0 : index
    %29 = vector.load %arg1[%c0_20, %c0_21, %c0_22] : memref<2x32x256xf32, #tpu.memory_space<vmem>>, vector<2x32x256xf32>
    %30 = vector.shape_cast %25 : vector<2x32xf32> to vector<2x32x1xf32>
    %31 = vector.broadcast %30 : vector<2x32x1xf32> to vector<2x32x256xf32>
    %32 = arith.mulf %29, %31 : vector<2x32x256xf32>
    %cst_23 = arith.constant dense<0.000000e+00> : vector<2x256xf32>
    %33 = vector.multi_reduction <add>, %32, %cst_23 [1] : vector<2x32x256xf32> to vector<2x256xf32>
    %34 = arith.addf %27, %33 : vector<2x256xf32>
    %cst_24 = arith.constant dense<0xFF800000> : vector<2x256xf32>
    %35 = vector.multi_reduction <maximumf>, %32, %cst_24 [1] : vector<2x32x256xf32> to vector<2x256xf32>
    %36 = arith.maximumf %28, %35 : vector<2x256xf32>
    %cst_25 = arith.constant 3.125000e-02 : f32
    %37 = vector.broadcast %cst_25 : f32 to vector<2x256xf32>
    %38 = arith.mulf %34, %37 : vector<2x256xf32>
    %39 = tpu.concatenate %36, %38 in 0 : vector<2x256xf32>, vector<2x256xf32> -> vector<4x256xf32>
    %c0_26 = arith.constant 0 : index
    %c0_27 = arith.constant 0 : index
    %40 = vector.load %arg7[%c0_26, %c0_27] : memref<7x256xf32, #tpu.memory_space<vmem>>, vector<7x256xf32>
    %c0_28 = arith.constant 0 : index
    %c0_29 = arith.constant 0 : index
    %41 = vector.load %arg8[%c0_28, %c0_29] : memref<7x256xf32, #tpu.memory_space<vmem>>, vector<7x256xf32>
    %cst_30 = arith.constant 0.000000e+00 : f32
    %42 = vector.broadcast %cst_30 : f32 to vector<2x256xf32>
    %cst_31 = arith.constant 0.000000e+00 : f32
    %43 = vector.broadcast %cst_31 : f32 to vector<2x256xf32>
    %c51_i32 = arith.constant 51 : i32
    %44 = tpu.dynamic_rotate %39 by %c51_i32 dim 1 : vector<4x256xf32>, i32 -> vector<4x256xf32>
    %45 = vector.extract_strided_slice %44 {offsets = [0, 0], sizes = [2, 256], strides = [1, 1]} : vector<4x256xf32> to vector<2x256xf32>
    %c0_32 = arith.constant 0 : index
    %c0_33 = arith.constant 0 : index
    %46 = memref.load %arg6[%c0_32, %c0_33] : memref<2x49xf32, #tpu.memory_space<smem>>
    %47 = vector.broadcast %46 : f32 to vector<2x256xf32>
    %48 = arith.mulf %45, %47 : vector<2x256xf32>
    %49 = vector.extract_strided_slice %44 {offsets = [2, 0], sizes = [2, 256], strides = [1, 1]} : vector<4x256xf32> to vector<2x256xf32>
    %c1 = arith.constant 1 : index
    %c0_34 = arith.constant 0 : index
    %50 = memref.load %arg6[%c1, %c0_34] : memref<2x49xf32, #tpu.memory_space<smem>>
    %51 = vector.broadcast %50 : f32 to vector<2x256xf32>
    %52 = arith.mulf %49, %51 : vector<2x256xf32>
    %53 = arith.addf %48, %52 : vector<2x256xf32>
    %54 = vector.extract_strided_slice %41 {offsets = [0, 0], sizes = [1, 256], strides = [1, 1]} : vector<7x256xf32> to vector<1x256xf32>
    %55 = vector.broadcast %54 : vector<1x256xf32> to vector<2x256xf32>
    %56 = arith.mulf %53, %55 : vector<2x256xf32>
    %57 = arith.addf %43, %56 : vector<2x256xf32>
    %c50_i32 = arith.constant 50 : i32
    %58 = tpu.dynamic_rotate %39 by %c50_i32 dim 1 : vector<4x256xf32>, i32 -> vector<4x256xf32>
    %59 = vector.extract_strided_slice %58 {offsets = [0, 0], sizes = [2, 256], strides = [1, 1]} : vector<4x256xf32> to vector<2x256xf32>
    %c0_35 = arith.constant 0 : index
    %c1_36 = arith.constant 1 : index
    %60 = memref.load %arg6[%c0_35, %c1_36] : memref<2x49xf32, #tpu.memory_space<smem>>
    %61 = vector.broadcast %60 : f32 to vector<2x256xf32>
    %62 = arith.mulf %59, %61 : vector<2x256xf32>
    %63 = vector.extract_strided_slice %58 {offsets = [2, 0], sizes = [2, 256], strides = [1, 1]} : vector<4x256xf32> to vector<2x256xf32>
    %c1_37 = arith.constant 1 : index
    %c1_38 = arith.constant 1 : index
    %64 = memref.load %arg6[%c1_37, %c1_38] : memref<2x49xf32, #tpu.memory_space<smem>>
    %65 = vector.broadcast %64 : f32 to vector<2x256xf32>
    %66 = arith.mulf %63, %65 : vector<2x256xf32>
    %67 = arith.addf %62, %66 : vector<2x256xf32>
    %68 = vector.extract_strided_slice %41 {offsets = [1, 0], sizes = [1, 256], strides = [1, 1]} : vector<7x256xf32> to vector<1x256xf32>
    %69 = vector.broadcast %68 : vector<1x256xf32> to vector<2x256xf32>
    %70 = arith.mulf %67, %69 : vector<2x256xf32>
    %71 = arith.addf %57, %70 : vector<2x256xf32>
    %c49_i32 = arith.constant 49 : i32
    %72 = tpu.dynamic_rotate %39 by %c49_i32 dim 1 : vector<4x256xf32>, i32 -> vector<4x256xf32>
    %73 = vector.extract_strided_slice %72 {offsets = [0, 0], sizes = [2, 256], strides = [1, 1]} : vector<4x256xf32> to vector<2x256xf32>
    %c0_39 = arith.constant 0 : index
    %c2 = arith.constant 2 : index
    %74 = memref.load %arg6[%c0_39, %c2] : memref<2x49xf32, #tpu.memory_space<smem>>
    %75 = vector.broadcast %74 : f32 to vector<2x256xf32>
    %76 = arith.mulf %73, %75 : vector<2x256xf32>
    %77 = vector.extract_strided_slice %72 {offsets = [2, 0], sizes = [2, 256], strides = [1, 1]} : vector<4x256xf32> to vector<2x256xf32>
    %c1_40 = arith.constant 1 : index
    %c2_41 = arith.constant 2 : index
    %78 = memref.load %arg6[%c1_40, %c2_41] : memref<2x49xf32, #tpu.memory_space<smem>>
    %79 = vector.broadcast %78 : f32 to vector<2x256xf32>
    %80 = arith.mulf %77, %79 : vector<2x256xf32>
    %81 = arith.addf %76, %80 : vector<2x256xf32>
    %82 = vector.extract_strided_slice %41 {offsets = [2, 0], sizes = [1, 256], strides = [1, 1]} : vector<7x256xf32> to vector<1x256xf32>
    %83 = vector.broadcast %82 : vector<1x256xf32> to vector<2x256xf32>
    %84 = arith.mulf %81, %83 : vector<2x256xf32>
    %85 = arith.addf %71, %84 : vector<2x256xf32>
    %c48_i32 = arith.constant 48 : i32
    %86 = tpu.dynamic_rotate %39 by %c48_i32 dim 1 : vector<4x256xf32>, i32 -> vector<4x256xf32>
    %87 = vector.extract_strided_slice %86 {offsets = [0, 0], sizes = [2, 256], strides = [1, 1]} : vector<4x256xf32> to vector<2x256xf32>
    %c0_42 = arith.constant 0 : index
    %c3 = arith.constant 3 : index
    %88 = memref.load %arg6[%c0_42, %c3] : memref<2x49xf32, #tpu.memory_space<smem>>
    %89 = vector.broadcast %88 : f32 to vector<2x256xf32>
    %90 = arith.mulf %87, %89 : vector<2x256xf32>
    %91 = vector.extract_strided_slice %86 {offsets = [2, 0], sizes = [2, 256], strides = [1, 1]} : vector<4x256xf32> to vector<2x256xf32>
    %c1_43 = arith.constant 1 : index
    %c3_44 = arith.constant 3 : index
    %92 = memref.load %arg6[%c1_43, %c3_44] : memref<2x49xf32, #tpu.memory_space<smem>>
    %93 = vector.broadcast %92 : f32 to vector<2x256xf32>
    %94 = arith.mulf %91, %93 : vector<2x256xf32>
    %95 = arith.addf %90, %94 : vector<2x256xf32>
    %96 = vector.extract_strided_slice %41 {offsets = [3, 0], sizes = [1, 256], strides = [1, 1]} : vector<7x256xf32> to vector<1x256xf32>
    %97 = vector.broadcast %96 : vector<1x256xf32> to vector<2x256xf32>
    %98 = arith.mulf %95, %97 : vector<2x256xf32>
    %99 = arith.addf %85, %98 : vector<2x256xf32>
    %c47_i32 = arith.constant 47 : i32
    %100 = tpu.dynamic_rotate %39 by %c47_i32 dim 1 : vector<4x256xf32>, i32 -> vector<4x256xf32>
    %101 = vector.extract_strided_slice %100 {offsets = [0, 0], sizes = [2, 256], strides = [1, 1]} : vector<4x256xf32> to vector<2x256xf32>
    %c0_45 = arith.constant 0 : index
    %c4 = arith.constant 4 : index
    %102 = memref.load %arg6[%c0_45, %c4] : memref<2x49xf32, #tpu.memory_space<smem>>
    %103 = vector.broadcast %102 : f32 to vector<2x256xf32>
    %104 = arith.mulf %101, %103 : vector<2x256xf32>
    %105 = vector.extract_strided_slice %100 {offsets = [2, 0], sizes = [2, 256], strides = [1, 1]} : vector<4x256xf32> to vector<2x256xf32>
    %c1_46 = arith.constant 1 : index
    %c4_47 = arith.constant 4 : index
    %106 = memref.load %arg6[%c1_46, %c4_47] : memref<2x49xf32, #tpu.memory_space<smem>>
    %107 = vector.broadcast %106 : f32 to vector<2x256xf32>
    %108 = arith.mulf %105, %107 : vector<2x256xf32>
    %109 = arith.addf %104, %108 : vector<2x256xf32>
    %110 = vector.extract_strided_slice %41 {offsets = [4, 0], sizes = [1, 256], strides = [1, 1]} : vector<7x256xf32> to vector<1x256xf32>
    %111 = vector.broadcast %110 : vector<1x256xf32> to vector<2x256xf32>
    %112 = arith.mulf %109, %111 : vector<2x256xf32>
    %113 = arith.addf %99, %112 : vector<2x256xf32>
    %c46_i32 = arith.constant 46 : i32
    %114 = tpu.dynamic_rotate %39 by %c46_i32 dim 1 : vector<4x256xf32>, i32 -> vector<4x256xf32>
    %115 = vector.extract_strided_slice %114 {offsets = [0, 0], sizes = [2, 256], strides = [1, 1]} : vector<4x256xf32> to vector<2x256xf32>
    %c0_48 = arith.constant 0 : index
    %c5 = arith.constant 5 : index
    %116 = memref.load %arg6[%c0_48, %c5] : memref<2x49xf32, #tpu.memory_space<smem>>
    %117 = vector.broadcast %116 : f32 to vector<2x256xf32>
    %118 = arith.mulf %115, %117 : vector<2x256xf32>
    %119 = vector.extract_strided_slice %114 {offsets = [2, 0], sizes = [2, 256], strides = [1, 1]} : vector<4x256xf32> to vector<2x256xf32>
    %c1_49 = arith.constant 1 : index
    %c5_50 = arith.constant 5 : index
    %120 = memref.load %arg6[%c1_49, %c5_50] : memref<2x49xf32, #tpu.memory_space<smem>>
    %121 = vector.broadcast %120 : f32 to vector<2x256xf32>
    %122 = arith.mulf %119, %121 : vector<2x256xf32>
    %123 = arith.addf %118, %122 : vector<2x256xf32>
    %124 = vector.extract_strided_slice %41 {offsets = [5, 0], sizes = [1, 256], strides = [1, 1]} : vector<7x256xf32> to vector<1x256xf32>
    %125 = vector.broadcast %124 : vector<1x256xf32> to vector<2x256xf32>
    %126 = arith.mulf %123, %125 : vector<2x256xf32>
    %127 = arith.addf %113, %126 : vector<2x256xf32>
    %c45_i32 = arith.constant 45 : i32
    %128 = tpu.dynamic_rotate %39 by %c45_i32 dim 1 : vector<4x256xf32>, i32 -> vector<4x256xf32>
    %129 = vector.extract_strided_slice %128 {offsets = [0, 0], sizes = [2, 256], strides = [1, 1]} : vector<4x256xf32> to vector<2x256xf32>
    %c0_51 = arith.constant 0 : index
    %c6 = arith.constant 6 : index
    %130 = memref.load %arg6[%c0_51, %c6] : memref<2x49xf32, #tpu.memory_space<smem>>
    %131 = vector.broadcast %130 : f32 to vector<2x256xf32>
    %132 = arith.mulf %129, %131 : vector<2x256xf32>
    %133 = vector.extract_strided_slice %128 {offsets = [2, 0], sizes = [2, 256], strides = [1, 1]} : vector<4x256xf32> to vector<2x256xf32>
    %c1_52 = arith.constant 1 : index
    %c6_53 = arith.constant 6 : index
    %134 = memref.load %arg6[%c1_52, %c6_53] : memref<2x49xf32, #tpu.memory_space<smem>>
    %135 = vector.broadcast %134 : f32 to vector<2x256xf32>
    %136 = arith.mulf %133, %135 : vector<2x256xf32>
    %137 = arith.addf %132, %136 : vector<2x256xf32>
    %138 = vector.extract_strided_slice %41 {offsets = [6, 0], sizes = [1, 256], strides = [1, 1]} : vector<7x256xf32> to vector<1x256xf32>
    %139 = vector.broadcast %138 : vector<1x256xf32> to vector<2x256xf32>
    %140 = arith.mulf %137, %139 : vector<2x256xf32>
    %141 = arith.addf %127, %140 : vector<2x256xf32>
    %142 = vector.extract_strided_slice %40 {offsets = [0, 0], sizes = [1, 256], strides = [1, 1]} : vector<7x256xf32> to vector<1x256xf32>
    %143 = vector.broadcast %142 : vector<1x256xf32> to vector<2x256xf32>
    %144 = arith.mulf %141, %143 : vector<2x256xf32>
    %145 = arith.addf %42, %144 : vector<2x256xf32>
    %cst_54 = arith.constant 0.000000e+00 : f32
    %146 = vector.broadcast %cst_54 : f32 to vector<2x256xf32>
    %c35_i32 = arith.constant 35 : i32
    %147 = tpu.dynamic_rotate %39 by %c35_i32 dim 1 : vector<4x256xf32>, i32 -> vector<4x256xf32>
    %148 = vector.extract_strided_slice %147 {offsets = [0, 0], sizes = [2, 256], strides = [1, 1]} : vector<4x256xf32> to vector<2x256xf32>
    %c0_55 = arith.constant 0 : index
    %c7 = arith.constant 7 : index
    %149 = memref.load %arg6[%c0_55, %c7] : memref<2x49xf32, #tpu.memory_space<smem>>
    %150 = vector.broadcast %149 : f32 to vector<2x256xf32>
    %151 = arith.mulf %148, %150 : vector<2x256xf32>
    %152 = vector.extract_strided_slice %147 {offsets = [2, 0], sizes = [2, 256], strides = [1, 1]} : vector<4x256xf32> to vector<2x256xf32>
    %c1_56 = arith.constant 1 : index
    %c7_57 = arith.constant 7 : index
    %153 = memref.load %arg6[%c1_56, %c7_57] : memref<2x49xf32, #tpu.memory_space<smem>>
    %154 = vector.broadcast %153 : f32 to vector<2x256xf32>
    %155 = arith.mulf %152, %154 : vector<2x256xf32>
    %156 = arith.addf %151, %155 : vector<2x256xf32>
    %157 = vector.extract_strided_slice %41 {offsets = [0, 0], sizes = [1, 256], strides = [1, 1]} : vector<7x256xf32> to vector<1x256xf32>
    %158 = vector.broadcast %157 : vector<1x256xf32> to vector<2x256xf32>
    %159 = arith.mulf %156, %158 : vector<2x256xf32>
    %160 = arith.addf %146, %159 : vector<2x256xf32>
    %c34_i32 = arith.constant 34 : i32
    %161 = tpu.dynamic_rotate %39 by %c34_i32 dim 1 : vector<4x256xf32>, i32 -> vector<4x256xf32>
    %162 = vector.extract_strided_slice %161 {offsets = [0, 0], sizes = [2, 256], strides = [1, 1]} : vector<4x256xf32> to vector<2x256xf32>
    %c0_58 = arith.constant 0 : index
    %c8 = arith.constant 8 : index
    %163 = memref.load %arg6[%c0_58, %c8] : memref<2x49xf32, #tpu.memory_space<smem>>
    %164 = vector.broadcast %163 : f32 to vector<2x256xf32>
    %165 = arith.mulf %162, %164 : vector<2x256xf32>
    %166 = vector.extract_strided_slice %161 {offsets = [2, 0], sizes = [2, 256], strides = [1, 1]} : vector<4x256xf32> to vector<2x256xf32>
    %c1_59 = arith.constant 1 : index
    %c8_60 = arith.constant 8 : index
    %167 = memref.load %arg6[%c1_59, %c8_60] : memref<2x49xf32, #tpu.memory_space<smem>>
    %168 = vector.broadcast %167 : f32 to vector<2x256xf32>
    %169 = arith.mulf %166, %168 : vector<2x256xf32>
    %170 = arith.addf %165, %169 : vector<2x256xf32>
    %171 = vector.extract_strided_slice %41 {offsets = [1, 0], sizes = [1, 256], strides = [1, 1]} : vector<7x256xf32> to vector<1x256xf32>
    %172 = vector.broadcast %171 : vector<1x256xf32> to vector<2x256xf32>
    %173 = arith.mulf %170, %172 : vector<2x256xf32>
    %174 = arith.addf %160, %173 : vector<2x256xf32>
    %c33_i32 = arith.constant 33 : i32
    %175 = tpu.dynamic_rotate %39 by %c33_i32 dim 1 : vector<4x256xf32>, i32 -> vector<4x256xf32>
    %176 = vector.extract_strided_slice %175 {offsets = [0, 0], sizes = [2, 256], strides = [1, 1]} : vector<4x256xf32> to vector<2x256xf32>
    %c0_61 = arith.constant 0 : index
    %c9 = arith.constant 9 : index
    %177 = memref.load %arg6[%c0_61, %c9] : memref<2x49xf32, #tpu.memory_space<smem>>
    %178 = vector.broadcast %177 : f32 to vector<2x256xf32>
    %179 = arith.mulf %176, %178 : vector<2x256xf32>
    %180 = vector.extract_strided_slice %175 {offsets = [2, 0], sizes = [2, 256], strides = [1, 1]} : vector<4x256xf32> to vector<2x256xf32>
    %c1_62 = arith.constant 1 : index
    %c9_63 = arith.constant 9 : index
    %181 = memref.load %arg6[%c1_62, %c9_63] : memref<2x49xf32, #tpu.memory_space<smem>>
    %182 = vector.broadcast %181 : f32 to vector<2x256xf32>
    %183 = arith.mulf %180, %182 : vector<2x256xf32>
    %184 = arith.addf %179, %183 : vector<2x256xf32>
    %185 = vector.extract_strided_slice %41 {offsets = [2, 0], sizes = [1, 256], strides = [1, 1]} : vector<7x256xf32> to vector<1x256xf32>
    %186 = vector.broadcast %185 : vector<1x256xf32> to vector<2x256xf32>
    %187 = arith.mulf %184, %186 : vector<2x256xf32>
    %188 = arith.addf %174, %187 : vector<2x256xf32>
    %c32_i32 = arith.constant 32 : i32
    %189 = tpu.dynamic_rotate %39 by %c32_i32 dim 1 : vector<4x256xf32>, i32 -> vector<4x256xf32>
    %190 = vector.extract_strided_slice %189 {offsets = [0, 0], sizes = [2, 256], strides = [1, 1]} : vector<4x256xf32> to vector<2x256xf32>
    %c0_64 = arith.constant 0 : index
    %c10 = arith.constant 10 : index
    %191 = memref.load %arg6[%c0_64, %c10] : memref<2x49xf32, #tpu.memory_space<smem>>
    %192 = vector.broadcast %191 : f32 to vector<2x256xf32>
    %193 = arith.mulf %190, %192 : vector<2x256xf32>
    %194 = vector.extract_strided_slice %189 {offsets = [2, 0], sizes = [2, 256], strides = [1, 1]} : vector<4x256xf32> to vector<2x256xf32>
    %c1_65 = arith.constant 1 : index
    %c10_66 = arith.constant 10 : index
    %195 = memref.load %arg6[%c1_65, %c10_66] : memref<2x49xf32, #tpu.memory_space<smem>>
    %196 = vector.broadcast %195 : f32 to vector<2x256xf32>
    %197 = arith.mulf %194, %196 : vector<2x256xf32>
    %198 = arith.addf %193, %197 : vector<2x256xf32>
    %199 = vector.extract_strided_slice %41 {offsets = [3, 0], sizes = [1, 256], strides = [1, 1]} : vector<7x256xf32> to vector<1x256xf32>
    %200 = vector.broadcast %199 : vector<1x256xf32> to vector<2x256xf32>
    %201 = arith.mulf %198, %200 : vector<2x256xf32>
    %202 = arith.addf %188, %201 : vector<2x256xf32>
    %c31_i32 = arith.constant 31 : i32
    %203 = tpu.dynamic_rotate %39 by %c31_i32 dim 1 : vector<4x256xf32>, i32 -> vector<4x256xf32>
    %204 = vector.extract_strided_slice %203 {offsets = [0, 0], sizes = [2, 256], strides = [1, 1]} : vector<4x256xf32> to vector<2x256xf32>
    %c0_67 = arith.constant 0 : index
    %c11 = arith.constant 11 : index
    %205 = memref.load %arg6[%c0_67, %c11] : memref<2x49xf32, #tpu.memory_space<smem>>
    %206 = vector.broadcast %205 : f32 to vector<2x256xf32>
    %207 = arith.mulf %204, %206 : vector<2x256xf32>
    %208 = vector.extract_strided_slice %203 {offsets = [2, 0], sizes = [2, 256], strides = [1, 1]} : vector<4x256xf32> to vector<2x256xf32>
    %c1_68 = arith.constant 1 : index
    %c11_69 = arith.constant 11 : index
    %209 = memref.load %arg6[%c1_68, %c11_69] : memref<2x49xf32, #tpu.memory_space<smem>>
    %210 = vector.broadcast %209 : f32 to vector<2x256xf32>
    %211 = arith.mulf %208, %210 : vector<2x256xf32>
    %212 = arith.addf %207, %211 : vector<2x256xf32>
    %213 = vector.extract_strided_slice %41 {offsets = [4, 0], sizes = [1, 256], strides = [1, 1]} : vector<7x256xf32> to vector<1x256xf32>
    %214 = vector.broadcast %213 : vector<1x256xf32> to vector<2x256xf32>
    %215 = arith.mulf %212, %214 : vector<2x256xf32>
    %216 = arith.addf %202, %215 : vector<2x256xf32>
    %c30_i32 = arith.constant 30 : i32
    %217 = tpu.dynamic_rotate %39 by %c30_i32 dim 1 : vector<4x256xf32>, i32 -> vector<4x256xf32>
    %218 = vector.extract_strided_slice %217 {offsets = [0, 0], sizes = [2, 256], strides = [1, 1]} : vector<4x256xf32> to vector<2x256xf32>
    %c0_70 = arith.constant 0 : index
    %c12 = arith.constant 12 : index
    %219 = memref.load %arg6[%c0_70, %c12] : memref<2x49xf32, #tpu.memory_space<smem>>
    %220 = vector.broadcast %219 : f32 to vector<2x256xf32>
    %221 = arith.mulf %218, %220 : vector<2x256xf32>
    %222 = vector.extract_strided_slice %217 {offsets = [2, 0], sizes = [2, 256], strides = [1, 1]} : vector<4x256xf32> to vector<2x256xf32>
    %c1_71 = arith.constant 1 : index
    %c12_72 = arith.constant 12 : index
    %223 = memref.load %arg6[%c1_71, %c12_72] : memref<2x49xf32, #tpu.memory_space<smem>>
    %224 = vector.broadcast %223 : f32 to vector<2x256xf32>
    %225 = arith.mulf %222, %224 : vector<2x256xf32>
    %226 = arith.addf %221, %225 : vector<2x256xf32>
    %227 = vector.extract_strided_slice %41 {offsets = [5, 0], sizes = [1, 256], strides = [1, 1]} : vector<7x256xf32> to vector<1x256xf32>
    %228 = vector.broadcast %227 : vector<1x256xf32> to vector<2x256xf32>
    %229 = arith.mulf %226, %228 : vector<2x256xf32>
    %230 = arith.addf %216, %229 : vector<2x256xf32>
    %c29_i32 = arith.constant 29 : i32
    %231 = tpu.dynamic_rotate %39 by %c29_i32 dim 1 : vector<4x256xf32>, i32 -> vector<4x256xf32>
    %232 = vector.extract_strided_slice %231 {offsets = [0, 0], sizes = [2, 256], strides = [1, 1]} : vector<4x256xf32> to vector<2x256xf32>
    %c0_73 = arith.constant 0 : index
    %c13 = arith.constant 13 : index
    %233 = memref.load %arg6[%c0_73, %c13] : memref<2x49xf32, #tpu.memory_space<smem>>
    %234 = vector.broadcast %233 : f32 to vector<2x256xf32>
    %235 = arith.mulf %232, %234 : vector<2x256xf32>
    %236 = vector.extract_strided_slice %231 {offsets = [2, 0], sizes = [2, 256], strides = [1, 1]} : vector<4x256xf32> to vector<2x256xf32>
    %c1_74 = arith.constant 1 : index
    %c13_75 = arith.constant 13 : index
    %237 = memref.load %arg6[%c1_74, %c13_75] : memref<2x49xf32, #tpu.memory_space<smem>>
    %238 = vector.broadcast %237 : f32 to vector<2x256xf32>
    %239 = arith.mulf %236, %238 : vector<2x256xf32>
    %240 = arith.addf %235, %239 : vector<2x256xf32>
    %241 = vector.extract_strided_slice %41 {offsets = [6, 0], sizes = [1, 256], strides = [1, 1]} : vector<7x256xf32> to vector<1x256xf32>
    %242 = vector.broadcast %241 : vector<1x256xf32> to vector<2x256xf32>
    %243 = arith.mulf %240, %242 : vector<2x256xf32>
    %244 = arith.addf %230, %243 : vector<2x256xf32>
    %245 = vector.extract_strided_slice %40 {offsets = [1, 0], sizes = [1, 256], strides = [1, 1]} : vector<7x256xf32> to vector<1x256xf32>
    %246 = vector.broadcast %245 : vector<1x256xf32> to vector<2x256xf32>
    %247 = arith.mulf %244, %246 : vector<2x256xf32>
    %248 = arith.addf %145, %247 : vector<2x256xf32>
    %cst_76 = arith.constant 0.000000e+00 : f32
    %249 = vector.broadcast %cst_76 : f32 to vector<2x256xf32>
    %c19_i32 = arith.constant 19 : i32
    %250 = tpu.dynamic_rotate %39 by %c19_i32 dim 1 : vector<4x256xf32>, i32 -> vector<4x256xf32>
    %251 = vector.extract_strided_slice %250 {offsets = [0, 0], sizes = [2, 256], strides = [1, 1]} : vector<4x256xf32> to vector<2x256xf32>
    %c0_77 = arith.constant 0 : index
    %c14 = arith.constant 14 : index
    %252 = memref.load %arg6[%c0_77, %c14] : memref<2x49xf32, #tpu.memory_space<smem>>
    %253 = vector.broadcast %252 : f32 to vector<2x256xf32>
    %254 = arith.mulf %251, %253 : vector<2x256xf32>
    %255 = vector.extract_strided_slice %250 {offsets = [2, 0], sizes = [2, 256], strides = [1, 1]} : vector<4x256xf32> to vector<2x256xf32>
    %c1_78 = arith.constant 1 : index
    %c14_79 = arith.constant 14 : index
    %256 = memref.load %arg6[%c1_78, %c14_79] : memref<2x49xf32, #tpu.memory_space<smem>>
    %257 = vector.broadcast %256 : f32 to vector<2x256xf32>
    %258 = arith.mulf %255, %257 : vector<2x256xf32>
    %259 = arith.addf %254, %258 : vector<2x256xf32>
    %260 = vector.extract_strided_slice %41 {offsets = [0, 0], sizes = [1, 256], strides = [1, 1]} : vector<7x256xf32> to vector<1x256xf32>
    %261 = vector.broadcast %260 : vector<1x256xf32> to vector<2x256xf32>
    %262 = arith.mulf %259, %261 : vector<2x256xf32>
    %263 = arith.addf %249, %262 : vector<2x256xf32>
    %c18_i32 = arith.constant 18 : i32
    %264 = tpu.dynamic_rotate %39 by %c18_i32 dim 1 : vector<4x256xf32>, i32 -> vector<4x256xf32>
    %265 = vector.extract_strided_slice %264 {offsets = [0, 0], sizes = [2, 256], strides = [1, 1]} : vector<4x256xf32> to vector<2x256xf32>
    %c0_80 = arith.constant 0 : index
    %c15 = arith.constant 15 : index
    %266 = memref.load %arg6[%c0_80, %c15] : memref<2x49xf32, #tpu.memory_space<smem>>
    %267 = vector.broadcast %266 : f32 to vector<2x256xf32>
    %268 = arith.mulf %265, %267 : vector<2x256xf32>
    %269 = vector.extract_strided_slice %264 {offsets = [2, 0], sizes = [2, 256], strides = [1, 1]} : vector<4x256xf32> to vector<2x256xf32>
    %c1_81 = arith.constant 1 : index
    %c15_82 = arith.constant 15 : index
    %270 = memref.load %arg6[%c1_81, %c15_82] : memref<2x49xf32, #tpu.memory_space<smem>>
    %271 = vector.broadcast %270 : f32 to vector<2x256xf32>
    %272 = arith.mulf %269, %271 : vector<2x256xf32>
    %273 = arith.addf %268, %272 : vector<2x256xf32>
    %274 = vector.extract_strided_slice %41 {offsets = [1, 0], sizes = [1, 256], strides = [1, 1]} : vector<7x256xf32> to vector<1x256xf32>
    %275 = vector.broadcast %274 : vector<1x256xf32> to vector<2x256xf32>
    %276 = arith.mulf %273, %275 : vector<2x256xf32>
    %277 = arith.addf %263, %276 : vector<2x256xf32>
    %c17_i32 = arith.constant 17 : i32
    %278 = tpu.dynamic_rotate %39 by %c17_i32 dim 1 : vector<4x256xf32>, i32 -> vector<4x256xf32>
    %279 = vector.extract_strided_slice %278 {offsets = [0, 0], sizes = [2, 256], strides = [1, 1]} : vector<4x256xf32> to vector<2x256xf32>
    %c0_83 = arith.constant 0 : index
    %c16 = arith.constant 16 : index
    %280 = memref.load %arg6[%c0_83, %c16] : memref<2x49xf32, #tpu.memory_space<smem>>
    %281 = vector.broadcast %280 : f32 to vector<2x256xf32>
    %282 = arith.mulf %279, %281 : vector<2x256xf32>
    %283 = vector.extract_strided_slice %278 {offsets = [2, 0], sizes = [2, 256], strides = [1, 1]} : vector<4x256xf32> to vector<2x256xf32>
    %c1_84 = arith.constant 1 : index
    %c16_85 = arith.constant 16 : index
    %284 = memref.load %arg6[%c1_84, %c16_85] : memref<2x49xf32, #tpu.memory_space<smem>>
    %285 = vector.broadcast %284 : f32 to vector<2x256xf32>
    %286 = arith.mulf %283, %285 : vector<2x256xf32>
    %287 = arith.addf %282, %286 : vector<2x256xf32>
    %288 = vector.extract_strided_slice %41 {offsets = [2, 0], sizes = [1, 256], strides = [1, 1]} : vector<7x256xf32> to vector<1x256xf32>
    %289 = vector.broadcast %288 : vector<1x256xf32> to vector<2x256xf32>
    %290 = arith.mulf %287, %289 : vector<2x256xf32>
    %291 = arith.addf %277, %290 : vector<2x256xf32>
    %c16_i32 = arith.constant 16 : i32
    %292 = tpu.dynamic_rotate %39 by %c16_i32 dim 1 : vector<4x256xf32>, i32 -> vector<4x256xf32>
    %293 = vector.extract_strided_slice %292 {offsets = [0, 0], sizes = [2, 256], strides = [1, 1]} : vector<4x256xf32> to vector<2x256xf32>
    %c0_86 = arith.constant 0 : index
    %c17 = arith.constant 17 : index
    %294 = memref.load %arg6[%c0_86, %c17] : memref<2x49xf32, #tpu.memory_space<smem>>
    %295 = vector.broadcast %294 : f32 to vector<2x256xf32>
    %296 = arith.mulf %293, %295 : vector<2x256xf32>
    %297 = vector.extract_strided_slice %292 {offsets = [2, 0], sizes = [2, 256], strides = [1, 1]} : vector<4x256xf32> to vector<2x256xf32>
    %c1_87 = arith.constant 1 : index
    %c17_88 = arith.constant 17 : index
    %298 = memref.load %arg6[%c1_87, %c17_88] : memref<2x49xf32, #tpu.memory_space<smem>>
    %299 = vector.broadcast %298 : f32 to vector<2x256xf32>
    %300 = arith.mulf %297, %299 : vector<2x256xf32>
    %301 = arith.addf %296, %300 : vector<2x256xf32>
    %302 = vector.extract_strided_slice %41 {offsets = [3, 0], sizes = [1, 256], strides = [1, 1]} : vector<7x256xf32> to vector<1x256xf32>
    %303 = vector.broadcast %302 : vector<1x256xf32> to vector<2x256xf32>
    %304 = arith.mulf %301, %303 : vector<2x256xf32>
    %305 = arith.addf %291, %304 : vector<2x256xf32>
    %c15_i32 = arith.constant 15 : i32
    %306 = tpu.dynamic_rotate %39 by %c15_i32 dim 1 : vector<4x256xf32>, i32 -> vector<4x256xf32>
    %307 = vector.extract_strided_slice %306 {offsets = [0, 0], sizes = [2, 256], strides = [1, 1]} : vector<4x256xf32> to vector<2x256xf32>
    %c0_89 = arith.constant 0 : index
    %c18 = arith.constant 18 : index
    %308 = memref.load %arg6[%c0_89, %c18] : memref<2x49xf32, #tpu.memory_space<smem>>
    %309 = vector.broadcast %308 : f32 to vector<2x256xf32>
    %310 = arith.mulf %307, %309 : vector<2x256xf32>
    %311 = vector.extract_strided_slice %306 {offsets = [2, 0], sizes = [2, 256], strides = [1, 1]} : vector<4x256xf32> to vector<2x256xf32>
    %c1_90 = arith.constant 1 : index
    %c18_91 = arith.constant 18 : index
    %312 = memref.load %arg6[%c1_90, %c18_91] : memref<2x49xf32, #tpu.memory_space<smem>>
    %313 = vector.broadcast %312 : f32 to vector<2x256xf32>
    %314 = arith.mulf %311, %313 : vector<2x256xf32>
    %315 = arith.addf %310, %314 : vector<2x256xf32>
    %316 = vector.extract_strided_slice %41 {offsets = [4, 0], sizes = [1, 256], strides = [1, 1]} : vector<7x256xf32> to vector<1x256xf32>
    %317 = vector.broadcast %316 : vector<1x256xf32> to vector<2x256xf32>
    %318 = arith.mulf %315, %317 : vector<2x256xf32>
    %319 = arith.addf %305, %318 : vector<2x256xf32>
    %c14_i32 = arith.constant 14 : i32
    %320 = tpu.dynamic_rotate %39 by %c14_i32 dim 1 : vector<4x256xf32>, i32 -> vector<4x256xf32>
    %321 = vector.extract_strided_slice %320 {offsets = [0, 0], sizes = [2, 256], strides = [1, 1]} : vector<4x256xf32> to vector<2x256xf32>
    %c0_92 = arith.constant 0 : index
    %c19 = arith.constant 19 : index
    %322 = memref.load %arg6[%c0_92, %c19] : memref<2x49xf32, #tpu.memory_space<smem>>
    %323 = vector.broadcast %322 : f32 to vector<2x256xf32>
    %324 = arith.mulf %321, %323 : vector<2x256xf32>
    %325 = vector.extract_strided_slice %320 {offsets = [2, 0], sizes = [2, 256], strides = [1, 1]} : vector<4x256xf32> to vector<2x256xf32>
    %c1_93 = arith.constant 1 : index
    %c19_94 = arith.constant 19 : index
    %326 = memref.load %arg6[%c1_93, %c19_94] : memref<2x49xf32, #tpu.memory_space<smem>>
    %327 = vector.broadcast %326 : f32 to vector<2x256xf32>
    %328 = arith.mulf %325, %327 : vector<2x256xf32>
    %329 = arith.addf %324, %328 : vector<2x256xf32>
    %330 = vector.extract_strided_slice %41 {offsets = [5, 0], sizes = [1, 256], strides = [1, 1]} : vector<7x256xf32> to vector<1x256xf32>
    %331 = vector.broadcast %330 : vector<1x256xf32> to vector<2x256xf32>
    %332 = arith.mulf %329, %331 : vector<2x256xf32>
    %333 = arith.addf %319, %332 : vector<2x256xf32>
    %c13_i32 = arith.constant 13 : i32
    %334 = tpu.dynamic_rotate %39 by %c13_i32 dim 1 : vector<4x256xf32>, i32 -> vector<4x256xf32>
    %335 = vector.extract_strided_slice %334 {offsets = [0, 0], sizes = [2, 256], strides = [1, 1]} : vector<4x256xf32> to vector<2x256xf32>
    %c0_95 = arith.constant 0 : index
    %c20 = arith.constant 20 : index
    %336 = memref.load %arg6[%c0_95, %c20] : memref<2x49xf32, #tpu.memory_space<smem>>
    %337 = vector.broadcast %336 : f32 to vector<2x256xf32>
    %338 = arith.mulf %335, %337 : vector<2x256xf32>
    %339 = vector.extract_strided_slice %334 {offsets = [2, 0], sizes = [2, 256], strides = [1, 1]} : vector<4x256xf32> to vector<2x256xf32>
    %c1_96 = arith.constant 1 : index
    %c20_97 = arith.constant 20 : index
    %340 = memref.load %arg6[%c1_96, %c20_97] : memref<2x49xf32, #tpu.memory_space<smem>>
    %341 = vector.broadcast %340 : f32 to vector<2x256xf32>
    %342 = arith.mulf %339, %341 : vector<2x256xf32>
    %343 = arith.addf %338, %342 : vector<2x256xf32>
    %344 = vector.extract_strided_slice %41 {offsets = [6, 0], sizes = [1, 256], strides = [1, 1]} : vector<7x256xf32> to vector<1x256xf32>
    %345 = vector.broadcast %344 : vector<1x256xf32> to vector<2x256xf32>
    %346 = arith.mulf %343, %345 : vector<2x256xf32>
    %347 = arith.addf %333, %346 : vector<2x256xf32>
    %348 = vector.extract_strided_slice %40 {offsets = [2, 0], sizes = [1, 256], strides = [1, 1]} : vector<7x256xf32> to vector<1x256xf32>
    %349 = vector.broadcast %348 : vector<1x256xf32> to vector<2x256xf32>
    %350 = arith.mulf %347, %349 : vector<2x256xf32>
    %351 = arith.addf %248, %350 : vector<2x256xf32>
    %cst_98 = arith.constant 0.000000e+00 : f32
    %352 = vector.broadcast %cst_98 : f32 to vector<2x256xf32>
    %c3_i32 = arith.constant 3 : i32
    %353 = tpu.dynamic_rotate %39 by %c3_i32 dim 1 : vector<4x256xf32>, i32 -> vector<4x256xf32>
    %354 = vector.extract_strided_slice %353 {offsets = [0, 0], sizes = [2, 256], strides = [1, 1]} : vector<4x256xf32> to vector<2x256xf32>
    %c0_99 = arith.constant 0 : index
    %c21 = arith.constant 21 : index
    %355 = memref.load %arg6[%c0_99, %c21] : memref<2x49xf32, #tpu.memory_space<smem>>
    %356 = vector.broadcast %355 : f32 to vector<2x256xf32>
    %357 = arith.mulf %354, %356 : vector<2x256xf32>
    %358 = vector.extract_strided_slice %353 {offsets = [2, 0], sizes = [2, 256], strides = [1, 1]} : vector<4x256xf32> to vector<2x256xf32>
    %c1_100 = arith.constant 1 : index
    %c21_101 = arith.constant 21 : index
    %359 = memref.load %arg6[%c1_100, %c21_101] : memref<2x49xf32, #tpu.memory_space<smem>>
    %360 = vector.broadcast %359 : f32 to vector<2x256xf32>
    %361 = arith.mulf %358, %360 : vector<2x256xf32>
    %362 = arith.addf %357, %361 : vector<2x256xf32>
    %363 = vector.extract_strided_slice %41 {offsets = [0, 0], sizes = [1, 256], strides = [1, 1]} : vector<7x256xf32> to vector<1x256xf32>
    %364 = vector.broadcast %363 : vector<1x256xf32> to vector<2x256xf32>
    %365 = arith.mulf %362, %364 : vector<2x256xf32>
    %366 = arith.addf %352, %365 : vector<2x256xf32>
    %c2_i32 = arith.constant 2 : i32
    %367 = tpu.dynamic_rotate %39 by %c2_i32 dim 1 : vector<4x256xf32>, i32 -> vector<4x256xf32>
    %368 = vector.extract_strided_slice %367 {offsets = [0, 0], sizes = [2, 256], strides = [1, 1]} : vector<4x256xf32> to vector<2x256xf32>
    %c0_102 = arith.constant 0 : index
    %c22 = arith.constant 22 : index
    %369 = memref.load %arg6[%c0_102, %c22] : memref<2x49xf32, #tpu.memory_space<smem>>
    %370 = vector.broadcast %369 : f32 to vector<2x256xf32>
    %371 = arith.mulf %368, %370 : vector<2x256xf32>
    %372 = vector.extract_strided_slice %367 {offsets = [2, 0], sizes = [2, 256], strides = [1, 1]} : vector<4x256xf32> to vector<2x256xf32>
    %c1_103 = arith.constant 1 : index
    %c22_104 = arith.constant 22 : index
    %373 = memref.load %arg6[%c1_103, %c22_104] : memref<2x49xf32, #tpu.memory_space<smem>>
    %374 = vector.broadcast %373 : f32 to vector<2x256xf32>
    %375 = arith.mulf %372, %374 : vector<2x256xf32>
    %376 = arith.addf %371, %375 : vector<2x256xf32>
    %377 = vector.extract_strided_slice %41 {offsets = [1, 0], sizes = [1, 256], strides = [1, 1]} : vector<7x256xf32> to vector<1x256xf32>
    %378 = vector.broadcast %377 : vector<1x256xf32> to vector<2x256xf32>
    %379 = arith.mulf %376, %378 : vector<2x256xf32>
    %380 = arith.addf %366, %379 : vector<2x256xf32>
    %c1_i32 = arith.constant 1 : i32
    %381 = tpu.dynamic_rotate %39 by %c1_i32 dim 1 : vector<4x256xf32>, i32 -> vector<4x256xf32>
    %382 = vector.extract_strided_slice %381 {offsets = [0, 0], sizes = [2, 256], strides = [1, 1]} : vector<4x256xf32> to vector<2x256xf32>
    %c0_105 = arith.constant 0 : index
    %c23 = arith.constant 23 : index
    %383 = memref.load %arg6[%c0_105, %c23] : memref<2x49xf32, #tpu.memory_space<smem>>
    %384 = vector.broadcast %383 : f32 to vector<2x256xf32>
    %385 = arith.mulf %382, %384 : vector<2x256xf32>
    %386 = vector.extract_strided_slice %381 {offsets = [2, 0], sizes = [2, 256], strides = [1, 1]} : vector<4x256xf32> to vector<2x256xf32>
    %c1_106 = arith.constant 1 : index
    %c23_107 = arith.constant 23 : index
    %387 = memref.load %arg6[%c1_106, %c23_107] : memref<2x49xf32, #tpu.memory_space<smem>>
    %388 = vector.broadcast %387 : f32 to vector<2x256xf32>
    %389 = arith.mulf %386, %388 : vector<2x256xf32>
    %390 = arith.addf %385, %389 : vector<2x256xf32>
    %391 = vector.extract_strided_slice %41 {offsets = [2, 0], sizes = [1, 256], strides = [1, 1]} : vector<7x256xf32> to vector<1x256xf32>
    %392 = vector.broadcast %391 : vector<1x256xf32> to vector<2x256xf32>
    %393 = arith.mulf %390, %392 : vector<2x256xf32>
    %394 = arith.addf %380, %393 : vector<2x256xf32>
    %395 = vector.extract_strided_slice %39 {offsets = [0, 0], sizes = [2, 256], strides = [1, 1]} : vector<4x256xf32> to vector<2x256xf32>
    %c0_108 = arith.constant 0 : index
    %c24 = arith.constant 24 : index
    %396 = memref.load %arg6[%c0_108, %c24] : memref<2x49xf32, #tpu.memory_space<smem>>
    %397 = vector.broadcast %396 : f32 to vector<2x256xf32>
    %398 = arith.mulf %395, %397 : vector<2x256xf32>
    %399 = vector.extract_strided_slice %39 {offsets = [2, 0], sizes = [2, 256], strides = [1, 1]} : vector<4x256xf32> to vector<2x256xf32>
    %c1_109 = arith.constant 1 : index
    %c24_110 = arith.constant 24 : index
    %400 = memref.load %arg6[%c1_109, %c24_110] : memref<2x49xf32, #tpu.memory_space<smem>>
    %401 = vector.broadcast %400 : f32 to vector<2x256xf32>
    %402 = arith.mulf %399, %401 : vector<2x256xf32>
    %403 = arith.addf %398, %402 : vector<2x256xf32>
    %404 = vector.extract_strided_slice %41 {offsets = [3, 0], sizes = [1, 256], strides = [1, 1]} : vector<7x256xf32> to vector<1x256xf32>
    %405 = vector.broadcast %404 : vector<1x256xf32> to vector<2x256xf32>
    %406 = arith.mulf %403, %405 : vector<2x256xf32>
    %407 = arith.addf %394, %406 : vector<2x256xf32>
    %c255_i32 = arith.constant 255 : i32
    %408 = tpu.dynamic_rotate %39 by %c255_i32 dim 1 : vector<4x256xf32>, i32 -> vector<4x256xf32>
    %409 = vector.extract_strided_slice %408 {offsets = [0, 0], sizes = [2, 256], strides = [1, 1]} : vector<4x256xf32> to vector<2x256xf32>
    %c0_111 = arith.constant 0 : index
    %c25 = arith.constant 25 : index
    %410 = memref.load %arg6[%c0_111, %c25] : memref<2x49xf32, #tpu.memory_space<smem>>
    %411 = vector.broadcast %410 : f32 to vector<2x256xf32>
    %412 = arith.mulf %409, %411 : vector<2x256xf32>
    %413 = vector.extract_strided_slice %408 {offsets = [2, 0], sizes = [2, 256], strides = [1, 1]} : vector<4x256xf32> to vector<2x256xf32>
    %c1_112 = arith.constant 1 : index
    %c25_113 = arith.constant 25 : index
    %414 = memref.load %arg6[%c1_112, %c25_113] : memref<2x49xf32, #tpu.memory_space<smem>>
    %415 = vector.broadcast %414 : f32 to vector<2x256xf32>
    %416 = arith.mulf %413, %415 : vector<2x256xf32>
    %417 = arith.addf %412, %416 : vector<2x256xf32>
    %418 = vector.extract_strided_slice %41 {offsets = [4, 0], sizes = [1, 256], strides = [1, 1]} : vector<7x256xf32> to vector<1x256xf32>
    %419 = vector.broadcast %418 : vector<1x256xf32> to vector<2x256xf32>
    %420 = arith.mulf %417, %419 : vector<2x256xf32>
    %421 = arith.addf %407, %420 : vector<2x256xf32>
    %c254_i32 = arith.constant 254 : i32
    %422 = tpu.dynamic_rotate %39 by %c254_i32 dim 1 : vector<4x256xf32>, i32 -> vector<4x256xf32>
    %423 = vector.extract_strided_slice %422 {offsets = [0, 0], sizes = [2, 256], strides = [1, 1]} : vector<4x256xf32> to vector<2x256xf32>
    %c0_114 = arith.constant 0 : index
    %c26 = arith.constant 26 : index
    %424 = memref.load %arg6[%c0_114, %c26] : memref<2x49xf32, #tpu.memory_space<smem>>
    %425 = vector.broadcast %424 : f32 to vector<2x256xf32>
    %426 = arith.mulf %423, %425 : vector<2x256xf32>
    %427 = vector.extract_strided_slice %422 {offsets = [2, 0], sizes = [2, 256], strides = [1, 1]} : vector<4x256xf32> to vector<2x256xf32>
    %c1_115 = arith.constant 1 : index
    %c26_116 = arith.constant 26 : index
    %428 = memref.load %arg6[%c1_115, %c26_116] : memref<2x49xf32, #tpu.memory_space<smem>>
    %429 = vector.broadcast %428 : f32 to vector<2x256xf32>
    %430 = arith.mulf %427, %429 : vector<2x256xf32>
    %431 = arith.addf %426, %430 : vector<2x256xf32>
    %432 = vector.extract_strided_slice %41 {offsets = [5, 0], sizes = [1, 256], strides = [1, 1]} : vector<7x256xf32> to vector<1x256xf32>
    %433 = vector.broadcast %432 : vector<1x256xf32> to vector<2x256xf32>
    %434 = arith.mulf %431, %433 : vector<2x256xf32>
    %435 = arith.addf %421, %434 : vector<2x256xf32>
    %c253_i32 = arith.constant 253 : i32
    %436 = tpu.dynamic_rotate %39 by %c253_i32 dim 1 : vector<4x256xf32>, i32 -> vector<4x256xf32>
    %437 = vector.extract_strided_slice %436 {offsets = [0, 0], sizes = [2, 256], strides = [1, 1]} : vector<4x256xf32> to vector<2x256xf32>
    %c0_117 = arith.constant 0 : index
    %c27 = arith.constant 27 : index
    %438 = memref.load %arg6[%c0_117, %c27] : memref<2x49xf32, #tpu.memory_space<smem>>
    %439 = vector.broadcast %438 : f32 to vector<2x256xf32>
    %440 = arith.mulf %437, %439 : vector<2x256xf32>
    %441 = vector.extract_strided_slice %436 {offsets = [2, 0], sizes = [2, 256], strides = [1, 1]} : vector<4x256xf32> to vector<2x256xf32>
    %c1_118 = arith.constant 1 : index
    %c27_119 = arith.constant 27 : index
    %442 = memref.load %arg6[%c1_118, %c27_119] : memref<2x49xf32, #tpu.memory_space<smem>>
    %443 = vector.broadcast %442 : f32 to vector<2x256xf32>
    %444 = arith.mulf %441, %443 : vector<2x256xf32>
    %445 = arith.addf %440, %444 : vector<2x256xf32>
    %446 = vector.extract_strided_slice %41 {offsets = [6, 0], sizes = [1, 256], strides = [1, 1]} : vector<7x256xf32> to vector<1x256xf32>
    %447 = vector.broadcast %446 : vector<1x256xf32> to vector<2x256xf32>
    %448 = arith.mulf %445, %447 : vector<2x256xf32>
    %449 = arith.addf %435, %448 : vector<2x256xf32>
    %450 = vector.extract_strided_slice %40 {offsets = [3, 0], sizes = [1, 256], strides = [1, 1]} : vector<7x256xf32> to vector<1x256xf32>
    %451 = vector.broadcast %450 : vector<1x256xf32> to vector<2x256xf32>
    %452 = arith.mulf %449, %451 : vector<2x256xf32>
    %453 = arith.addf %351, %452 : vector<2x256xf32>
    %cst_120 = arith.constant 0.000000e+00 : f32
    %454 = vector.broadcast %cst_120 : f32 to vector<2x256xf32>
    %c243_i32 = arith.constant 243 : i32
    %455 = tpu.dynamic_rotate %39 by %c243_i32 dim 1 : vector<4x256xf32>, i32 -> vector<4x256xf32>
    %456 = vector.extract_strided_slice %455 {offsets = [0, 0], sizes = [2, 256], strides = [1, 1]} : vector<4x256xf32> to vector<2x256xf32>
    %c0_121 = arith.constant 0 : index
    %c28 = arith.constant 28 : index
    %457 = memref.load %arg6[%c0_121, %c28] : memref<2x49xf32, #tpu.memory_space<smem>>
    %458 = vector.broadcast %457 : f32 to vector<2x256xf32>
    %459 = arith.mulf %456, %458 : vector<2x256xf32>
    %460 = vector.extract_strided_slice %455 {offsets = [2, 0], sizes = [2, 256], strides = [1, 1]} : vector<4x256xf32> to vector<2x256xf32>
    %c1_122 = arith.constant 1 : index
    %c28_123 = arith.constant 28 : index
    %461 = memref.load %arg6[%c1_122, %c28_123] : memref<2x49xf32, #tpu.memory_space<smem>>
    %462 = vector.broadcast %461 : f32 to vector<2x256xf32>
    %463 = arith.mulf %460, %462 : vector<2x256xf32>
    %464 = arith.addf %459, %463 : vector<2x256xf32>
    %465 = vector.extract_strided_slice %41 {offsets = [0, 0], sizes = [1, 256], strides = [1, 1]} : vector<7x256xf32> to vector<1x256xf32>
    %466 = vector.broadcast %465 : vector<1x256xf32> to vector<2x256xf32>
    %467 = arith.mulf %464, %466 : vector<2x256xf32>
    %468 = arith.addf %454, %467 : vector<2x256xf32>
    %c242_i32 = arith.constant 242 : i32
    %469 = tpu.dynamic_rotate %39 by %c242_i32 dim 1 : vector<4x256xf32>, i32 -> vector<4x256xf32>
    %470 = vector.extract_strided_slice %469 {offsets = [0, 0], sizes = [2, 256], strides = [1, 1]} : vector<4x256xf32> to vector<2x256xf32>
    %c0_124 = arith.constant 0 : index
    %c29 = arith.constant 29 : index
    %471 = memref.load %arg6[%c0_124, %c29] : memref<2x49xf32, #tpu.memory_space<smem>>
    %472 = vector.broadcast %471 : f32 to vector<2x256xf32>
    %473 = arith.mulf %470, %472 : vector<2x256xf32>
    %474 = vector.extract_strided_slice %469 {offsets = [2, 0], sizes = [2, 256], strides = [1, 1]} : vector<4x256xf32> to vector<2x256xf32>
    %c1_125 = arith.constant 1 : index
    %c29_126 = arith.constant 29 : index
    %475 = memref.load %arg6[%c1_125, %c29_126] : memref<2x49xf32, #tpu.memory_space<smem>>
    %476 = vector.broadcast %475 : f32 to vector<2x256xf32>
    %477 = arith.mulf %474, %476 : vector<2x256xf32>
    %478 = arith.addf %473, %477 : vector<2x256xf32>
    %479 = vector.extract_strided_slice %41 {offsets = [1, 0], sizes = [1, 256], strides = [1, 1]} : vector<7x256xf32> to vector<1x256xf32>
    %480 = vector.broadcast %479 : vector<1x256xf32> to vector<2x256xf32>
    %481 = arith.mulf %478, %480 : vector<2x256xf32>
    %482 = arith.addf %468, %481 : vector<2x256xf32>
    %c241_i32 = arith.constant 241 : i32
    %483 = tpu.dynamic_rotate %39 by %c241_i32 dim 1 : vector<4x256xf32>, i32 -> vector<4x256xf32>
    %484 = vector.extract_strided_slice %483 {offsets = [0, 0], sizes = [2, 256], strides = [1, 1]} : vector<4x256xf32> to vector<2x256xf32>
    %c0_127 = arith.constant 0 : index
    %c30 = arith.constant 30 : index
    %485 = memref.load %arg6[%c0_127, %c30] : memref<2x49xf32, #tpu.memory_space<smem>>
    %486 = vector.broadcast %485 : f32 to vector<2x256xf32>
    %487 = arith.mulf %484, %486 : vector<2x256xf32>
    %488 = vector.extract_strided_slice %483 {offsets = [2, 0], sizes = [2, 256], strides = [1, 1]} : vector<4x256xf32> to vector<2x256xf32>
    %c1_128 = arith.constant 1 : index
    %c30_129 = arith.constant 30 : index
    %489 = memref.load %arg6[%c1_128, %c30_129] : memref<2x49xf32, #tpu.memory_space<smem>>
    %490 = vector.broadcast %489 : f32 to vector<2x256xf32>
    %491 = arith.mulf %488, %490 : vector<2x256xf32>
    %492 = arith.addf %487, %491 : vector<2x256xf32>
    %493 = vector.extract_strided_slice %41 {offsets = [2, 0], sizes = [1, 256], strides = [1, 1]} : vector<7x256xf32> to vector<1x256xf32>
    %494 = vector.broadcast %493 : vector<1x256xf32> to vector<2x256xf32>
    %495 = arith.mulf %492, %494 : vector<2x256xf32>
    %496 = arith.addf %482, %495 : vector<2x256xf32>
    %c240_i32 = arith.constant 240 : i32
    %497 = tpu.dynamic_rotate %39 by %c240_i32 dim 1 : vector<4x256xf32>, i32 -> vector<4x256xf32>
    %498 = vector.extract_strided_slice %497 {offsets = [0, 0], sizes = [2, 256], strides = [1, 1]} : vector<4x256xf32> to vector<2x256xf32>
    %c0_130 = arith.constant 0 : index
    %c31 = arith.constant 31 : index
    %499 = memref.load %arg6[%c0_130, %c31] : memref<2x49xf32, #tpu.memory_space<smem>>
    %500 = vector.broadcast %499 : f32 to vector<2x256xf32>
    %501 = arith.mulf %498, %500 : vector<2x256xf32>
    %502 = vector.extract_strided_slice %497 {offsets = [2, 0], sizes = [2, 256], strides = [1, 1]} : vector<4x256xf32> to vector<2x256xf32>
    %c1_131 = arith.constant 1 : index
    %c31_132 = arith.constant 31 : index
    %503 = memref.load %arg6[%c1_131, %c31_132] : memref<2x49xf32, #tpu.memory_space<smem>>
    %504 = vector.broadcast %503 : f32 to vector<2x256xf32>
    %505 = arith.mulf %502, %504 : vector<2x256xf32>
    %506 = arith.addf %501, %505 : vector<2x256xf32>
    %507 = vector.extract_strided_slice %41 {offsets = [3, 0], sizes = [1, 256], strides = [1, 1]} : vector<7x256xf32> to vector<1x256xf32>
    %508 = vector.broadcast %507 : vector<1x256xf32> to vector<2x256xf32>
    %509 = arith.mulf %506, %508 : vector<2x256xf32>
    %510 = arith.addf %496, %509 : vector<2x256xf32>
    %c239_i32 = arith.constant 239 : i32
    %511 = tpu.dynamic_rotate %39 by %c239_i32 dim 1 : vector<4x256xf32>, i32 -> vector<4x256xf32>
    %512 = vector.extract_strided_slice %511 {offsets = [0, 0], sizes = [2, 256], strides = [1, 1]} : vector<4x256xf32> to vector<2x256xf32>
    %c0_133 = arith.constant 0 : index
    %c32 = arith.constant 32 : index
    %513 = memref.load %arg6[%c0_133, %c32] : memref<2x49xf32, #tpu.memory_space<smem>>
    %514 = vector.broadcast %513 : f32 to vector<2x256xf32>
    %515 = arith.mulf %512, %514 : vector<2x256xf32>
    %516 = vector.extract_strided_slice %511 {offsets = [2, 0], sizes = [2, 256], strides = [1, 1]} : vector<4x256xf32> to vector<2x256xf32>
    %c1_134 = arith.constant 1 : index
    %c32_135 = arith.constant 32 : index
    %517 = memref.load %arg6[%c1_134, %c32_135] : memref<2x49xf32, #tpu.memory_space<smem>>
    %518 = vector.broadcast %517 : f32 to vector<2x256xf32>
    %519 = arith.mulf %516, %518 : vector<2x256xf32>
    %520 = arith.addf %515, %519 : vector<2x256xf32>
    %521 = vector.extract_strided_slice %41 {offsets = [4, 0], sizes = [1, 256], strides = [1, 1]} : vector<7x256xf32> to vector<1x256xf32>
    %522 = vector.broadcast %521 : vector<1x256xf32> to vector<2x256xf32>
    %523 = arith.mulf %520, %522 : vector<2x256xf32>
    %524 = arith.addf %510, %523 : vector<2x256xf32>
    %c238_i32 = arith.constant 238 : i32
    %525 = tpu.dynamic_rotate %39 by %c238_i32 dim 1 : vector<4x256xf32>, i32 -> vector<4x256xf32>
    %526 = vector.extract_strided_slice %525 {offsets = [0, 0], sizes = [2, 256], strides = [1, 1]} : vector<4x256xf32> to vector<2x256xf32>
    %c0_136 = arith.constant 0 : index
    %c33 = arith.constant 33 : index
    %527 = memref.load %arg6[%c0_136, %c33] : memref<2x49xf32, #tpu.memory_space<smem>>
    %528 = vector.broadcast %527 : f32 to vector<2x256xf32>
    %529 = arith.mulf %526, %528 : vector<2x256xf32>
    %530 = vector.extract_strided_slice %525 {offsets = [2, 0], sizes = [2, 256], strides = [1, 1]} : vector<4x256xf32> to vector<2x256xf32>
    %c1_137 = arith.constant 1 : index
    %c33_138 = arith.constant 33 : index
    %531 = memref.load %arg6[%c1_137, %c33_138] : memref<2x49xf32, #tpu.memory_space<smem>>
    %532 = vector.broadcast %531 : f32 to vector<2x256xf32>
    %533 = arith.mulf %530, %532 : vector<2x256xf32>
    %534 = arith.addf %529, %533 : vector<2x256xf32>
    %535 = vector.extract_strided_slice %41 {offsets = [5, 0], sizes = [1, 256], strides = [1, 1]} : vector<7x256xf32> to vector<1x256xf32>
    %536 = vector.broadcast %535 : vector<1x256xf32> to vector<2x256xf32>
    %537 = arith.mulf %534, %536 : vector<2x256xf32>
    %538 = arith.addf %524, %537 : vector<2x256xf32>
    %c237_i32 = arith.constant 237 : i32
    %539 = tpu.dynamic_rotate %39 by %c237_i32 dim 1 : vector<4x256xf32>, i32 -> vector<4x256xf32>
    %540 = vector.extract_strided_slice %539 {offsets = [0, 0], sizes = [2, 256], strides = [1, 1]} : vector<4x256xf32> to vector<2x256xf32>
    %c0_139 = arith.constant 0 : index
    %c34 = arith.constant 34 : index
    %541 = memref.load %arg6[%c0_139, %c34] : memref<2x49xf32, #tpu.memory_space<smem>>
    %542 = vector.broadcast %541 : f32 to vector<2x256xf32>
    %543 = arith.mulf %540, %542 : vector<2x256xf32>
    %544 = vector.extract_strided_slice %539 {offsets = [2, 0], sizes = [2, 256], strides = [1, 1]} : vector<4x256xf32> to vector<2x256xf32>
    %c1_140 = arith.constant 1 : index
    %c34_141 = arith.constant 34 : index
    %545 = memref.load %arg6[%c1_140, %c34_141] : memref<2x49xf32, #tpu.memory_space<smem>>
    %546 = vector.broadcast %545 : f32 to vector<2x256xf32>
    %547 = arith.mulf %544, %546 : vector<2x256xf32>
    %548 = arith.addf %543, %547 : vector<2x256xf32>
    %549 = vector.extract_strided_slice %41 {offsets = [6, 0], sizes = [1, 256], strides = [1, 1]} : vector<7x256xf32> to vector<1x256xf32>
    %550 = vector.broadcast %549 : vector<1x256xf32> to vector<2x256xf32>
    %551 = arith.mulf %548, %550 : vector<2x256xf32>
    %552 = arith.addf %538, %551 : vector<2x256xf32>
    %553 = vector.extract_strided_slice %40 {offsets = [4, 0], sizes = [1, 256], strides = [1, 1]} : vector<7x256xf32> to vector<1x256xf32>
    %554 = vector.broadcast %553 : vector<1x256xf32> to vector<2x256xf32>
    %555 = arith.mulf %552, %554 : vector<2x256xf32>
    %556 = arith.addf %453, %555 : vector<2x256xf32>
    %cst_142 = arith.constant 0.000000e+00 : f32
    %557 = vector.broadcast %cst_142 : f32 to vector<2x256xf32>
    %c227_i32 = arith.constant 227 : i32
    %558 = tpu.dynamic_rotate %39 by %c227_i32 dim 1 : vector<4x256xf32>, i32 -> vector<4x256xf32>
    %559 = vector.extract_strided_slice %558 {offsets = [0, 0], sizes = [2, 256], strides = [1, 1]} : vector<4x256xf32> to vector<2x256xf32>
    %c0_143 = arith.constant 0 : index
    %c35 = arith.constant 35 : index
    %560 = memref.load %arg6[%c0_143, %c35] : memref<2x49xf32, #tpu.memory_space<smem>>
    %561 = vector.broadcast %560 : f32 to vector<2x256xf32>
    %562 = arith.mulf %559, %561 : vector<2x256xf32>
    %563 = vector.extract_strided_slice %558 {offsets = [2, 0], sizes = [2, 256], strides = [1, 1]} : vector<4x256xf32> to vector<2x256xf32>
    %c1_144 = arith.constant 1 : index
    %c35_145 = arith.constant 35 : index
    %564 = memref.load %arg6[%c1_144, %c35_145] : memref<2x49xf32, #tpu.memory_space<smem>>
    %565 = vector.broadcast %564 : f32 to vector<2x256xf32>
    %566 = arith.mulf %563, %565 : vector<2x256xf32>
    %567 = arith.addf %562, %566 : vector<2x256xf32>
    %568 = vector.extract_strided_slice %41 {offsets = [0, 0], sizes = [1, 256], strides = [1, 1]} : vector<7x256xf32> to vector<1x256xf32>
    %569 = vector.broadcast %568 : vector<1x256xf32> to vector<2x256xf32>
    %570 = arith.mulf %567, %569 : vector<2x256xf32>
    %571 = arith.addf %557, %570 : vector<2x256xf32>
    %c226_i32 = arith.constant 226 : i32
    %572 = tpu.dynamic_rotate %39 by %c226_i32 dim 1 : vector<4x256xf32>, i32 -> vector<4x256xf32>
    %573 = vector.extract_strided_slice %572 {offsets = [0, 0], sizes = [2, 256], strides = [1, 1]} : vector<4x256xf32> to vector<2x256xf32>
    %c0_146 = arith.constant 0 : index
    %c36 = arith.constant 36 : index
    %574 = memref.load %arg6[%c0_146, %c36] : memref<2x49xf32, #tpu.memory_space<smem>>
    %575 = vector.broadcast %574 : f32 to vector<2x256xf32>
    %576 = arith.mulf %573, %575 : vector<2x256xf32>
    %577 = vector.extract_strided_slice %572 {offsets = [2, 0], sizes = [2, 256], strides = [1, 1]} : vector<4x256xf32> to vector<2x256xf32>
    %c1_147 = arith.constant 1 : index
    %c36_148 = arith.constant 36 : index
    %578 = memref.load %arg6[%c1_147, %c36_148] : memref<2x49xf32, #tpu.memory_space<smem>>
    %579 = vector.broadcast %578 : f32 to vector<2x256xf32>
    %580 = arith.mulf %577, %579 : vector<2x256xf32>
    %581 = arith.addf %576, %580 : vector<2x256xf32>
    %582 = vector.extract_strided_slice %41 {offsets = [1, 0], sizes = [1, 256], strides = [1, 1]} : vector<7x256xf32> to vector<1x256xf32>
    %583 = vector.broadcast %582 : vector<1x256xf32> to vector<2x256xf32>
    %584 = arith.mulf %581, %583 : vector<2x256xf32>
    %585 = arith.addf %571, %584 : vector<2x256xf32>
    %c225_i32 = arith.constant 225 : i32
    %586 = tpu.dynamic_rotate %39 by %c225_i32 dim 1 : vector<4x256xf32>, i32 -> vector<4x256xf32>
    %587 = vector.extract_strided_slice %586 {offsets = [0, 0], sizes = [2, 256], strides = [1, 1]} : vector<4x256xf32> to vector<2x256xf32>
    %c0_149 = arith.constant 0 : index
    %c37 = arith.constant 37 : index
    %588 = memref.load %arg6[%c0_149, %c37] : memref<2x49xf32, #tpu.memory_space<smem>>
    %589 = vector.broadcast %588 : f32 to vector<2x256xf32>
    %590 = arith.mulf %587, %589 : vector<2x256xf32>
    %591 = vector.extract_strided_slice %586 {offsets = [2, 0], sizes = [2, 256], strides = [1, 1]} : vector<4x256xf32> to vector<2x256xf32>
    %c1_150 = arith.constant 1 : index
    %c37_151 = arith.constant 37 : index
    %592 = memref.load %arg6[%c1_150, %c37_151] : memref<2x49xf32, #tpu.memory_space<smem>>
    %593 = vector.broadcast %592 : f32 to vector<2x256xf32>
    %594 = arith.mulf %591, %593 : vector<2x256xf32>
    %595 = arith.addf %590, %594 : vector<2x256xf32>
    %596 = vector.extract_strided_slice %41 {offsets = [2, 0], sizes = [1, 256], strides = [1, 1]} : vector<7x256xf32> to vector<1x256xf32>
    %597 = vector.broadcast %596 : vector<1x256xf32> to vector<2x256xf32>
    %598 = arith.mulf %595, %597 : vector<2x256xf32>
    %599 = arith.addf %585, %598 : vector<2x256xf32>
    %c224_i32 = arith.constant 224 : i32
    %600 = tpu.dynamic_rotate %39 by %c224_i32 dim 1 : vector<4x256xf32>, i32 -> vector<4x256xf32>
    %601 = vector.extract_strided_slice %600 {offsets = [0, 0], sizes = [2, 256], strides = [1, 1]} : vector<4x256xf32> to vector<2x256xf32>
    %c0_152 = arith.constant 0 : index
    %c38 = arith.constant 38 : index
    %602 = memref.load %arg6[%c0_152, %c38] : memref<2x49xf32, #tpu.memory_space<smem>>
    %603 = vector.broadcast %602 : f32 to vector<2x256xf32>
    %604 = arith.mulf %601, %603 : vector<2x256xf32>
    %605 = vector.extract_strided_slice %600 {offsets = [2, 0], sizes = [2, 256], strides = [1, 1]} : vector<4x256xf32> to vector<2x256xf32>
    %c1_153 = arith.constant 1 : index
    %c38_154 = arith.constant 38 : index
    %606 = memref.load %arg6[%c1_153, %c38_154] : memref<2x49xf32, #tpu.memory_space<smem>>
    %607 = vector.broadcast %606 : f32 to vector<2x256xf32>
    %608 = arith.mulf %605, %607 : vector<2x256xf32>
    %609 = arith.addf %604, %608 : vector<2x256xf32>
    %610 = vector.extract_strided_slice %41 {offsets = [3, 0], sizes = [1, 256], strides = [1, 1]} : vector<7x256xf32> to vector<1x256xf32>
    %611 = vector.broadcast %610 : vector<1x256xf32> to vector<2x256xf32>
    %612 = arith.mulf %609, %611 : vector<2x256xf32>
    %613 = arith.addf %599, %612 : vector<2x256xf32>
    %c223_i32 = arith.constant 223 : i32
    %614 = tpu.dynamic_rotate %39 by %c223_i32 dim 1 : vector<4x256xf32>, i32 -> vector<4x256xf32>
    %615 = vector.extract_strided_slice %614 {offsets = [0, 0], sizes = [2, 256], strides = [1, 1]} : vector<4x256xf32> to vector<2x256xf32>
    %c0_155 = arith.constant 0 : index
    %c39 = arith.constant 39 : index
    %616 = memref.load %arg6[%c0_155, %c39] : memref<2x49xf32, #tpu.memory_space<smem>>
    %617 = vector.broadcast %616 : f32 to vector<2x256xf32>
    %618 = arith.mulf %615, %617 : vector<2x256xf32>
    %619 = vector.extract_strided_slice %614 {offsets = [2, 0], sizes = [2, 256], strides = [1, 1]} : vector<4x256xf32> to vector<2x256xf32>
    %c1_156 = arith.constant 1 : index
    %c39_157 = arith.constant 39 : index
    %620 = memref.load %arg6[%c1_156, %c39_157] : memref<2x49xf32, #tpu.memory_space<smem>>
    %621 = vector.broadcast %620 : f32 to vector<2x256xf32>
    %622 = arith.mulf %619, %621 : vector<2x256xf32>
    %623 = arith.addf %618, %622 : vector<2x256xf32>
    %624 = vector.extract_strided_slice %41 {offsets = [4, 0], sizes = [1, 256], strides = [1, 1]} : vector<7x256xf32> to vector<1x256xf32>
    %625 = vector.broadcast %624 : vector<1x256xf32> to vector<2x256xf32>
    %626 = arith.mulf %623, %625 : vector<2x256xf32>
    %627 = arith.addf %613, %626 : vector<2x256xf32>
    %c222_i32 = arith.constant 222 : i32
    %628 = tpu.dynamic_rotate %39 by %c222_i32 dim 1 : vector<4x256xf32>, i32 -> vector<4x256xf32>
    %629 = vector.extract_strided_slice %628 {offsets = [0, 0], sizes = [2, 256], strides = [1, 1]} : vector<4x256xf32> to vector<2x256xf32>
    %c0_158 = arith.constant 0 : index
    %c40 = arith.constant 40 : index
    %630 = memref.load %arg6[%c0_158, %c40] : memref<2x49xf32, #tpu.memory_space<smem>>
    %631 = vector.broadcast %630 : f32 to vector<2x256xf32>
    %632 = arith.mulf %629, %631 : vector<2x256xf32>
    %633 = vector.extract_strided_slice %628 {offsets = [2, 0], sizes = [2, 256], strides = [1, 1]} : vector<4x256xf32> to vector<2x256xf32>
    %c1_159 = arith.constant 1 : index
    %c40_160 = arith.constant 40 : index
    %634 = memref.load %arg6[%c1_159, %c40_160] : memref<2x49xf32, #tpu.memory_space<smem>>
    %635 = vector.broadcast %634 : f32 to vector<2x256xf32>
    %636 = arith.mulf %633, %635 : vector<2x256xf32>
    %637 = arith.addf %632, %636 : vector<2x256xf32>
    %638 = vector.extract_strided_slice %41 {offsets = [5, 0], sizes = [1, 256], strides = [1, 1]} : vector<7x256xf32> to vector<1x256xf32>
    %639 = vector.broadcast %638 : vector<1x256xf32> to vector<2x256xf32>
    %640 = arith.mulf %637, %639 : vector<2x256xf32>
    %641 = arith.addf %627, %640 : vector<2x256xf32>
    %c221_i32 = arith.constant 221 : i32
    %642 = tpu.dynamic_rotate %39 by %c221_i32 dim 1 : vector<4x256xf32>, i32 -> vector<4x256xf32>
    %643 = vector.extract_strided_slice %642 {offsets = [0, 0], sizes = [2, 256], strides = [1, 1]} : vector<4x256xf32> to vector<2x256xf32>
    %c0_161 = arith.constant 0 : index
    %c41 = arith.constant 41 : index
    %644 = memref.load %arg6[%c0_161, %c41] : memref<2x49xf32, #tpu.memory_space<smem>>
    %645 = vector.broadcast %644 : f32 to vector<2x256xf32>
    %646 = arith.mulf %643, %645 : vector<2x256xf32>
    %647 = vector.extract_strided_slice %642 {offsets = [2, 0], sizes = [2, 256], strides = [1, 1]} : vector<4x256xf32> to vector<2x256xf32>
    %c1_162 = arith.constant 1 : index
    %c41_163 = arith.constant 41 : index
    %648 = memref.load %arg6[%c1_162, %c41_163] : memref<2x49xf32, #tpu.memory_space<smem>>
    %649 = vector.broadcast %648 : f32 to vector<2x256xf32>
    %650 = arith.mulf %647, %649 : vector<2x256xf32>
    %651 = arith.addf %646, %650 : vector<2x256xf32>
    %652 = vector.extract_strided_slice %41 {offsets = [6, 0], sizes = [1, 256], strides = [1, 1]} : vector<7x256xf32> to vector<1x256xf32>
    %653 = vector.broadcast %652 : vector<1x256xf32> to vector<2x256xf32>
    %654 = arith.mulf %651, %653 : vector<2x256xf32>
    %655 = arith.addf %641, %654 : vector<2x256xf32>
    %656 = vector.extract_strided_slice %40 {offsets = [5, 0], sizes = [1, 256], strides = [1, 1]} : vector<7x256xf32> to vector<1x256xf32>
    %657 = vector.broadcast %656 : vector<1x256xf32> to vector<2x256xf32>
    %658 = arith.mulf %655, %657 : vector<2x256xf32>
    %659 = arith.addf %556, %658 : vector<2x256xf32>
    %cst_164 = arith.constant 0.000000e+00 : f32
    %660 = vector.broadcast %cst_164 : f32 to vector<2x256xf32>
    %c211_i32 = arith.constant 211 : i32
    %661 = tpu.dynamic_rotate %39 by %c211_i32 dim 1 : vector<4x256xf32>, i32 -> vector<4x256xf32>
    %662 = vector.extract_strided_slice %661 {offsets = [0, 0], sizes = [2, 256], strides = [1, 1]} : vector<4x256xf32> to vector<2x256xf32>
    %c0_165 = arith.constant 0 : index
    %c42 = arith.constant 42 : index
    %663 = memref.load %arg6[%c0_165, %c42] : memref<2x49xf32, #tpu.memory_space<smem>>
    %664 = vector.broadcast %663 : f32 to vector<2x256xf32>
    %665 = arith.mulf %662, %664 : vector<2x256xf32>
    %666 = vector.extract_strided_slice %661 {offsets = [2, 0], sizes = [2, 256], strides = [1, 1]} : vector<4x256xf32> to vector<2x256xf32>
    %c1_166 = arith.constant 1 : index
    %c42_167 = arith.constant 42 : index
    %667 = memref.load %arg6[%c1_166, %c42_167] : memref<2x49xf32, #tpu.memory_space<smem>>
    %668 = vector.broadcast %667 : f32 to vector<2x256xf32>
    %669 = arith.mulf %666, %668 : vector<2x256xf32>
    %670 = arith.addf %665, %669 : vector<2x256xf32>
    %671 = vector.extract_strided_slice %41 {offsets = [0, 0], sizes = [1, 256], strides = [1, 1]} : vector<7x256xf32> to vector<1x256xf32>
    %672 = vector.broadcast %671 : vector<1x256xf32> to vector<2x256xf32>
    %673 = arith.mulf %670, %672 : vector<2x256xf32>
    %674 = arith.addf %660, %673 : vector<2x256xf32>
    %c210_i32 = arith.constant 210 : i32
    %675 = tpu.dynamic_rotate %39 by %c210_i32 dim 1 : vector<4x256xf32>, i32 -> vector<4x256xf32>
    %676 = vector.extract_strided_slice %675 {offsets = [0, 0], sizes = [2, 256], strides = [1, 1]} : vector<4x256xf32> to vector<2x256xf32>
    %c0_168 = arith.constant 0 : index
    %c43 = arith.constant 43 : index
    %677 = memref.load %arg6[%c0_168, %c43] : memref<2x49xf32, #tpu.memory_space<smem>>
    %678 = vector.broadcast %677 : f32 to vector<2x256xf32>
    %679 = arith.mulf %676, %678 : vector<2x256xf32>
    %680 = vector.extract_strided_slice %675 {offsets = [2, 0], sizes = [2, 256], strides = [1, 1]} : vector<4x256xf32> to vector<2x256xf32>
    %c1_169 = arith.constant 1 : index
    %c43_170 = arith.constant 43 : index
    %681 = memref.load %arg6[%c1_169, %c43_170] : memref<2x49xf32, #tpu.memory_space<smem>>
    %682 = vector.broadcast %681 : f32 to vector<2x256xf32>
    %683 = arith.mulf %680, %682 : vector<2x256xf32>
    %684 = arith.addf %679, %683 : vector<2x256xf32>
    %685 = vector.extract_strided_slice %41 {offsets = [1, 0], sizes = [1, 256], strides = [1, 1]} : vector<7x256xf32> to vector<1x256xf32>
    %686 = vector.broadcast %685 : vector<1x256xf32> to vector<2x256xf32>
    %687 = arith.mulf %684, %686 : vector<2x256xf32>
    %688 = arith.addf %674, %687 : vector<2x256xf32>
    %c209_i32 = arith.constant 209 : i32
    %689 = tpu.dynamic_rotate %39 by %c209_i32 dim 1 : vector<4x256xf32>, i32 -> vector<4x256xf32>
    %690 = vector.extract_strided_slice %689 {offsets = [0, 0], sizes = [2, 256], strides = [1, 1]} : vector<4x256xf32> to vector<2x256xf32>
    %c0_171 = arith.constant 0 : index
    %c44 = arith.constant 44 : index
    %691 = memref.load %arg6[%c0_171, %c44] : memref<2x49xf32, #tpu.memory_space<smem>>
    %692 = vector.broadcast %691 : f32 to vector<2x256xf32>
    %693 = arith.mulf %690, %692 : vector<2x256xf32>
    %694 = vector.extract_strided_slice %689 {offsets = [2, 0], sizes = [2, 256], strides = [1, 1]} : vector<4x256xf32> to vector<2x256xf32>
    %c1_172 = arith.constant 1 : index
    %c44_173 = arith.constant 44 : index
    %695 = memref.load %arg6[%c1_172, %c44_173] : memref<2x49xf32, #tpu.memory_space<smem>>
    %696 = vector.broadcast %695 : f32 to vector<2x256xf32>
    %697 = arith.mulf %694, %696 : vector<2x256xf32>
    %698 = arith.addf %693, %697 : vector<2x256xf32>
    %699 = vector.extract_strided_slice %41 {offsets = [2, 0], sizes = [1, 256], strides = [1, 1]} : vector<7x256xf32> to vector<1x256xf32>
    %700 = vector.broadcast %699 : vector<1x256xf32> to vector<2x256xf32>
    %701 = arith.mulf %698, %700 : vector<2x256xf32>
    %702 = arith.addf %688, %701 : vector<2x256xf32>
    %c208_i32 = arith.constant 208 : i32
    %703 = tpu.dynamic_rotate %39 by %c208_i32 dim 1 : vector<4x256xf32>, i32 -> vector<4x256xf32>
    %704 = vector.extract_strided_slice %703 {offsets = [0, 0], sizes = [2, 256], strides = [1, 1]} : vector<4x256xf32> to vector<2x256xf32>
    %c0_174 = arith.constant 0 : index
    %c45 = arith.constant 45 : index
    %705 = memref.load %arg6[%c0_174, %c45] : memref<2x49xf32, #tpu.memory_space<smem>>
    %706 = vector.broadcast %705 : f32 to vector<2x256xf32>
    %707 = arith.mulf %704, %706 : vector<2x256xf32>
    %708 = vector.extract_strided_slice %703 {offsets = [2, 0], sizes = [2, 256], strides = [1, 1]} : vector<4x256xf32> to vector<2x256xf32>
    %c1_175 = arith.constant 1 : index
    %c45_176 = arith.constant 45 : index
    %709 = memref.load %arg6[%c1_175, %c45_176] : memref<2x49xf32, #tpu.memory_space<smem>>
    %710 = vector.broadcast %709 : f32 to vector<2x256xf32>
    %711 = arith.mulf %708, %710 : vector<2x256xf32>
    %712 = arith.addf %707, %711 : vector<2x256xf32>
    %713 = vector.extract_strided_slice %41 {offsets = [3, 0], sizes = [1, 256], strides = [1, 1]} : vector<7x256xf32> to vector<1x256xf32>
    %714 = vector.broadcast %713 : vector<1x256xf32> to vector<2x256xf32>
    %715 = arith.mulf %712, %714 : vector<2x256xf32>
    %716 = arith.addf %702, %715 : vector<2x256xf32>
    %c207_i32 = arith.constant 207 : i32
    %717 = tpu.dynamic_rotate %39 by %c207_i32 dim 1 : vector<4x256xf32>, i32 -> vector<4x256xf32>
    %718 = vector.extract_strided_slice %717 {offsets = [0, 0], sizes = [2, 256], strides = [1, 1]} : vector<4x256xf32> to vector<2x256xf32>
    %c0_177 = arith.constant 0 : index
    %c46 = arith.constant 46 : index
    %719 = memref.load %arg6[%c0_177, %c46] : memref<2x49xf32, #tpu.memory_space<smem>>
    %720 = vector.broadcast %719 : f32 to vector<2x256xf32>
    %721 = arith.mulf %718, %720 : vector<2x256xf32>
    %722 = vector.extract_strided_slice %717 {offsets = [2, 0], sizes = [2, 256], strides = [1, 1]} : vector<4x256xf32> to vector<2x256xf32>
    %c1_178 = arith.constant 1 : index
    %c46_179 = arith.constant 46 : index
    %723 = memref.load %arg6[%c1_178, %c46_179] : memref<2x49xf32, #tpu.memory_space<smem>>
    %724 = vector.broadcast %723 : f32 to vector<2x256xf32>
    %725 = arith.mulf %722, %724 : vector<2x256xf32>
    %726 = arith.addf %721, %725 : vector<2x256xf32>
    %727 = vector.extract_strided_slice %41 {offsets = [4, 0], sizes = [1, 256], strides = [1, 1]} : vector<7x256xf32> to vector<1x256xf32>
    %728 = vector.broadcast %727 : vector<1x256xf32> to vector<2x256xf32>
    %729 = arith.mulf %726, %728 : vector<2x256xf32>
    %730 = arith.addf %716, %729 : vector<2x256xf32>
    %c206_i32 = arith.constant 206 : i32
    %731 = tpu.dynamic_rotate %39 by %c206_i32 dim 1 : vector<4x256xf32>, i32 -> vector<4x256xf32>
    %732 = vector.extract_strided_slice %731 {offsets = [0, 0], sizes = [2, 256], strides = [1, 1]} : vector<4x256xf32> to vector<2x256xf32>
    %c0_180 = arith.constant 0 : index
    %c47 = arith.constant 47 : index
    %733 = memref.load %arg6[%c0_180, %c47] : memref<2x49xf32, #tpu.memory_space<smem>>
    %734 = vector.broadcast %733 : f32 to vector<2x256xf32>
    %735 = arith.mulf %732, %734 : vector<2x256xf32>
    %736 = vector.extract_strided_slice %731 {offsets = [2, 0], sizes = [2, 256], strides = [1, 1]} : vector<4x256xf32> to vector<2x256xf32>
    %c1_181 = arith.constant 1 : index
    %c47_182 = arith.constant 47 : index
    %737 = memref.load %arg6[%c1_181, %c47_182] : memref<2x49xf32, #tpu.memory_space<smem>>
    %738 = vector.broadcast %737 : f32 to vector<2x256xf32>
    %739 = arith.mulf %736, %738 : vector<2x256xf32>
    %740 = arith.addf %735, %739 : vector<2x256xf32>
    %741 = vector.extract_strided_slice %41 {offsets = [5, 0], sizes = [1, 256], strides = [1, 1]} : vector<7x256xf32> to vector<1x256xf32>
    %742 = vector.broadcast %741 : vector<1x256xf32> to vector<2x256xf32>
    %743 = arith.mulf %740, %742 : vector<2x256xf32>
    %744 = arith.addf %730, %743 : vector<2x256xf32>
    %c205_i32 = arith.constant 205 : i32
    %745 = tpu.dynamic_rotate %39 by %c205_i32 dim 1 : vector<4x256xf32>, i32 -> vector<4x256xf32>
    %746 = vector.extract_strided_slice %745 {offsets = [0, 0], sizes = [2, 256], strides = [1, 1]} : vector<4x256xf32> to vector<2x256xf32>
    %c0_183 = arith.constant 0 : index
    %c48 = arith.constant 48 : index
    %747 = memref.load %arg6[%c0_183, %c48] : memref<2x49xf32, #tpu.memory_space<smem>>
    %748 = vector.broadcast %747 : f32 to vector<2x256xf32>
    %749 = arith.mulf %746, %748 : vector<2x256xf32>
    %750 = vector.extract_strided_slice %745 {offsets = [2, 0], sizes = [2, 256], strides = [1, 1]} : vector<4x256xf32> to vector<2x256xf32>
    %c1_184 = arith.constant 1 : index
    %c48_185 = arith.constant 48 : index
    %751 = memref.load %arg6[%c1_184, %c48_185] : memref<2x49xf32, #tpu.memory_space<smem>>
    %752 = vector.broadcast %751 : f32 to vector<2x256xf32>
    %753 = arith.mulf %750, %752 : vector<2x256xf32>
    %754 = arith.addf %749, %753 : vector<2x256xf32>
    %755 = vector.extract_strided_slice %41 {offsets = [6, 0], sizes = [1, 256], strides = [1, 1]} : vector<7x256xf32> to vector<1x256xf32>
    %756 = vector.broadcast %755 : vector<1x256xf32> to vector<2x256xf32>
    %757 = arith.mulf %754, %756 : vector<2x256xf32>
    %758 = arith.addf %744, %757 : vector<2x256xf32>
    %759 = vector.extract_strided_slice %40 {offsets = [6, 0], sizes = [1, 256], strides = [1, 1]} : vector<7x256xf32> to vector<1x256xf32>
    %760 = vector.broadcast %759 : vector<1x256xf32> to vector<2x256xf32>
    %761 = arith.mulf %758, %760 : vector<2x256xf32>
    %762 = arith.addf %659, %761 : vector<2x256xf32>
    %c0_186 = arith.constant 0 : index
    %c0_187 = arith.constant 0 : index
    %763 = vector.load %arg10[%c0_186, %c0_187] : memref<2x256xf32, #tpu.memory_space<vmem>>, vector<2x256xf32>
    tpu.vector_store %arg10[%c0_186, %c0_187], %762 {strides = array<i32>} : memref<2x256xf32, #tpu.memory_space<vmem>>, vector<2x256xf32>,
    return
  }
  func.func @transform_0(%arg0: i32) -> (i32, i32, i32) {
    %c0_i32 = arith.constant 0 : i32
    %c0_i32_0 = arith.constant 0 : i32
    %c0_i32_1 = arith.constant 0 : i32
    return %arg0, %c0_i32, %c0_i32_0 : i32, i32, i32
  }
  func.func @transform_1(%arg0: i32) -> (i32, i32) {
    %c0_i32 = arith.constant 0 : i32
    %c0_i32_0 = arith.constant 0 : i32
    %c0_i32_1 = arith.constant 0 : i32
    return %c0_i32, %c0_i32_0 : i32, i32
  }
  func.func @transform_2(%arg0: i32) -> (i32, i32) {
    %c0_i32 = arith.constant 0 : i32
    %c0_i32_0 = arith.constant 0 : i32
    %c0_i32_1 = arith.constant 0 : i32
    return %c0_i32, %c0_i32_0 : i32, i32
  }
  func.func @transform_3(%arg0: i32) -> (i32, i32) {
    %c0_i32 = arith.constant 0 : i32
    %c0_i32_0 = arith.constant 0 : i32
    %c0_i32_1 = arith.constant 0 : i32
    return %c0_i32, %c0_i32_0 : i32, i32
  }
  func.func @transform_4(%arg0: i32) -> (i32, i32) {
    %c0_i32 = arith.constant 0 : i32
    %c0_i32_0 = arith.constant 0 : i32
    %c0_i32_1 = arith.constant 0 : i32
    return %c0_i32, %c0_i32_0 : i32, i32
  }
  func.func @transform_5(%arg0: i32) -> (i32, i32) {
    %c0_i32 = arith.constant 0 : i32
    %c0_i32_0 = arith.constant 0 : i32
    %c0_i32_1 = arith.constant 0 : i32
    return %c0_i32, %c0_i32_0 : i32, i32
  }
  func.func @transform_6(%arg0: i32) -> (i32, i32) {
    %c0_i32 = arith.constant 0 : i32
    %c0_i32_0 = arith.constant 0 : i32
    %c0_i32_1 = arith.constant 0 : i32
    return %c0_i32, %c0_i32_0 : i32, i32
  }
  func.func @transform_7(%arg0: i32) -> (i32, i32) {
    %c0_i32 = arith.constant 0 : i32
    %c0_i32_0 = arith.constant 0 : i32
    %c0_i32_1 = arith.constant 0 : i32
    return %c0_i32, %c0_i32_0 : i32, i32
  }
  func.func @transform_8(%arg0: i32) -> (i32, i32) {
    %c0_i32 = arith.constant 0 : i32
    %c0_i32_0 = arith.constant 0 : i32
    return %arg0, %c0_i32 : i32, i32
  }
  func.func @transform_9(%arg0: i32) -> (i32, i32) {
    %c0_i32 = arith.constant 0 : i32
    %c0_i32_0 = arith.constant 0 : i32
    return %arg0, %c0_i32 : i32, i32
  }
}

</mosaic_0001>

<llo_original>
// kernel: cbam_pallas.3
$region0: #{cbam_pallas.3}
  #allocation0 [shape = 'u32[]', space=smem, size = 0x4, offset = 0x4, fixed_abs, tag = 'smem constant byte address 0x4 - core index']
  #allocation1 [shape = 'u32[144,128]{1,0:T(1,128)}', space=vmem, size = 0x12000, scoped, tag = 'internal scratch']
  %s0 = inlined_call_operand.vmem [shape: f32[2,32,256], index: 0, kind: input, shape index: {}]
  %s1 = inlined_call_operand.vmem [shape: f32[2,32], index: 1, kind: input, shape index: {}]
  %s2 = inlined_call_operand.vmem [shape: f32[2,256], index: 2, kind: input, shape index: {}]
  %s3 = inlined_call_operand.vmem [shape: f32[1,2], index: 3, kind: input, shape index: {}]
  %s4 = inlined_call_operand.vmem [shape: f32[2,32,256], index: 4, kind: output, shape index: {}]
  %s5 = sld [smem:[#allocation0]]
  $region30: #{cbam_pallas.3} parent=0
    _
  %s7 = ssub.s32 1, %s5
  %s8 = scalar_select 0, %s7, %s5
  $region1: #{cbam_pallas.3} parent=0
    #allocation2 [shape = 'u8[512]{0}', space=smem, size = 0x200, scoped, tag = 'input window, operand 3, single buffered']
    #allocation3 [shape = 's32[1]{0}', space=sflag, size = 0x4, scoped, tag = 'scoped memory for cbam_pallas.3']
    %9 = vsyncpa [#allocation3], 0
    // Predicated region
    $region2: #{cbam_pallas.3} parent=1 // pred_check
      _
    $region3: #{cbam_pallas.3} parent=1 // pred_check_branch
      %11 = sbr.rel (0) target = $region5
    $region4: #{cbam_pallas.3} parent=1 // pred_region
      _
    $region5: #{cbam_pallas.3} parent=1 // pred_fallthru
      _
    // Predicated region
    $region6: #{cbam_pallas.3} parent=1 // pred_check
      _
    $region7: #{cbam_pallas.3} parent=1 // pred_check_branch
      %13 = sbr.rel (0) target = $region9
    $region8: #{cbam_pallas.3} parent=1 // pred_region
      _
    $region9: #{cbam_pallas.3} parent=1 // pred_fallthru
      _
    // Predicated region
    $region10: #{cbam_pallas.3} parent=1 // pred_check
      _
    $region11: #{cbam_pallas.3} parent=1 // pred_check_branch
      %15 = sbr.rel (0) target = $region13
    $region12: #{cbam_pallas.3} parent=1 // pred_region
      _
    $region13: #{cbam_pallas.3} parent=1 // pred_fallthru
      _
    // Predicated region
    $region14: #{cbam_pallas.3} parent=1 // pred_check
      _
    $region15: #{cbam_pallas.3} parent=1 // pred_check_branch
      %17 = sbr.rel (0) target = $region17
    $region16: #{cbam_pallas.3} parent=1 // pred_region
      %s19 = ssub.s32 16, 16
      %20 = vsyncadd [#allocation3], %s19
      %s22 = sshll.u32 %s3, 4
      %s23 = int_to_ptr.vmem [resolvable:$true] %s22
      %25 = dma.vmem_to_smem %s23, 16, [#allocation2], [#allocation3]
    $region17: #{cbam_pallas.3} parent=1 // pred_fallthru
      _
    // Predicated region
    $region18: #{cbam_pallas.3} parent=1 // pred_check
      _
    $region19: #{cbam_pallas.3} parent=1 // pred_check_branch
      %27 = sbr.rel (0) target = $region21
    $region20: #{cbam_pallas.3} parent=1 // pred_region
      %28 = dma.done [#allocation3], 16
    $region21: #{cbam_pallas.3} parent=1 // pred_fallthru
      _
    %29 = sfence
    %s30 = sld [smem:[#allocation2]]
    %s31 = sld [smem:[#allocation2 + $0x1]]
    %v32 = vld [vmem:[%s2] sm:$0xf]
    %v33 = vstv %s30
    %v34 = vmul.f32 %v32, %v33
    %v35 = vstv %s31
    %v36 = vadd.f32 %v34, %v35
    %v37 = vxor.u32 %v36, 2147483648
    %v38 = vmul.f32 %v37, 1.442695
    %v39 = vpow.pop %v38
    %v40 = vadd.f32 %v39, 1.0
    %v41 = vrcp.pop %v40
    %v42 = vmul.f32 1.0, %v41
    %v43 = vld [vmem:[%s0] sm:$0xff]
    %v44 = vld [vmem:[%s0 + $0x8] sm:$0xff]
    %v45 = vld [vmem:[%s0 + $0x10] sm:$0xff]
    %v46 = vld [vmem:[%s0 + $0x18] sm:$0xff]
    %v47 = vld [vmem:[%s0 + $0x20] sm:$0xff]
    %v48 = vld [vmem:[%s0 + $0x28] sm:$0xff]
    %v49 = vld [vmem:[%s0 + $0x30] sm:$0xff]
    %v50 = vld [vmem:[%s0 + $0x38] sm:$0xff]
    %v51 = vld [vmem:[%s0 + $0x40] sm:$0xff]
    %v52 = vld [vmem:[%s0 + $0x48] sm:$0xff]
    %v53 = vld [vmem:[%s0 + $0x50] sm:$0xff]
    %v54 = vld [vmem:[%s0 + $0x58] sm:$0xff]
    %v55 = vld [vmem:[%s0 + $0x60] sm:$0xff]
    %v56 = vld [vmem:[%s0 + $0x68] sm:$0xff]
    %v57 = vld [vmem:[%s0 + $0x70] sm:$0xff]
    %v58 = vld [vmem:[%s0 + $0x78] sm:$0xff]
    %v59 = vld [vmem:[%s1] sm:$0x3]
    %v60 = vlaneseq
    %v61 = vshrl.u32 %v60, 7
    %v62 = vsub.s32 0, %v61
    %v63 = vrot.slane %v59, %v62
    %65 = vbcast.lane.b32.xlu0 %v63, 256
    %v66 = vpop.permute.xlu0 %65
    %s68 = sor.u32 256, 8
    %69 = vbcast.lane.b32.xlu0 %v63, %s68
    %v70 = vpop.permute.xlu0 %69
    %s72 = sor.u32 256, 16
    %73 = vbcast.lane.b32.xlu0 %v63, %s72
    %v74 = vpop.permute.xlu0 %73
    %s76 = sor.u32 256, 24
    %77 = vbcast.lane.b32.xlu0 %v63, %s76
    %v78 = vpop.permute.xlu0 %77
    %v79 = vlaneseq
    %v80 = vshrl.u32 %v79, 7
    %v81 = vsub.s32 1, %v80
    %v82 = vrot.slane %v59, %v81
    %84 = vbcast.lane.b32.xlu0 %v82, 256
    %v85 = vpop.permute.xlu0 %84
    %s87 = sor.u32 256, 8
    %88 = vbcast.lane.b32.xlu0 %v82, %s87
    %v89 = vpop.permute.xlu0 %88
    %s91 = sor.u32 256, 16
    %92 = vbcast.lane.b32.xlu0 %v82, %s91
    %v93 = vpop.permute.xlu0 %92
    %s95 = sor.u32 256, 24
    %96 = vbcast.lane.b32.xlu0 %v82, %s95
    %v97 = vpop.permute.xlu0 %96
    %v98 = vmul.f32 %v43, %v66
    %v99 = vmul.f32 %v44, %v66
    %v100 = vmul.f32 %v45, %v70
    %v101 = vmul.f32 %v46, %v70
    %v102 = vmul.f32 %v47, %v74
    %v103 = vmul.f32 %v48, %v74
    %v104 = vmul.f32 %v49, %v78
    %v105 = vmul.f32 %v50, %v78
    %v106 = vmul.f32 %v51, %v85
    %v107 = vmul.f32 %v52, %v85
    %v108 = vmul.f32 %v53, %v89
    %v109 = vmul.f32 %v54, %v89
    %v110 = vmul.f32 %v55, %v93
    %v111 = vmul.f32 %v56, %v93
    %v112 = vmul.f32 %v57, %v97
    %v113 = vmul.f32 %v58, %v97
    %v116 = vunpack.c.l.s4 1966171168
    %v117 = vunpack.c.0.s8 %v116
    %v118 = vlaneseq
    %v119 = vshrl.u32 %v118, 7
    %v120 = vsub.s32 %v117, %v119
    %v121 = vrot.slane %v42, %v120
    %v122 = vcombine.high %v121, %v121
    %v123 = vlaneseq
    %v124 = vshrl.u32 %v123, 7
    %v125 = vsub.s32 0, %v124
    %v126 = vrot.slane %v121, %v125
    %v127 = vlaneseq
    %v128 = vshrl.u32 %v127, 7
    %v129 = vsub.s32 1, %v128
    %v130 = vrot.slane %v121, %v129
    %v131 = vlaneseq
    %v132 = vshrl.u32 %v131, 7
    %v133 = vsub.s32 0, %v132
    %v134 = vrot.slane %v122, %v133
    %v135 = vlaneseq
    %v136 = vshrl.u32 %v135, 7
    %v137 = vsub.s32 1, %v136
    %v138 = vrot.slane %v122, %v137
    %v143 = vmul.f32 %v98, %v126
    %v144 = vmul.f32 %v99, %v130
    %v145 = vmul.f32 %v100, %v126
    %v146 = vmul.f32 %v101, %v130
    %v147 = vmul.f32 %v102, %v126
    %v148 = vmul.f32 %v103, %v130
    %v149 = vmul.f32 %v104, %v126
    %v150 = vmul.f32 %v105, %v130
    %v151 = vmul.f32 %v106, %v134
    %v152 = vmul.f32 %v107, %v138
    %v153 = vmul.f32 %v108, %v134
    %v154 = vmul.f32 %v109, %v138
    %v155 = vmul.f32 %v110, %v134
    %v156 = vmul.f32 %v111, %v138
    %v157 = vmul.f32 %v112, %v134
    %v158 = vmul.f32 %v113, %v138
    %159 = vst [vmem:[%s4] sm:$0xff] %v143
    %160 = vst [vmem:[%s4 + $0x8] sm:$0xff] %v144
    %161 = vst [vmem:[%s4 + $0x10] sm:$0xff] %v145
    %162 = vst [vmem:[%s4 + $0x18] sm:$0xff] %v146
    %163 = vst [vmem:[%s4 + $0x20] sm:$0xff] %v147
    %164 = vst [vmem:[%s4 + $0x28] sm:$0xff] %v148
    %165 = vst [vmem:[%s4 + $0x30] sm:$0xff] %v149
    %166 = vst [vmem:[%s4 + $0x38] sm:$0xff] %v150
    %167 = vst [vmem:[%s4 + $0x40] sm:$0xff] %v151
    %168 = vst [vmem:[%s4 + $0x48] sm:$0xff] %v152
    %169 = vst [vmem:[%s4 + $0x50] sm:$0xff] %v153
    %170 = vst [vmem:[%s4 + $0x58] sm:$0xff] %v154
    %171 = vst [vmem:[%s4 + $0x60] sm:$0xff] %v155
    %172 = vst [vmem:[%s4 + $0x68] sm:$0xff] %v156
    %173 = vst [vmem:[%s4 + $0x70] sm:$0xff] %v157
    %174 = vst [vmem:[%s4 + $0x78] sm:$0xff] %v158
    // Predicated region
    $region22: #{cbam_pallas.3} parent=1 // pred_check
      _
    $region23: #{cbam_pallas.3} parent=1 // pred_check_branch
      %176 = sbr.rel (0) target = $region25
    $region24: #{cbam_pallas.3} parent=1 // pred_region
      _
    $region25: #{cbam_pallas.3} parent=1 // pred_fallthru
      _
    // Predicated region
    $region26: #{cbam_pallas.3} parent=1 // pred_check
      _
    $region27: #{cbam_pallas.3} parent=1 // pred_check_branch
      %178 = sbr.rel (0) target = $region29
    $region28: #{cbam_pallas.3} parent=1 // pred_region
      _
    $region29: #{cbam_pallas.3} parent=1 // pred_fallthru
      _
    %179 = vsyncpa [#allocation3], 1

// kernel: cbam_pallas.2
$region0: #{cbam_pallas.2}
  #allocation0 [shape = 'u32[]', space=smem, size = 0x4, offset = 0x4, fixed_abs, tag = 'smem constant byte address 0x4 - core index']
  #allocation1 [shape = 'u32[144,128]{1,0:T(1,128)}', space=vmem, size = 0x12000, scoped, tag = 'internal scratch']
  %s0 = inlined_call_operand.vmem [shape: f32[2,32,256], index: 0, kind: input, shape index: {}]
  %s1 = inlined_call_operand.vmem [shape: f32[32,2], index: 1, kind: input, shape index: {}]
  %s2 = inlined_call_operand.vmem [shape: f32[1,2], index: 2, kind: input, shape index: {}]
  %s3 = inlined_call_operand.vmem [shape: f32[2,32], index: 3, kind: input, shape index: {}]
  %s4 = inlined_call_operand.vmem [shape: f32[1,32], index: 4, kind: input, shape index: {}]
  %s5 = inlined_call_operand.vmem [shape: f32[2,49], index: 5, kind: input, shape index: {}]
  %s6 = inlined_call_operand.vmem [shape: f32[7,256], index: 6, kind: input, shape index: {}]
  %s7 = inlined_call_operand.vmem [shape: f32[7,256], index: 7, kind: input, shape index: {}]
  %s8 = inlined_call_operand.vmem [shape: f32[2,32], index: 8, kind: output, shape index: {0}]
  %s9 = inlined_call_operand.vmem [shape: f32[2,256], index: 9, kind: output, shape index: {1}]
  %10 = xla_tuple %s8, %s9
  %s11 = sld [smem:[#allocation0]]
  $region54: #{cbam_pallas.2} parent=0
    _
  %s13 = ssub.s32 1, %s11
  %s14 = scalar_select 0, %s13, %s11
  $region1: #{cbam_pallas.2} parent=0
    #allocation2 [shape = 'u8[1024]{0}', space=smem, size = 0x400, scoped, tag = 'input window, operand 5, single buffered']
    #allocation3 [shape = 's32[1]{0}', space=sflag, size = 0x4, scoped, tag = 'scoped memory for cbam_pallas.2']
    %15 = vsyncpa [#allocation3], 0
    // Predicated region
    $region2: #{cbam_pallas.2} parent=1 // pred_check
      _
    $region3: #{cbam_pallas.2} parent=1 // pred_check_branch
      %17 = sbr.rel (0) target = $region5
    $region4: #{cbam_pallas.2} parent=1 // pred_region
      _
    $region5: #{cbam_pallas.2} parent=1 // pred_fallthru
      _
    // Predicated region
    $region6: #{cbam_pallas.2} parent=1 // pred_check
      _
    $region7: #{cbam_pallas.2} parent=1 // pred_check_branch
      %19 = sbr.rel (0) target = $region9
    $region8: #{cbam_pallas.2} parent=1 // pred_region
      _
    $region9: #{cbam_pallas.2} parent=1 // pred_fallthru
      _
    // Predicated region
    $region10: #{cbam_pallas.2} parent=1 // pred_check
      _
    $region11: #{cbam_pallas.2} parent=1 // pred_check_branch
      %21 = sbr.rel (0) target = $region13
    $region12: #{cbam_pallas.2} parent=1 // pred_region
      _
    $region13: #{cbam_pallas.2} parent=1 // pred_fallthru
      _
    // Predicated region
    $region14: #{cbam_pallas.2} parent=1 // pred_check
      _
    $region15: #{cbam_pallas.2} parent=1 // pred_check_branch
      %23 = sbr.rel (0) target = $region17
    $region16: #{cbam_pallas.2} parent=1 // pred_region
      _
    $region17: #{cbam_pallas.2} parent=1 // pred_fallthru
      _
    // Predicated region
    $region18: #{cbam_pallas.2} parent=1 // pred_check
      _
    $region19: #{cbam_pallas.2} parent=1 // pred_check_branch
      %25 = sbr.rel (0) target = $region21
    $region20: #{cbam_pallas.2} parent=1 // pred_region
      _
    $region21: #{cbam_pallas.2} parent=1 // pred_fallthru
      _
    // Predicated region
    $region22: #{cbam_pallas.2} parent=1 // pred_check
      _
    $region23: #{cbam_pallas.2} parent=1 // pred_check_branch
      %27 = sbr.rel (0) target = $region25
    $region24: #{cbam_pallas.2} parent=1 // pred_region
      %s29 = ssub.s32 32, 32
      %30 = vsyncadd [#allocation3], %s29
      %s32 = sshll.u32 %s5, 4
      %s33 = int_to_ptr.vmem [resolvable:$true] %s32
      %35 = dma.vmem_to_smem %s33, 32, [#allocation2], [#allocation3]
    $region25: #{cbam_pallas.2} parent=1 // pred_fallthru
      _
    // Predicated region
    $region26: #{cbam_pallas.2} parent=1 // pred_check
      _
    $region27: #{cbam_pallas.2} parent=1 // pred_check_branch
      %37 = sbr.rel (0) target = $region29
    $region28: #{cbam_pallas.2} parent=1 // pred_region
      _
    $region29: #{cbam_pallas.2} parent=1 // pred_fallthru
      _
    // Predicated region
    $region30: #{cbam_pallas.2} parent=1 // pred_check
      _
    $region31: #{cbam_pallas.2} parent=1 // pred_check_branch
      %39 = sbr.rel (0) target = $region33
    $region32: #{cbam_pallas.2} parent=1 // pred_region
      _
    $region33: #{cbam_pallas.2} parent=1 // pred_fallthru
      _
    // Predicated region
    $region34: #{cbam_pallas.2} parent=1 // pred_check
      _
    $region35: #{cbam_pallas.2} parent=1 // pred_check_branch
      %41 = sbr.rel (0) target = $region37
    $region36: #{cbam_pallas.2} parent=1 // pred_region
      %42 = dma.done [#allocation3], 32
    $region37: #{cbam_pallas.2} parent=1 // pred_fallthru
      _
    %43 = sfence
    %v44 = vld [vmem:[%s0] sm:$0xff]
    %v45 = vld [vmem:[%s0 + $0x8] sm:$0xff]
    %v46 = vld [vmem:[%s0 + $0x10] sm:$0xff]
    %v47 = vld [vmem:[%s0 + $0x18] sm:$0xff]
    %v48 = vld [vmem:[%s0 + $0x20] sm:$0xff]
    %v49 = vld [vmem:[%s0 + $0x28] sm:$0xff]
    %v50 = vld [vmem:[%s0 + $0x30] sm:$0xff]
    %v51 = vld [vmem:[%s0 + $0x38] sm:$0xff]
    %v52 = vld [vmem:[%s0 + $0x40] sm:$0xff]
    %v53 = vld [vmem:[%s0 + $0x48] sm:$0xff]
    %v54 = vld [vmem:[%s0 + $0x50] sm:$0xff]
    %v55 = vld [vmem:[%s0 + $0x58] sm:$0xff]
    %v56 = vld [vmem:[%s0 + $0x60] sm:$0xff]
    %v57 = vld [vmem:[%s0 + $0x68] sm:$0xff]
    %v58 = vld [vmem:[%s0 + $0x70] sm:$0xff]
    %v59 = vld [vmem:[%s0 + $0x78] sm:$0xff]
    %v60 = vadd.f32 %v44, %v45
    %61 = vadd.xlane.f32.xlu0 %v60
    %v62 = vpop.xlane.xlu0 %61
    %v63 = vadd.f32 %v46, %v47
    %64 = vadd.xlane.f32.xlu0 %v63
    %v65 = vpop.xlane.xlu0 %64
    %v66 = vadd.f32 %v48, %v49
    %67 = vadd.xlane.f32.xlu0 %v66
    %v68 = vpop.xlane.xlu0 %67
    %v69 = vadd.f32 %v50, %v51
    %70 = vadd.xlane.f32.xlu0 %v69
    %v71 = vpop.xlane.xlu0 %70
    %v72 = vadd.f32 %v52, %v53
    %73 = vadd.xlane.f32.xlu0 %v72
    %v74 = vpop.xlane.xlu0 %73
    %v75 = vadd.f32 %v54, %v55
    %76 = vadd.xlane.f32.xlu0 %v75
    %v77 = vpop.xlane.xlu0 %76
    %v78 = vadd.f32 %v56, %v57
    %79 = vadd.xlane.f32.xlu0 %v78
    %v80 = vpop.xlane.xlu0 %79
    %v81 = vadd.f32 %v58, %v59
    %82 = vadd.xlane.f32.xlu0 %v81
    %v83 = vpop.xlane.xlu0 %82
    %v84 = vmax.f32 %v44, %v45
    %85 = vmax.xlane.f32.xlu0 %v84
    %v86 = vpop.xlane.xlu0 %85
    %v87 = vmax.f32 %v46, %v47
    %88 = vmax.xlane.f32.xlu0 %v87
    %v89 = vpop.xlane.xlu0 %88
    %v90 = vmax.f32 %v48, %v49
    %91 = vmax.xlane.f32.xlu0 %v90
    %v92 = vpop.xlane.xlu0 %91
    %v93 = vmax.f32 %v50, %v51
    %94 = vmax.xlane.f32.xlu0 %v93
    %v95 = vpop.xlane.xlu0 %94
    %v96 = vmax.f32 %v52, %v53
    %97 = vmax.xlane.f32.xlu0 %v96
    %v98 = vpop.xlane.xlu0 %97
    %v99 = vmax.f32 %v54, %v55
    %100 = vmax.xlane.f32.xlu0 %v99
    %v101 = vpop.xlane.xlu0 %100
    %v102 = vmax.f32 %v56, %v57
    %103 = vmax.xlane.f32.xlu0 %v102
    %v104 = vpop.xlane.xlu0 %103
    %v105 = vmax.f32 %v58, %v59
    %106 = vmax.xlane.f32.xlu0 %v105
    %v107 = vpop.xlane.xlu0 %106
    %v108 = vmul.f32 %v62, 0.00390625
    %v109 = vmul.f32 %v65, 0.00390625
    %v110 = vmul.f32 %v68, 0.00390625
    %v111 = vmul.f32 %v71, 0.00390625
    %v112 = vmul.f32 %v74, 0.00390625
    %v113 = vmul.f32 %v77, 0.00390625
    %v114 = vmul.f32 %v80, 0.00390625
    %v115 = vmul.f32 %v83, 0.00390625
    %v124 = vlaneseq
    %v125 = vand.u32 %v124, 127
    %v126 = vlaneseq
    %v127 = vshrl.u32 %v126, 7
    %v128 = vsub.s32 %v125, %v127
    %v129 = vrot.slane %v108, %v128
    %v130 = vadd.s32 %v125, 4294967288
    %v131 = vlaneseq
    %v132 = vshrl.u32 %v131, 7
    %v133 = vsub.s32 %v130, %v132
    %v134 = vrot.slane %v109, %v133
    %vm135 = vcmask 130112
    %v136 = vsel %vm135, %v134, %v129
    %v137 = vadd.s32 %v125, 4294967280
    %v138 = vlaneseq
    %v139 = vshrl.u32 %v138, 7
    %v140 = vsub.s32 %v137, %v139
    %v141 = vrot.slane %v110, %v140
    %vm142 = vcmask 195712
    %v143 = vsel %vm142, %v141, %v136
    %v144 = vadd.s32 %v125, 4294967272
    %v145 = vlaneseq
    %v146 = vshrl.u32 %v145, 7
    %v147 = vsub.s32 %v144, %v146
    %v148 = vrot.slane %v111, %v147
    %vm149 = vcmask 261312
    %v150 = vsel %vm149, %v148, %v143
    %v151 = vlaneseq
    %v152 = vshrl.u32 %v151, 7
    %v153 = vsub.s32 %v125, %v152
    %v154 = vrot.slane %v112, %v153
    %v155 = vlaneseq
    %v156 = vshrl.u32 %v155, 7
    %v157 = vsub.s32 %v130, %v156
    %v158 = vrot.slane %v113, %v157
    %v159 = vsel %vm135, %v158, %v154
    %v160 = vlaneseq
    %v161 = vshrl.u32 %v160, 7
    %v162 = vsub.s32 %v137, %v161
    %v163 = vrot.slane %v114, %v162
    %v164 = vsel %vm142, %v163, %v159
    %v165 = vlaneseq
    %v166 = vshrl.u32 %v165, 7
    %v167 = vsub.s32 %v144, %v166
    %v168 = vrot.slane %v115, %v167
    %v169 = vsel %vm149, %v168, %v164
    %vm170 = vcmask 1041409
    %v171 = vsel %vm170, %v169, %v150
    %v181 = vlaneseq
    %v182 = vshrl.u32 %v181, 7
    %v183 = vsub.s32 %v125, %v182
    %v184 = vrot.slane %v86, %v183
    %v185 = vlaneseq
    %v186 = vshrl.u32 %v185, 7
    %v187 = vsub.s32 %v130, %v186
    %v188 = vrot.slane %v89, %v187
    %v189 = vsel %vm135, %v188, %v184
    %v190 = vlaneseq
    %v191 = vshrl.u32 %v190, 7
    %v192 = vsub.s32 %v137, %v191
    %v193 = vrot.slane %v92, %v192
    %v194 = vsel %vm142, %v193, %v189
    %v195 = vlaneseq
    %v196 = vshrl.u32 %v195, 7
    %v197 = vsub.s32 %v144, %v196
    %v198 = vrot.slane %v95, %v197
    %v199 = vsel %vm149, %v198, %v194
    %v200 = vlaneseq
    %v201 = vshrl.u32 %v200, 7
    %v202 = vsub.s32 %v125, %v201
    %v203 = vrot.slane %v98, %v202
    %v204 = vlaneseq
    %v205 = vshrl.u32 %v204, 7
    %v206 = vsub.s32 %v130, %v205
    %v207 = vrot.slane %v101, %v206
    %v208 = vsel %vm135, %v207, %v203
    %v209 = vlaneseq
    %v210 = vshrl.u32 %v209, 7
    %v211 = vsub.s32 %v137, %v210
    %v212 = vrot.slane %v104, %v211
    %v213 = vsel %vm142, %v212, %v208
    %v214 = vlaneseq
    %v215 = vshrl.u32 %v214, 7
    %v216 = vsub.s32 %v144, %v215
    %v217 = vrot.slane %v107, %v216
    %v218 = vsel %vm149, %v217, %v213
    %vm219 = vcmask 1043459
    %v220 = vsel %vm219, %v218, %v199
    %vm222 = vcmask 1041408
    %v223 = vsel %vm222, %v171, %v220
    %v224 = vld [vmem:[%s1] sm:$0xff]
    %v225 = vld [vmem:[%s1 + $0x8] sm:$0xff]
    %v226 = vld [vmem:[%s1 + $0x10] sm:$0xff]
    %v227 = vld [vmem:[%s1 + $0x18] sm:$0xff]
    %v228 = vld [vmem:[%s2] sm:$0x1]
    %v230 = vlaneseq
    %v231 = vshrl.u32 %v230, 7
    %v232 = vsub.s32 0, %v231
    %v233 = vrot.slane %v228, %v232
    %vm235 = vcmask 261120
    %v237 = vsel %vm235, %v223, 0
    %239 = vmatprep.subr.mxu0 0.0
    %240 = vmatpush1.msra.mxu0 %v224
    %241 = vmatprep.subr.mxu0 0.0
    %242 = vmatpush1.msra.mxu0 %v225
    %243 = vmatprep.subr.mxu0 0.0
    %244 = vmatpush1.msra.mxu0 %v226
    %245 = vmatprep.subr.mxu0 0.0
    %246 = vmatpush1.msra.mxu0 %v227
    %247 = vmatprep.subr.mxu0 0.0
    %248 = vmatpush1.msra.mxu0 0.0
    %249 = vmatprep.subr.mxu0 0.0
    %250 = vmatpush1.msra.mxu0 0.0
    %251 = vmatprep.subr.mxu0 0.0
    %252 = vmatpush1.msra.mxu0 0.0
    %253 = vmatprep.subr.mxu0 0.0
    %254 = vmatpush1.msra.mxu0 0.0
    %255 = vmatprep.subr.mxu0 0.0
    %256 = vmatpush1.msra.mxu0 0.0
    %257 = vmatprep.subr.mxu0 0.0
    %258 = vmatpush1.msra.mxu0 0.0
    %259 = vmatprep.subr.mxu0 0.0
    %260 = vmatpush1.msra.mxu0 0.0
    %261 = vmatprep.subr.mxu0 0.0
    %262 = vmatpush1.msra.mxu0 0.0
    %263 = vmatprep.subr.mxu0 0.0
    %264 = vmatpush1.msra.mxu0 0.0
    %265 = vmatprep.subr.mxu0 0.0
    %266 = vmatpush1.msra.mxu0 0.0
    %267 = vmatprep.subr.mxu0 0.0
    %268 = vmatpush1.msra.mxu0 0.0
    %269 = vmatprep.subr.mxu0 0.0
    %270 = vmatpush1.msra.mxu0 0.0
    %271 = vmatprep.subr.mxu0 0.0
    %272 = vmatpush1.msra.mxu0 0.0
    %273 = vmatprep.subr.mxu0 0.0
    %274 = vmatpush1.msra.mxu0 0.0
    %275 = vmatprep.subr.mxu0 0.0
    %276 = vmatpush1.msra.mxu0 0.0
    %277 = vmatprep.subr.mxu0 0.0
    %278 = vmatpush1.msra.mxu0 0.0
    %279 = vmatprep.subr.mxu0 0.0
    %280 = vmatpush1.msra.mxu0 0.0
    %281 = vmatprep.subr.mxu0 0.0
    %282 = vmatpush1.msra.mxu0 0.0
    %283 = vmatprep.subr.mxu0 0.0
    %284 = vmatpush1.msra.mxu0 0.0
    %285 = vmatprep.subr.mxu0 0.0
    %286 = vmatpush1.msra.mxu0 0.0
    %287 = vmatprep.subr.mxu0 0.0
    %288 = vmatpush1.msra.mxu0 0.0
    %289 = vmatprep.subr.mxu0 0.0
    %290 = vmatpush1.msra.mxu0 0.0
    %291 = vmatprep.subr.mxu0 0.0
    %292 = vmatpush1.msra.mxu0 0.0
    %293 = vmatprep.subr.mxu0 0.0
    %294 = vmatpush1.msra.mxu0 0.0
    %295 = vmatprep.subr.mxu0 0.0
    %296 = vmatpush1.msra.mxu0 0.0
    %297 = vmatprep.subr.mxu0 0.0
    %298 = vmatpush1.msra.mxu0 0.0
    %299 = vmatprep.subr.mxu0 0.0
    %300 = vmatpush1.msra.mxu0 0.0
    %301 = vmatprep.subr.mxu0 0.0
    %302 = vmatpush1.msra.mxu0 0.0
    %303 = vmatprep.mubr.f32.mxu0 0.0
    %304 = vmatmul.mubr.f32.gmra.mrb[0].mxu0 %v237
    %v305 = vpop.f32.mrb[0].mxu0
    %v306 = vadd.f32 %v233, %v305
    %v307 = vpop.f32.mrb[0].mxu0
    %308 = vdwg.mxu0
    %v309 = vmax.f32 %v306, 0.0
    %v310 = vld [vmem:[%s3] sm:$0x3]
    %v311 = vld [vmem:[%s4] sm:$0x1]
    %v313 = vlaneseq
    %v314 = vshrl.u32 %v313, 7
    %v315 = vsub.s32 0, %v314
    %v316 = vrot.slane %v311, %v315
    %vm318 = vcmask 15360
    %v320 = vsel %vm318, %v309, 0
    %v323 = vsel %vm222, %v310, 0
    %325 = vmatprep.subr.mxu0 0.0
    %326 = vmatpush1.msra.mxu0 %v323
    %327 = vmatprep.subr.mxu0 0.0
    %328 = vmatpush1.msra.mxu0 0.0
    %329 = vmatprep.subr.mxu0 0.0
    %330 = vmatpush1.msra.mxu0 0.0
    %331 = vmatprep.subr.mxu0 0.0
    %332 = vmatpush1.msra.mxu0 0.0
    %333 = vmatprep.subr.mxu0 0.0
    %334 = vmatpush1.msra.mxu0 0.0
    %335 = vmatprep.subr.mxu0 0.0
    %336 = vmatpush1.msra.mxu0 0.0
    %337 = vmatprep.subr.mxu0 0.0
    %338 = vmatpush1.msra.mxu0 0.0
    %339 = vmatprep.subr.mxu0 0.0
    %340 = vmatpush1.msra.mxu0 0.0
    %341 = vmatprep.subr.mxu0 0.0
    %342 = vmatpush1.msra.mxu0 0.0
    %343 = vmatprep.subr.mxu0 0.0
    %344 = vmatpush1.msra.mxu0 0.0
    %345 = vmatprep.subr.mxu0 0.0
    %346 = vmatpush1.msra.mxu0 0.0
    %347 = vmatprep.subr.mxu0 0.0
    %348 = vmatpush1.msra.mxu0 0.0
    %349 = vmatprep.subr.mxu0 0.0
    %350 = vmatpush1.msra.mxu0 0.0
    %351 = vmatprep.subr.mxu0 0.0
    %352 = vmatpush1.msra.mxu0 0.0
    %353 = vmatprep.subr.mxu0 0.0
    %354 = vmatpush1.msra.mxu0 0.0
    %355 = vmatprep.subr.mxu0 0.0
    %356 = vmatpush1.msra.mxu0 0.0
    %357 = vmatprep.subr.mxu0 0.0
    %358 = vmatpush1.msra.mxu0 0.0
    %359 = vmatprep.subr.mxu0 0.0
    %360 = vmatpush1.msra.mxu0 0.0
    %361 = vmatprep.subr.mxu0 0.0
    %362 = vmatpush1.msra.mxu0 0.0
    %363 = vmatprep.subr.mxu0 0.0
    %364 = vmatpush1.msra.mxu0 0.0
    %365 = vmatprep.subr.mxu0 0.0
    %366 = vmatpush1.msra.mxu0 0.0
    %367 = vmatprep.subr.mxu0 0.0
    %368 = vmatpush1.msra.mxu0 0.0
    %369 = vmatprep.subr.mxu0 0.0
    %370 = vmatpush1.msra.mxu0 0.0
    %371 = vmatprep.subr.mxu0 0.0
    %372 = vmatpush1.msra.mxu0 0.0
    %373 = vmatprep.subr.mxu0 0.0
    %374 = vmatpush1.msra.mxu0 0.0
    %375 = vmatprep.subr.mxu0 0.0
    %376 = vmatpush1.msra.mxu0 0.0
    %377 = vmatprep.subr.mxu0 0.0
    %378 = vmatpush1.msra.mxu0 0.0
    %379 = vmatprep.subr.mxu0 0.0
    %380 = vmatpush1.msra.mxu0 0.0
    %381 = vmatprep.subr.mxu0 0.0
    %382 = vmatpush1.msra.mxu0 0.0
    %383 = vmatprep.subr.mxu0 0.0
    %384 = vmatpush1.msra.mxu0 0.0
    %385 = vmatprep.subr.mxu0 0.0
    %386 = vmatpush1.msra.mxu0 0.0
    %387 = vmatprep.subr.mxu0 0.0
    %388 = vmatpush1.msra.mxu0 0.0
    %389 = vmatprep.mubr.f32.mxu0 0.0
    %390 = vmatmul.mubr.f32.gmra.mrb[0].mxu0 %v320
    %v391 = vpop.f32.mrb[0].mxu0
    %v392 = vadd.f32 %v316, %v391
    %v393 = vpop.f32.mrb[0].mxu0
    %394 = vdwg.mxu0
    %v396 = vrot.slane %v392, 2
    %v398 = vadd.f32 %v392, %v396
    %v399 = vxor.u32 %v398, 2147483648
    %v400 = vmul.f32 %v399, 1.442695
    %v401 = vpow.pop %v400
    %v402 = vadd.f32 %v401, 1.0
    %v403 = vrcp.pop %v402
    %v404 = vmul.f32 1.0, %v403
    %vm405 = vcmask 254976
    %406 = vst.msk [vmem:[%s8] sm:$0x3] %vm405, %v404
    %v407 = vld [vmem:[%s0] sm:$0xff]
    %v408 = vld [vmem:[%s0 + $0x8] sm:$0xff]
    %v409 = vld [vmem:[%s0 + $0x10] sm:$0xff]
    %v410 = vld [vmem:[%s0 + $0x18] sm:$0xff]
    %v411 = vld [vmem:[%s0 + $0x20] sm:$0xff]
    %v412 = vld [vmem:[%s0 + $0x28] sm:$0xff]
    %v413 = vld [vmem:[%s0 + $0x30] sm:$0xff]
    %v414 = vld [vmem:[%s0 + $0x38] sm:$0xff]
    %v415 = vld [vmem:[%s0 + $0x40] sm:$0xff]
    %v416 = vld [vmem:[%s0 + $0x48] sm:$0xff]
    %v417 = vld [vmem:[%s0 + $0x50] sm:$0xff]
    %v418 = vld [vmem:[%s0 + $0x58] sm:$0xff]
    %v419 = vld [vmem:[%s0 + $0x60] sm:$0xff]
    %v420 = vld [vmem:[%s0 + $0x68] sm:$0xff]
    %v421 = vld [vmem:[%s0 + $0x70] sm:$0xff]
    %v422 = vld [vmem:[%s0 + $0x78] sm:$0xff]
    %v423 = vlaneseq
    %v424 = vshrl.u32 %v423, 7
    %v425 = vsub.s32 0, %v424
    %v426 = vrot.slane %v404, %v425
    %428 = vbcast.lane.b32.xlu0 %v426, 256
    %v429 = vpop.permute.xlu0 %428
    %s431 = sor.u32 256, 8
    %432 = vbcast.lane.b32.xlu0 %v426, %s431
    %v433 = vpop.permute.xlu0 %432
    %s435 = sor.u32 256, 16
    %436 = vbcast.lane.b32.xlu0 %v426, %s435
    %v437 = vpop.permute.xlu0 %436
    %s439 = sor.u32 256, 24
    %440 = vbcast.lane.b32.xlu0 %v426, %s439
    %v441 = vpop.permute.xlu0 %440
    %v442 = vlaneseq
    %v443 = vshrl.u32 %v442, 7
    %v444 = vsub.s32 1, %v443
    %v445 = vrot.slane %v404, %v444
    %447 = vbcast.lane.b32.xlu0 %v445, 256
    %v448 = vpop.permute.xlu0 %447
    %s450 = sor.u32 256, 8
    %451 = vbcast.lane.b32.xlu0 %v445, %s450
    %v452 = vpop.permute.xlu0 %451
    %s454 = sor.u32 256, 16
    %455 = vbcast.lane.b32.xlu0 %v445, %s454
    %v456 = vpop.permute.xlu0 %455
    %s458 = sor.u32 256, 24
    %459 = vbcast.lane.b32.xlu0 %v445, %s458
    %v460 = vpop.permute.xlu0 %459
    %v461 = vmul.f32 %v407, %v429
    %v462 = vmul.f32 %v408, %v429
    %v463 = vmul.f32 %v409, %v433
    %v464 = vmul.f32 %v410, %v433
    %v465 = vmul.f32 %v411, %v437
    %v466 = vmul.f32 %v412, %v437
    %v467 = vmul.f32 %v413, %v441
    %v468 = vmul.f32 %v414, %v441
    %v469 = vmul.f32 %v415, %v448
    %v470 = vmul.f32 %v416, %v448
    %v471 = vmul.f32 %v417, %v452
    %v472 = vmul.f32 %v418, %v452
    %v473 = vmul.f32 %v419, %v456
    %v474 = vmul.f32 %v420, %v456
    %v475 = vmul.f32 %v421, %v460
    %v476 = vmul.f32 %v422, %v460
    %v477 = vadd.f32 %v461, %v463
    %v478 = vadd.f32 %v477, %v465
    %v479 = vadd.f32 %v478, %v467
    %v480 = vrot.slane %v479, 4
    %v481 = vadd.f32 %v479, %v480
    %v482 = vrot.slane %v481, 2
    %v483 = vadd.f32 %v481, %v482
    %v484 = vrot.slane %v483, 1
    %v485 = vadd.f32 %v483, %v484
    %v486 = vadd.f32 %v462, %v464
    %v487 = vadd.f32 %v486, %v466
    %v488 = vadd.f32 %v487, %v468
    %v489 = vrot.slane %v488, 4
    %v490 = vadd.f32 %v488, %v489
    %v491 = vrot.slane %v490, 2
    %v492 = vadd.f32 %v490, %v491
    %v493 = vrot.slane %v492, 1
    %v494 = vadd.f32 %v492, %v493
    %v495 = vadd.f32 %v469, %v471
    %v496 = vadd.f32 %v495, %v473
    %v497 = vadd.f32 %v496, %v475
    %v498 = vrot.slane %v497, 4
    %v499 = vadd.f32 %v497, %v498
    %v500 = vrot.slane %v499, 2
    %v501 = vadd.f32 %v499, %v500
    %v502 = vrot.slane %v501, 1
    %v503 = vadd.f32 %v501, %v502
    %v504 = vadd.f32 %v470, %v472
    %v505 = vadd.f32 %v504, %v474
    %v506 = vadd.f32 %v505, %v476
    %v507 = vrot.slane %v506, 4
    %v508 = vadd.f32 %v506, %v507
    %v509 = vrot.slane %v508, 2
    %v510 = vadd.f32 %v508, %v509
    %v511 = vrot.slane %v510, 1
    %v512 = vadd.f32 %v510, %v511
    %v513 = vadd.f32 %v485, 0.0
    %v514 = vadd.f32 %v494, 0.0
    %v515 = vadd.f32 %v503, 0.0
    %v516 = vadd.f32 %v512, 0.0
    %v517 = vmax.f32 %v461, %v463
    %v518 = vmax.f32 %v517, %v465
    %v519 = vmax.f32 %v518, %v467
    %v520 = vrot.slane %v519, 4
    %v521 = vmax.f32 %v519, %v520
    %v522 = vrot.slane %v521, 2
    %v523 = vmax.f32 %v521, %v522
    %v524 = vrot.slane %v523, 1
    %v525 = vmax.f32 %v523, %v524
    %v526 = vmax.f32 %v462, %v464
    %v527 = vmax.f32 %v526, %v466
    %v528 = vmax.f32 %v527, %v468
    %v529 = vrot.slane %v528, 4
    %v530 = vmax.f32 %v528, %v529
    %v531 = vrot.slane %v530, 2
    %v532 = vmax.f32 %v530, %v531
    %v533 = vrot.slane %v532, 1
    %v534 = vmax.f32 %v532, %v533
    %v535 = vmax.f32 %v469, %v471
    %v536 = vmax.f32 %v535, %v473
    %v537 = vmax.f32 %v536, %v475
    %v538 = vrot.slane %v537, 4
    %v539 = vmax.f32 %v537, %v538
    %v540 = vrot.slane %v539, 2
    %v541 = vmax.f32 %v539, %v540
    %v542 = vrot.slane %v541, 1
    %v543 = vmax.f32 %v541, %v542
    %v544 = vmax.f32 %v470, %v472
    %v545 = vmax.f32 %v544, %v474
    %v546 = vmax.f32 %v545, %v476
    %v547 = vrot.slane %v546, 4
    %v548 = vmax.f32 %v546, %v547
    %v549 = vrot.slane %v548, 2
    %v550 = vmax.f32 %v548, %v549
    %v551 = vrot.slane %v550, 1
    %v552 = vmax.f32 %v550, %v551
    %v553 = vmul.f32 %v513, 0.03125
    %v554 = vmul.f32 %v514, 0.03125
    %v555 = vmul.f32 %v515, 0.03125
    %v556 = vmul.f32 %v516, 0.03125
    %v561 = vsel %vm170, %v543, %v525
    %v562 = vsel %vm170, %v552, %v534
    %v569 = vsel %vm219, %v555, %v553
    %v570 = vsel %vm219, %v556, %v554
    %v573 = vsel %vm222, %v561, %v569
    %v574 = vsel %vm222, %v562, %v570
    %v575 = vld [vmem:[%s6] sm:$0x7f]
    %v576 = vld [vmem:[%s6 + $0x8] sm:$0x7f]
    %v577 = vld [vmem:[%s7] sm:$0x7f]
    %v578 = vld [vmem:[%s7 + $0x8] sm:$0x7f]
    %579 = vrot.lane.b32.xlu0 %v573, 51
    %v580 = vpop.permute.xlu0 %579
    %581 = vrot.lane.b32.xlu0 %v574, 51
    %v582 = vpop.permute.xlu0 %581
    %vm583 = vcmp.lt.s32.totalorder %v125, 51
    %v584 = vsel %vm583, %v580, %v582
    %v585 = vsel %vm583, %v582, %v580
    %s586 = sld [smem:[#allocation2]]
    %v587 = vstv %s586
    %v588 = vmul.f32 %v585, %v587
    %v589 = vmul.f32 %v584, %v587
    %s590 = sld [smem:[#allocation2 + $0x80]]
    %v591 = vstv %s590
    %v592 = vmul.f32 %v585, %v591
    %v593 = vmul.f32 %v584, %v591
    %v596 = vrot.slane %v592, 2
    %v597 = vrot.slane %v593, 2
    %v600 = vadd.f32 %v588, %v596
    %v601 = vadd.f32 %v589, %v597
    %v602 = vlaneseq
    %v603 = vshrl.u32 %v602, 7
    %v604 = vsub.s32 0, %v603
    %v605 = vrot.slane %v577, %v604
    %v606 = vlaneseq
    %v607 = vshrl.u32 %v606, 7
    %v608 = vsub.s32 0, %v607
    %v609 = vrot.slane %v578, %v608
    %v610 = vmul.f32 %v600, %v605
    %v611 = vmul.f32 %v601, %v609
    %v612 = vadd.f32 %v610, 0.0
    %v613 = vadd.f32 %v611, 0.0
    %614 = vrot.lane.b32.xlu0 %v573, 50
    %v615 = vpop.permute.xlu0 %614
    %616 = vrot.lane.b32.xlu0 %v574, 50
    %v617 = vpop.permute.xlu0 %616
    %vm618 = vcmp.lt.s32.totalorder %v125, 50
    %v619 = vsel %vm618, %v615, %v617
    %v620 = vsel %vm618, %v617, %v615
    %s621 = sld [smem:[#allocation2 + $0x1]]
    %v622 = vstv %s621
    %v623 = vmul.f32 %v620, %v622
    %v624 = vmul.f32 %v619, %v622
    %s625 = sld [smem:[#allocation2 + $0x81]]
    %v626 = vstv %s625
    %v627 = vmul.f32 %v620, %v626
    %v628 = vmul.f32 %v619, %v626
    %v631 = vrot.slane %v627, 2
    %v632 = vrot.slane %v628, 2
    %v635 = vadd.f32 %v623, %v631
    %v636 = vadd.f32 %v624, %v632
    %v637 = vlaneseq
    %v638 = vshrl.u32 %v637, 7
    %v639 = vsub.s32 1, %v638
    %v640 = vrot.slane %v577, %v639
    %v641 = vlaneseq
    %v642 = vshrl.u32 %v641, 7
    %v643 = vsub.s32 1, %v642
    %v644 = vrot.slane %v578, %v643
    %v645 = vmul.f32 %v635, %v640
    %v646 = vmul.f32 %v636, %v644
    %v647 = vadd.f32 %v612, %v645
    %v648 = vadd.f32 %v613, %v646
    %649 = vrot.lane.b32.xlu0 %v573, 49
    %v650 = vpop.permute.xlu0 %649
    %651 = vrot.lane.b32.xlu0 %v574, 49
    %v652 = vpop.permute.xlu0 %651
    %vm653 = vcmp.lt.s32.totalorder %v125, 49
    %v654 = vsel %vm653, %v650, %v652
    %v655 = vsel %vm653, %v652, %v650
    %s656 = sld [smem:[#allocation2 + $0x2]]
    %v657 = vstv %s656
    %v658 = vmul.f32 %v655, %v657
    %v659 = vmul.f32 %v654, %v657
    %s660 = sld [smem:[#allocation2 + $0x82]]
    %v661 = vstv %s660
    %v662 = vmul.f32 %v655, %v661
    %v663 = vmul.f32 %v654, %v661
    %v666 = vrot.slane %v662, 2
    %v667 = vrot.slane %v663, 2
    %v670 = vadd.f32 %v658, %v666
    %v671 = vadd.f32 %v659, %v667
    %v672 = vlaneseq
    %v673 = vshrl.u32 %v672, 7
    %v674 = vsub.s32 2, %v673
    %v675 = vrot.slane %v577, %v674
    %v676 = vlaneseq
    %v677 = vshrl.u32 %v676, 7
    %v678 = vsub.s32 2, %v677
    %v679 = vrot.slane %v578, %v678
    %v680 = vmul.f32 %v670, %v675
    %v681 = vmul.f32 %v671, %v679
    %v682 = vadd.f32 %v647, %v680
    %v683 = vadd.f32 %v648, %v681
    %684 = vrot.lane.b32.xlu0 %v573, 48
    %v685 = vpop.permute.xlu0 %684
    %686 = vrot.lane.b32.xlu0 %v574, 48
    %v687 = vpop.permute.xlu0 %686
    %vm688 = vcmp.lt.s32.totalorder %v125, 48
    %v689 = vsel %vm688, %v685, %v687
    %v690 = vsel %vm688, %v687, %v685
    %s691 = sld [smem:[#allocation2 + $0x3]]
    %v692 = vstv %s691
    %v693 = vmul.f32 %v690, %v692
    %v694 = vmul.f32 %v689, %v692
    %s695 = sld [smem:[#allocation2 + $0x83]]
    %v696 = vstv %s695
    %v697 = vmul.f32 %v690, %v696
    %v698 = vmul.f32 %v689, %v696
    %v701 = vrot.slane %v697, 2
    %v702 = vrot.slane %v698, 2
    %v705 = vadd.f32 %v693, %v701
    %v706 = vadd.f32 %v694, %v702
    %v707 = vlaneseq
    %v708 = vshrl.u32 %v707, 7
    %v709 = vsub.s32 3, %v708
    %v710 = vrot.slane %v577, %v709
    %v711 = vlaneseq
    %v712 = vshrl.u32 %v711, 7
    %v713 = vsub.s32 3, %v712
    %v714 = vrot.slane %v578, %v713
    %v715 = vmul.f32 %v705, %v710
    %v716 = vmul.f32 %v706, %v714
    %v717 = vadd.f32 %v682, %v715
    %v718 = vadd.f32 %v683, %v716
    %719 = vrot.lane.b32.xlu0 %v573, 47
    %v720 = vpop.permute.xlu0 %719
    %721 = vrot.lane.b32.xlu0 %v574, 47
    %v722 = vpop.permute.xlu0 %721
    %vm723 = vcmp.lt.s32.totalorder %v125, 47
    %v724 = vsel %vm723, %v720, %v722
    %v725 = vsel %vm723, %v722, %v720
    %s726 = sld [smem:[#allocation2 + $0x4]]
    %v727 = vstv %s726
    %v728 = vmul.f32 %v725, %v727
    %v729 = vmul.f32 %v724, %v727
    %s730 = sld [smem:[#allocation2 + $0x84]]
    %v731 = vstv %s730
    %v732 = vmul.f32 %v725, %v731
    %v733 = vmul.f32 %v724, %v731
    %v736 = vrot.slane %v732, 2
    %v737 = vrot.slane %v733, 2
    %v740 = vadd.f32 %v728, %v736
    %v741 = vadd.f32 %v729, %v737
    %v742 = vlaneseq
    %v743 = vshrl.u32 %v742, 7
    %v744 = vsub.s32 4, %v743
    %v745 = vrot.slane %v577, %v744
    %v746 = vlaneseq
    %v747 = vshrl.u32 %v746, 7
    %v748 = vsub.s32 4, %v747
    %v749 = vrot.slane %v578, %v748
    %v750 = vmul.f32 %v740, %v745
    %v751 = vmul.f32 %v741, %v749
    %v752 = vadd.f32 %v717, %v750
    %v753 = vadd.f32 %v718, %v751
    %754 = vrot.lane.b32.xlu0 %v573, 46
    %v755 = vpop.permute.xlu0 %754
    %756 = vrot.lane.b32.xlu0 %v574, 46
    %v757 = vpop.permute.xlu0 %756
    %vm758 = vcmp.lt.s32.totalorder %v125, 46
    %v759 = vsel %vm758, %v755, %v757
    %v760 = vsel %vm758, %v757, %v755
    %s761 = sld [smem:[#allocation2 + $0x5]]
    %v762 = vstv %s761
    %v763 = vmul.f32 %v760, %v762
    %v764 = vmul.f32 %v759, %v762
    %s765 = sld [smem:[#allocation2 + $0x85]]
    %v766 = vstv %s765
    %v767 = vmul.f32 %v760, %v766
    %v768 = vmul.f32 %v759, %v766
    %v771 = vrot.slane %v767, 2
    %v772 = vrot.slane %v768, 2
    %v775 = vadd.f32 %v763, %v771
    %v776 = vadd.f32 %v764, %v772
    %v777 = vlaneseq
    %v778 = vshrl.u32 %v777, 7
    %v779 = vsub.s32 5, %v778
    %v780 = vrot.slane %v577, %v779
    %v781 = vlaneseq
    %v782 = vshrl.u32 %v781, 7
    %v783 = vsub.s32 5, %v782
    %v784 = vrot.slane %v578, %v783
    %v785 = vmul.f32 %v775, %v780
    %v786 = vmul.f32 %v776, %v784
    %v787 = vadd.f32 %v752, %v785
    %v788 = vadd.f32 %v753, %v786
    %789 = vrot.lane.b32.xlu0 %v573, 45
    %v790 = vpop.permute.xlu0 %789
    %791 = vrot.lane.b32.xlu0 %v574, 45
    %v792 = vpop.permute.xlu0 %791
    %vm793 = vcmp.lt.s32.totalorder %v125, 45
    %v794 = vsel %vm793, %v790, %v792
    %v795 = vsel %vm793, %v792, %v790
    %s796 = sld [smem:[#allocation2 + $0x6]]
    %v797 = vstv %s796
    %v798 = vmul.f32 %v795, %v797
    %v799 = vmul.f32 %v794, %v797
    %s800 = sld [smem:[#allocation2 + $0x86]]
    %v801 = vstv %s800
    %v802 = vmul.f32 %v795, %v801
    %v803 = vmul.f32 %v794, %v801
    %v806 = vrot.slane %v802, 2
    %v807 = vrot.slane %v803, 2
    %v810 = vadd.f32 %v798, %v806
    %v811 = vadd.f32 %v799, %v807
    %v812 = vlaneseq
    %v813 = vshrl.u32 %v812, 7
    %v814 = vsub.s32 6, %v813
    %v815 = vrot.slane %v577, %v814
    %v816 = vlaneseq
    %v817 = vshrl.u32 %v816, 7
    %v818 = vsub.s32 6, %v817
    %v819 = vrot.slane %v578, %v818
    %v820 = vmul.f32 %v810, %v815
    %v821 = vmul.f32 %v811, %v819
    %v822 = vadd.f32 %v787, %v820
    %v823 = vadd.f32 %v788, %v821
    %v824 = vlaneseq
    %v825 = vshrl.u32 %v824, 7
    %v826 = vsub.s32 0, %v825
    %v827 = vrot.slane %v575, %v826
    %v828 = vlaneseq
    %v829 = vshrl.u32 %v828, 7
    %v830 = vsub.s32 0, %v829
    %v831 = vrot.slane %v576, %v830
    %v832 = vmul.f32 %v822, %v827
    %v833 = vmul.f32 %v823, %v831
    %v834 = vadd.f32 %v832, 0.0
    %v835 = vadd.f32 %v833, 0.0
    %836 = vrot.lane.b32.xlu0 %v573, 35
    %v837 = vpop.permute.xlu0 %836
    %838 = vrot.lane.b32.xlu0 %v574, 35
    %v839 = vpop.permute.xlu0 %838
    %vm840 = vcmp.lt.s32.totalorder %v125, 35
    %v841 = vsel %vm840, %v837, %v839
    %v842 = vsel %vm840, %v839, %v837
    %s843 = sld [smem:[#allocation2 + $0x7]]
    %v844 = vstv %s843
    %v845 = vmul.f32 %v842, %v844
    %v846 = vmul.f32 %v841, %v844
    %s847 = sld [smem:[#allocation2 + $0x87]]
    %v848 = vstv %s847
    %v849 = vmul.f32 %v842, %v848
    %v850 = vmul.f32 %v841, %v848
    %v853 = vrot.slane %v849, 2
    %v854 = vrot.slane %v850, 2
    %v857 = vadd.f32 %v845, %v853
    %v858 = vadd.f32 %v846, %v854
    %v859 = vmul.f32 %v857, %v605
    %v860 = vmul.f32 %v858, %v609
    %v861 = vadd.f32 %v859, 0.0
    %v862 = vadd.f32 %v860, 0.0
    %863 = vrot.lane.b32.xlu0 %v573, 34
    %v864 = vpop.permute.xlu0 %863
    %865 = vrot.lane.b32.xlu0 %v574, 34
    %v866 = vpop.permute.xlu0 %865
    %vm867 = vcmp.lt.s32.totalorder %v125, 34
    %v868 = vsel %vm867, %v864, %v866
    %v869 = vsel %vm867, %v866, %v864
    %s870 = sld [smem:[#allocation2 + $0x8]]
    %v871 = vstv %s870
    %v872 = vmul.f32 %v869, %v871
    %v873 = vmul.f32 %v868, %v871
    %s874 = sld [smem:[#allocation2 + $0x88]]
    %v875 = vstv %s874
    %v876 = vmul.f32 %v869, %v875
    %v877 = vmul.f32 %v868, %v875
    %v880 = vrot.slane %v876, 2
    %v881 = vrot.slane %v877, 2
    %v884 = vadd.f32 %v872, %v880
    %v885 = vadd.f32 %v873, %v881
    %v886 = vmul.f32 %v884, %v640
    %v887 = vmul.f32 %v885, %v644
    %v888 = vadd.f32 %v861, %v886
    %v889 = vadd.f32 %v862, %v887
    %890 = vrot.lane.b32.xlu0 %v573, 33
    %v891 = vpop.permute.xlu0 %890
    %892 = vrot.lane.b32.xlu0 %v574, 33
    %v893 = vpop.permute.xlu0 %892
    %vm894 = vcmp.lt.s32.totalorder %v125, 33
    %v895 = vsel %vm894, %v891, %v893
    %v896 = vsel %vm894, %v893, %v891
    %s897 = sld [smem:[#allocation2 + $0x9]]
    %v898 = vstv %s897
    %v899 = vmul.f32 %v896, %v898
    %v900 = vmul.f32 %v895, %v898
    %s901 = sld [smem:[#allocation2 + $0x89]]
    %v902 = vstv %s901
    %v903 = vmul.f32 %v896, %v902
    %v904 = vmul.f32 %v895, %v902
    %v907 = vrot.slane %v903, 2
    %v908 = vrot.slane %v904, 2
    %v911 = vadd.f32 %v899, %v907
    %v912 = vadd.f32 %v900, %v908
    %v913 = vmul.f32 %v911, %v675
    %v914 = vmul.f32 %v912, %v679
    %v915 = vadd.f32 %v888, %v913
    %v916 = vadd.f32 %v889, %v914
    %917 = vrot.lane.b32.xlu0 %v573, 32
    %v918 = vpop.permute.xlu0 %917
    %919 = vrot.lane.b32.xlu0 %v574, 32
    %v920 = vpop.permute.xlu0 %919
    %vm921 = vcmp.lt.s32.totalorder %v125, 32
    %v922 = vsel %vm921, %v918, %v920
    %v923 = vsel %vm921, %v920, %v918
    %s924 = sld [smem:[#allocation2 + $0xa]]
    %v925 = vstv %s924
    %v926 = vmul.f32 %v923, %v925
    %v927 = vmul.f32 %v922, %v925
    %s928 = sld [smem:[#allocation2 + $0x8a]]
    %v929 = vstv %s928
    %v930 = vmul.f32 %v923, %v929
    %v931 = vmul.f32 %v922, %v929
    %v934 = vrot.slane %v930, 2
    %v935 = vrot.slane %v931, 2
    %v938 = vadd.f32 %v926, %v934
    %v939 = vadd.f32 %v927, %v935
    %v940 = vmul.f32 %v938, %v710
    %v941 = vmul.f32 %v939, %v714
    %v942 = vadd.f32 %v915, %v940
    %v943 = vadd.f32 %v916, %v941
    %944 = vrot.lane.b32.xlu0 %v573, 31
    %v945 = vpop.permute.xlu0 %944
    %946 = vrot.lane.b32.xlu0 %v574, 31
    %v947 = vpop.permute.xlu0 %946
    %vm948 = vcmp.lt.s32.totalorder %v125, 31
    %v949 = vsel %vm948, %v945, %v947
    %v950 = vsel %vm948, %v947, %v945
    %s951 = sld [smem:[#allocation2 + $0xb]]
    %v952 = vstv %s951
    %v953 = vmul.f32 %v950, %v952
    %v954 = vmul.f32 %v949, %v952
    %s955 = sld [smem:[#allocation2 + $0x8b]]
    %v956 = vstv %s955
    %v957 = vmul.f32 %v950, %v956
    %v958 = vmul.f32 %v949, %v956
    %v961 = vrot.slane %v957, 2
    %v962 = vrot.slane %v958, 2
    %v965 = vadd.f32 %v953, %v961
    %v966 = vadd.f32 %v954, %v962
    %v967 = vmul.f32 %v965, %v745
    %v968 = vmul.f32 %v966, %v749
    %v969 = vadd.f32 %v942, %v967
    %v970 = vadd.f32 %v943, %v968
    %971 = vrot.lane.b32.xlu0 %v573, 30
    %v972 = vpop.permute.xlu0 %971
    %973 = vrot.lane.b32.xlu0 %v574, 30
    %v974 = vpop.permute.xlu0 %973
    %vm975 = vcmp.lt.s32.totalorder %v125, 30
    %v976 = vsel %vm975, %v972, %v974
    %v977 = vsel %vm975, %v974, %v972
    %s978 = sld [smem:[#allocation2 + $0xc]]
    %v979 = vstv %s978
    %v980 = vmul.f32 %v977, %v979
    %v981 = vmul.f32 %v976, %v979
    %s982 = sld [smem:[#allocation2 + $0x8c]]
    %v983 = vstv %s982
    %v984 = vmul.f32 %v977, %v983
    %v985 = vmul.f32 %v976, %v983
    %v988 = vrot.slane %v984, 2
    %v989 = vrot.slane %v985, 2
    %v992 = vadd.f32 %v980, %v988
    %v993 = vadd.f32 %v981, %v989
    %v994 = vmul.f32 %v992, %v780
    %v995 = vmul.f32 %v993, %v784
    %v996 = vadd.f32 %v969, %v994
    %v997 = vadd.f32 %v970, %v995
    %998 = vrot.lane.b32.xlu0 %v573, 29
    %v999 = vpop.permute.xlu0 %998
    %1000 = vrot.lane.b32.xlu0 %v574, 29
    %v1001 = vpop.permute.xlu0 %1000
    %vm1002 = vcmp.lt.s32.totalorder %v125, 29
    %v1003 = vsel %vm1002, %v999, %v1001
    %v1004 = vsel %vm1002, %v1001, %v999
    %s1005 = sld [smem:[#allocation2 + $0xd]]
    %v1006 = vstv %s1005
    %v1007 = vmul.f32 %v1004, %v1006
    %v1008 = vmul.f32 %v1003, %v1006
    %s1009 = sld [smem:[#allocation2 + $0x8d]]
    %v1010 = vstv %s1009
    %v1011 = vmul.f32 %v1004, %v1010
    %v1012 = vmul.f32 %v1003, %v1010
    %v1015 = vrot.slane %v1011, 2
    %v1016 = vrot.slane %v1012, 2
    %v1019 = vadd.f32 %v1007, %v1015
    %v1020 = vadd.f32 %v1008, %v1016
    %v1021 = vmul.f32 %v1019, %v815
    %v1022 = vmul.f32 %v1020, %v819
    %v1023 = vadd.f32 %v996, %v1021
    %v1024 = vadd.f32 %v997, %v1022
    %v1025 = vlaneseq
    %v1026 = vshrl.u32 %v1025, 7
    %v1027 = vsub.s32 1, %v1026
    %v1028 = vrot.slane %v575, %v1027
    %v1029 = vlaneseq
    %v1030 = vshrl.u32 %v1029, 7
    %v1031 = vsub.s32 1, %v1030
    %v1032 = vrot.slane %v576, %v1031
    %v1033 = vmul.f32 %v1023, %v1028
    %v1034 = vmul.f32 %v1024, %v1032
    %v1035 = vadd.f32 %v834, %v1033
    %v1036 = vadd.f32 %v835, %v1034
    %1037 = vrot.lane.b32.xlu0 %v573, 19
    %v1038 = vpop.permute.xlu0 %1037
    %1039 = vrot.lane.b32.xlu0 %v574, 19
    %v1040 = vpop.permute.xlu0 %1039
    %vm1041 = vcmp.lt.s32.totalorder %v125, 19
    %v1042 = vsel %vm1041, %v1038, %v1040
    %v1043 = vsel %vm1041, %v1040, %v1038
    %s1044 = sld [smem:[#allocation2 + $0xe]]
    %v1045 = vstv %s1044
    %v1046 = vmul.f32 %v1043, %v1045
    %v1047 = vmul.f32 %v1042, %v1045
    %s1048 = sld [smem:[#allocation2 + $0x8e]]
    %v1049 = vstv %s1048
    %v1050 = vmul.f32 %v1043, %v1049
    %v1051 = vmul.f32 %v1042, %v1049
    %v1054 = vrot.slane %v1050, 2
    %v1055 = vrot.slane %v1051, 2
    %v1058 = vadd.f32 %v1046, %v1054
    %v1059 = vadd.f32 %v1047, %v1055
    %v1060 = vmul.f32 %v1058, %v605
    %v1061 = vmul.f32 %v1059, %v609
    %v1062 = vadd.f32 %v1060, 0.0
    %v1063 = vadd.f32 %v1061, 0.0
    %1064 = vrot.lane.b32.xlu0 %v573, 18
    %v1065 = vpop.permute.xlu0 %1064
    %1066 = vrot.lane.b32.xlu0 %v574, 18
    %v1067 = vpop.permute.xlu0 %1066
    %vm1068 = vcmp.lt.s32.totalorder %v125, 18
    %v1069 = vsel %vm1068, %v1065, %v1067
    %v1070 = vsel %vm1068, %v1067, %v1065
    %s1071 = sld [smem:[#allocation2 + $0xf]]
    %v1072 = vstv %s1071
    %v1073 = vmul.f32 %v1070, %v1072
    %v1074 = vmul.f32 %v1069, %v1072
    %s1075 = sld [smem:[#allocation2 + $0x8f]]
    %v1076 = vstv %s1075
    %v1077 = vmul.f32 %v1070, %v1076
    %v1078 = vmul.f32 %v1069, %v1076
    %v1081 = vrot.slane %v1077, 2
    %v1082 = vrot.slane %v1078, 2
    %v1085 = vadd.f32 %v1073, %v1081
    %v1086 = vadd.f32 %v1074, %v1082
    %v1087 = vmul.f32 %v1085, %v640
    %v1088 = vmul.f32 %v1086, %v644
    %v1089 = vadd.f32 %v1062, %v1087
    %v1090 = vadd.f32 %v1063, %v1088
    %1091 = vrot.lane.b32.xlu0 %v573, 17
    %v1092 = vpop.permute.xlu0 %1091
    %1093 = vrot.lane.b32.xlu0 %v574, 17
    %v1094 = vpop.permute.xlu0 %1093
    %vm1095 = vcmp.lt.s32.totalorder %v125, 17
    %v1096 = vsel %vm1095, %v1092, %v1094
    %v1097 = vsel %vm1095, %v1094, %v1092
    %s1098 = sld [smem:[#allocation2 + $0x10]]
    %v1099 = vstv %s1098
    %v1100 = vmul.f32 %v1097, %v1099
    %v1101 = vmul.f32 %v1096, %v1099
    %s1102 = sld [smem:[#allocation2 + $0x90]]
    %v1103 = vstv %s1102
    %v1104 = vmul.f32 %v1097, %v1103
    %v1105 = vmul.f32 %v1096, %v1103
    %v1108 = vrot.slane %v1104, 2
    %v1109 = vrot.slane %v1105, 2
    %v1112 = vadd.f32 %v1100, %v1108
    %v1113 = vadd.f32 %v1101, %v1109
    %v1114 = vmul.f32 %v1112, %v675
    %v1115 = vmul.f32 %v1113, %v679
    %v1116 = vadd.f32 %v1089, %v1114
    %v1117 = vadd.f32 %v1090, %v1115
    %1118 = vrot.lane.b32.xlu0 %v573, 16
    %v1119 = vpop.permute.xlu0 %1118
    %1120 = vrot.lane.b32.xlu0 %v574, 16
    %v1121 = vpop.permute.xlu0 %1120
    %vm1122 = vcmp.lt.s32.totalorder %v125, 16
    %v1123 = vsel %vm1122, %v1119, %v1121
    %v1124 = vsel %vm1122, %v1121, %v1119
    %s1125 = sld [smem:[#allocation2 + $0x11]]
    %v1126 = vstv %s1125
    %v1127 = vmul.f32 %v1124, %v1126
    %v1128 = vmul.f32 %v1123, %v1126
    %s1129 = sld [smem:[#allocation2 + $0x91]]
    %v1130 = vstv %s1129
    %v1131 = vmul.f32 %v1124, %v1130
    %v1132 = vmul.f32 %v1123, %v1130
    %v1135 = vrot.slane %v1131, 2
    %v1136 = vrot.slane %v1132, 2
    %v1139 = vadd.f32 %v1127, %v1135
    %v1140 = vadd.f32 %v1128, %v1136
    %v1141 = vmul.f32 %v1139, %v710
    %v1142 = vmul.f32 %v1140, %v714
    %v1143 = vadd.f32 %v1116, %v1141
    %v1144 = vadd.f32 %v1117, %v1142
    %1145 = vrot.lane.b32.xlu0 %v573, 15
    %v1146 = vpop.permute.xlu0 %1145
    %1147 = vrot.lane.b32.xlu0 %v574, 15
    %v1148 = vpop.permute.xlu0 %1147
    %vm1149 = vcmp.lt.s32.totalorder %v125, 15
    %v1150 = vsel %vm1149, %v1146, %v1148
    %v1151 = vsel %vm1149, %v1148, %v1146
    %s1152 = sld [smem:[#allocation2 + $0x12]]
    %v1153 = vstv %s1152
    %v1154 = vmul.f32 %v1151, %v1153
    %v1155 = vmul.f32 %v1150, %v1153
    %s1156 = sld [smem:[#allocation2 + $0x92]]
    %v1157 = vstv %s1156
    %v1158 = vmul.f32 %v1151, %v1157
    %v1159 = vmul.f32 %v1150, %v1157
    %v1162 = vrot.slane %v1158, 2
    %v1163 = vrot.slane %v1159, 2
    %v1166 = vadd.f32 %v1154, %v1162
    %v1167 = vadd.f32 %v1155, %v1163
    %v1168 = vmul.f32 %v1166, %v745
    %v1169 = vmul.f32 %v1167, %v749
    %v1170 = vadd.f32 %v1143, %v1168
    %v1171 = vadd.f32 %v1144, %v1169
    %1172 = vrot.lane.b32.xlu0 %v573, 14
    %v1173 = vpop.permute.xlu0 %1172
    %1174 = vrot.lane.b32.xlu0 %v574, 14
    %v1175 = vpop.permute.xlu0 %1174
    %vm1176 = vcmp.lt.s32.totalorder %v125, 14
    %v1177 = vsel %vm1176, %v1173, %v1175
    %v1178 = vsel %vm1176, %v1175, %v1173
    %s1179 = sld [smem:[#allocation2 + $0x13]]
    %v1180 = vstv %s1179
    %v1181 = vmul.f32 %v1178, %v1180
    %v1182 = vmul.f32 %v1177, %v1180
    %s1183 = sld [smem:[#allocation2 + $0x93]]
    %v1184 = vstv %s1183
    %v1185 = vmul.f32 %v1178, %v1184
    %v1186 = vmul.f32 %v1177, %v1184
    %v1189 = vrot.slane %v1185, 2
    %v1190 = vrot.slane %v1186, 2
    %v1193 = vadd.f32 %v1181, %v1189
    %v1194 = vadd.f32 %v1182, %v1190
    %v1195 = vmul.f32 %v1193, %v780
    %v1196 = vmul.f32 %v1194, %v784
    %v1197 = vadd.f32 %v1170, %v1195
    %v1198 = vadd.f32 %v1171, %v1196
    %1199 = vrot.lane.b32.xlu0 %v573, 13
    %v1200 = vpop.permute.xlu0 %1199
    %1201 = vrot.lane.b32.xlu0 %v574, 13
    %v1202 = vpop.permute.xlu0 %1201
    %vm1203 = vcmp.lt.s32.totalorder %v125, 13
    %v1204 = vsel %vm1203, %v1200, %v1202
    %v1205 = vsel %vm1203, %v1202, %v1200
    %s1206 = sld [smem:[#allocation2 + $0x14]]
    %v1207 = vstv %s1206
    %v1208 = vmul.f32 %v1205, %v1207
    %v1209 = vmul.f32 %v1204, %v1207
    %s1210 = sld [smem:[#allocation2 + $0x94]]
    %v1211 = vstv %s1210
    %v1212 = vmul.f32 %v1205, %v1211
    %v1213 = vmul.f32 %v1204, %v1211
    %v1216 = vrot.slane %v1212, 2
    %v1217 = vrot.slane %v1213, 2
    %v1220 = vadd.f32 %v1208, %v1216
    %v1221 = vadd.f32 %v1209, %v1217
    %v1222 = vmul.f32 %v1220, %v815
    %v1223 = vmul.f32 %v1221, %v819
    %v1224 = vadd.f32 %v1197, %v1222
    %v1225 = vadd.f32 %v1198, %v1223
    %v1226 = vlaneseq
    %v1227 = vshrl.u32 %v1226, 7
    %v1228 = vsub.s32 2, %v1227
    %v1229 = vrot.slane %v575, %v1228
    %v1230 = vlaneseq
    %v1231 = vshrl.u32 %v1230, 7
    %v1232 = vsub.s32 2, %v1231
    %v1233 = vrot.slane %v576, %v1232
    %v1234 = vmul.f32 %v1224, %v1229
    %v1235 = vmul.f32 %v1225, %v1233
    %v1236 = vadd.f32 %v1035, %v1234
    %v1237 = vadd.f32 %v1036, %v1235
    %1238 = vrot.lane.b32.xlu0 %v573, 3
    %v1239 = vpop.permute.xlu0 %1238
    %1240 = vrot.lane.b32.xlu0 %v574, 3
    %v1241 = vpop.permute.xlu0 %1240
    %vm1242 = vcmp.lt.s32.totalorder %v125, 3
    %v1243 = vsel %vm1242, %v1239, %v1241
    %v1244 = vsel %vm1242, %v1241, %v1239
    %s1245 = sld [smem:[#allocation2 + $0x15]]
    %v1246 = vstv %s1245
    %v1247 = vmul.f32 %v1244, %v1246
    %v1248 = vmul.f32 %v1243, %v1246
    %s1249 = sld [smem:[#allocation2 + $0x95]]
    %v1250 = vstv %s1249
    %v1251 = vmul.f32 %v1244, %v1250
    %v1252 = vmul.f32 %v1243, %v1250
    %v1255 = vrot.slane %v1251, 2
    %v1256 = vrot.slane %v1252, 2
    %v1259 = vadd.f32 %v1247, %v1255
    %v1260 = vadd.f32 %v1248, %v1256
    %v1261 = vmul.f32 %v1259, %v605
    %v1262 = vmul.f32 %v1260, %v609
    %v1263 = vadd.f32 %v1261, 0.0
    %v1264 = vadd.f32 %v1262, 0.0
    %1265 = vrot.lane.b32.xlu0 %v573, 2
    %v1266 = vpop.permute.xlu0 %1265
    %1267 = vrot.lane.b32.xlu0 %v574, 2
    %v1268 = vpop.permute.xlu0 %1267
    %vm1269 = vcmp.lt.s32.totalorder %v125, 2
    %v1270 = vsel %vm1269, %v1266, %v1268
    %v1271 = vsel %vm1269, %v1268, %v1266
    %s1272 = sld [smem:[#allocation2 + $0x16]]
    %v1273 = vstv %s1272
    %v1274 = vmul.f32 %v1271, %v1273
    %v1275 = vmul.f32 %v1270, %v1273
    %s1276 = sld [smem:[#allocation2 + $0x96]]
    %v1277 = vstv %s1276
    %v1278 = vmul.f32 %v1271, %v1277
    %v1279 = vmul.f32 %v1270, %v1277
    %v1282 = vrot.slane %v1278, 2
    %v1283 = vrot.slane %v1279, 2
    %v1286 = vadd.f32 %v1274, %v1282
    %v1287 = vadd.f32 %v1275, %v1283
    %v1288 = vmul.f32 %v1286, %v640
    %v1289 = vmul.f32 %v1287, %v644
    %v1290 = vadd.f32 %v1263, %v1288
    %v1291 = vadd.f32 %v1264, %v1289
    %1292 = vrot.lane.b32.xlu0 %v573, 1
    %v1293 = vpop.permute.xlu0 %1292
    %1294 = vrot.lane.b32.xlu0 %v574, 1
    %v1295 = vpop.permute.xlu0 %1294
    %vm1296 = vcmp.lt.s32.totalorder %v125, 1
    %v1297 = vsel %vm1296, %v1293, %v1295
    %v1298 = vsel %vm1296, %v1295, %v1293
    %s1299 = sld [smem:[#allocation2 + $0x17]]
    %v1300 = vstv %s1299
    %v1301 = vmul.f32 %v1298, %v1300
    %v1302 = vmul.f32 %v1297, %v1300
    %s1303 = sld [smem:[#allocation2 + $0x97]]
    %v1304 = vstv %s1303
    %v1305 = vmul.f32 %v1298, %v1304
    %v1306 = vmul.f32 %v1297, %v1304
    %v1309 = vrot.slane %v1305, 2
    %v1310 = vrot.slane %v1306, 2
    %v1313 = vadd.f32 %v1301, %v1309
    %v1314 = vadd.f32 %v1302, %v1310
    %v1315 = vmul.f32 %v1313, %v675
    %v1316 = vmul.f32 %v1314, %v679
    %v1317 = vadd.f32 %v1290, %v1315
    %v1318 = vadd.f32 %v1291, %v1316
    %s1319 = sld [smem:[#allocation2 + $0x18]]
    %v1320 = vstv %s1319
    %v1321 = vmul.f32 %v573, %v1320
    %v1322 = vmul.f32 %v574, %v1320
    %s1323 = sld [smem:[#allocation2 + $0x98]]
    %v1324 = vstv %s1323
    %v1325 = vmul.f32 %v573, %v1324
    %v1326 = vmul.f32 %v574, %v1324
    %v1329 = vrot.slane %v1325, 2
    %v1330 = vrot.slane %v1326, 2
    %v1333 = vadd.f32 %v1321, %v1329
    %v1334 = vadd.f32 %v1322, %v1330
    %v1335 = vmul.f32 %v1333, %v710
    %v1336 = vmul.f32 %v1334, %v714
    %v1337 = vadd.f32 %v1317, %v1335
    %v1338 = vadd.f32 %v1318, %v1336
    %1339 = vrot.lane.b32.xlu0 %v573, 127
    %v1340 = vpop.permute.xlu0 %1339
    %1341 = vrot.lane.b32.xlu0 %v574, 127
    %v1342 = vpop.permute.xlu0 %1341
    %vm1343 = vcmp.lt.s32.totalorder %v125, 127
    %v1344 = vsel %vm1343, %v1340, %v1342
    %v1345 = vsel %vm1343, %v1342, %v1340
    %s1346 = sld [smem:[#allocation2 + $0x19]]
    %v1347 = vstv %s1346
    %v1348 = vmul.f32 %v1344, %v1347
    %v1349 = vmul.f32 %v1345, %v1347
    %s1350 = sld [smem:[#allocation2 + $0x99]]
    %v1351 = vstv %s1350
    %v1352 = vmul.f32 %v1344, %v1351
    %v1353 = vmul.f32 %v1345, %v1351
    %v1356 = vrot.slane %v1352, 2
    %v1357 = vrot.slane %v1353, 2
    %v1360 = vadd.f32 %v1348, %v1356
    %v1361 = vadd.f32 %v1349, %v1357
    %v1362 = vmul.f32 %v1360, %v745
    %v1363 = vmul.f32 %v1361, %v749
    %v1364 = vadd.f32 %v1337, %v1362
    %v1365 = vadd.f32 %v1338, %v1363
    %1366 = vrot.lane.b32.xlu0 %v573, 126
    %v1367 = vpop.permute.xlu0 %1366
    %1368 = vrot.lane.b32.xlu0 %v574, 126
    %v1369 = vpop.permute.xlu0 %1368
    %vm1370 = vcmp.lt.s32.totalorder %v125, 126
    %v1371 = vsel %vm1370, %v1367, %v1369
    %v1372 = vsel %vm1370, %v1369, %v1367
    %s1373 = sld [smem:[#allocation2 + $0x1a]]
    %v1374 = vstv %s1373
    %v1375 = vmul.f32 %v1371, %v1374
    %v1376 = vmul.f32 %v1372, %v1374
    %s1377 = sld [smem:[#allocation2 + $0x9a]]
    %v1378 = vstv %s1377
    %v1379 = vmul.f32 %v1371, %v1378
    %v1380 = vmul.f32 %v1372, %v1378
    %v1383 = vrot.slane %v1379, 2
    %v1384 = vrot.slane %v1380, 2
    %v1387 = vadd.f32 %v1375, %v1383
    %v1388 = vadd.f32 %v1376, %v1384
    %v1389 = vmul.f32 %v1387, %v780
    %v1390 = vmul.f32 %v1388, %v784
    %v1391 = vadd.f32 %v1364, %v1389
    %v1392 = vadd.f32 %v1365, %v1390
    %1393 = vrot.lane.b32.xlu0 %v573, 125
    %v1394 = vpop.permute.xlu0 %1393
    %1395 = vrot.lane.b32.xlu0 %v574, 125
    %v1396 = vpop.permute.xlu0 %1395
    %vm1397 = vcmp.lt.s32.totalorder %v125, 125
    %v1398 = vsel %vm1397, %v1394, %v1396
    %v1399 = vsel %vm1397, %v1396, %v1394
    %s1400 = sld [smem:[#allocation2 + $0x1b]]
    %v1401 = vstv %s1400
    %v1402 = vmul.f32 %v1398, %v1401
    %v1403 = vmul.f32 %v1399, %v1401
    %s1404 = sld [smem:[#allocation2 + $0x9b]]
    %v1405 = vstv %s1404
    %v1406 = vmul.f32 %v1398, %v1405
    %v1407 = vmul.f32 %v1399, %v1405
    %v1410 = vrot.slane %v1406, 2
    %v1411 = vrot.slane %v1407, 2
    %v1414 = vadd.f32 %v1402, %v1410
    %v1415 = vadd.f32 %v1403, %v1411
    %v1416 = vmul.f32 %v1414, %v815
    %v1417 = vmul.f32 %v1415, %v819
    %v1418 = vadd.f32 %v1391, %v1416
    %v1419 = vadd.f32 %v1392, %v1417
    %v1420 = vlaneseq
    %v1421 = vshrl.u32 %v1420, 7
    %v1422 = vsub.s32 3, %v1421
    %v1423 = vrot.slane %v575, %v1422
    %v1424 = vlaneseq
    %v1425 = vshrl.u32 %v1424, 7
    %v1426 = vsub.s32 3, %v1425
    %v1427 = vrot.slane %v576, %v1426
    %v1428 = vmul.f32 %v1418, %v1423
    %v1429 = vmul.f32 %v1419, %v1427
    %v1430 = vadd.f32 %v1236, %v1428
    %v1431 = vadd.f32 %v1237, %v1429
    %1432 = vrot.lane.b32.xlu0 %v573, 115
    %v1433 = vpop.permute.xlu0 %1432
    %1434 = vrot.lane.b32.xlu0 %v574, 115
    %v1435 = vpop.permute.xlu0 %1434
    %vm1436 = vcmp.lt.s32.totalorder %v125, 115
    %v1437 = vsel %vm1436, %v1433, %v1435
    %v1438 = vsel %vm1436, %v1435, %v1433
    %s1439 = sld [smem:[#allocation2 + $0x1c]]
    %v1440 = vstv %s1439
    %v1441 = vmul.f32 %v1437, %v1440
    %v1442 = vmul.f32 %v1438, %v1440
    %s1443 = sld [smem:[#allocation2 + $0x9c]]
    %v1444 = vstv %s1443
    %v1445 = vmul.f32 %v1437, %v1444
    %v1446 = vmul.f32 %v1438, %v1444
    %v1449 = vrot.slane %v1445, 2
    %v1450 = vrot.slane %v1446, 2
    %v1453 = vadd.f32 %v1441, %v1449
    %v1454 = vadd.f32 %v1442, %v1450
    %v1455 = vmul.f32 %v1453, %v605
    %v1456 = vmul.f32 %v1454, %v609
    %v1457 = vadd.f32 %v1455, 0.0
    %v1458 = vadd.f32 %v1456, 0.0
    %1459 = vrot.lane.b32.xlu0 %v573, 114
    %v1460 = vpop.permute.xlu0 %1459
    %1461 = vrot.lane.b32.xlu0 %v574, 114
    %v1462 = vpop.permute.xlu0 %1461
    %vm1463 = vcmp.lt.s32.totalorder %v125, 114
    %v1464 = vsel %vm1463, %v1460, %v1462
    %v1465 = vsel %vm1463, %v1462, %v1460
    %s1466 = sld [smem:[#allocation2 + $0x1d]]
    %v1467 = vstv %s1466
    %v1468 = vmul.f32 %v1464, %v1467
    %v1469 = vmul.f32 %v1465, %v1467
    %s1470 = sld [smem:[#allocation2 + $0x9d]]
    %v1471 = vstv %s1470
    %v1472 = vmul.f32 %v1464, %v1471
    %v1473 = vmul.f32 %v1465, %v1471
    %v1476 = vrot.slane %v1472, 2
    %v1477 = vrot.slane %v1473, 2
    %v1480 = vadd.f32 %v1468, %v1476
    %v1481 = vadd.f32 %v1469, %v1477
    %v1482 = vmul.f32 %v1480, %v640
    %v1483 = vmul.f32 %v1481, %v644
    %v1484 = vadd.f32 %v1457, %v1482
    %v1485 = vadd.f32 %v1458, %v1483
    %1486 = vrot.lane.b32.xlu0 %v573, 113
    %v1487 = vpop.permute.xlu0 %1486
    %1488 = vrot.lane.b32.xlu0 %v574, 113
    %v1489 = vpop.permute.xlu0 %1488
    %vm1490 = vcmp.lt.s32.totalorder %v125, 113
    %v1491 = vsel %vm1490, %v1487, %v1489
    %v1492 = vsel %vm1490, %v1489, %v1487
    %s1493 = sld [smem:[#allocation2 + $0x1e]]
    %v1494 = vstv %s1493
    %v1495 = vmul.f32 %v1491, %v1494
    %v1496 = vmul.f32 %v1492, %v1494
    %s1497 = sld [smem:[#allocation2 + $0x9e]]
    %v1498 = vstv %s1497
    %v1499 = vmul.f32 %v1491, %v1498
    %v1500 = vmul.f32 %v1492, %v1498
    %v1503 = vrot.slane %v1499, 2
    %v1504 = vrot.slane %v1500, 2
    %v1507 = vadd.f32 %v1495, %v1503
    %v1508 = vadd.f32 %v1496, %v1504
    %v1509 = vmul.f32 %v1507, %v675
    %v1510 = vmul.f32 %v1508, %v679
    %v1511 = vadd.f32 %v1484, %v1509
    %v1512 = vadd.f32 %v1485, %v1510
    %1513 = vrot.lane.b32.xlu0 %v573, 112
    %v1514 = vpop.permute.xlu0 %1513
    %1515 = vrot.lane.b32.xlu0 %v574, 112
    %v1516 = vpop.permute.xlu0 %1515
    %vm1517 = vcmp.lt.s32.totalorder %v125, 112
    %v1518 = vsel %vm1517, %v1514, %v1516
    %v1519 = vsel %vm1517, %v1516, %v1514
    %s1520 = sld [smem:[#allocation2 + $0x1f]]
    %v1521 = vstv %s1520
    %v1522 = vmul.f32 %v1518, %v1521
    %v1523 = vmul.f32 %v1519, %v1521
    %s1524 = sld [smem:[#allocation2 + $0x9f]]
    %v1525 = vstv %s1524
    %v1526 = vmul.f32 %v1518, %v1525
    %v1527 = vmul.f32 %v1519, %v1525
    %v1530 = vrot.slane %v1526, 2
    %v1531 = vrot.slane %v1527, 2
    %v1534 = vadd.f32 %v1522, %v1530
    %v1535 = vadd.f32 %v1523, %v1531
    %v1536 = vmul.f32 %v1534, %v710
    %v1537 = vmul.f32 %v1535, %v714
    %v1538 = vadd.f32 %v1511, %v1536
    %v1539 = vadd.f32 %v1512, %v1537
    %1540 = vrot.lane.b32.xlu0 %v573, 111
    %v1541 = vpop.permute.xlu0 %1540
    %1542 = vrot.lane.b32.xlu0 %v574, 111
    %v1543 = vpop.permute.xlu0 %1542
    %vm1544 = vcmp.lt.s32.totalorder %v125, 111
    %v1545 = vsel %vm1544, %v1541, %v1543
    %v1546 = vsel %vm1544, %v1543, %v1541
    %s1547 = sld [smem:[#allocation2 + $0x20]]
    %v1548 = vstv %s1547
    %v1549 = vmul.f32 %v1545, %v1548
    %v1550 = vmul.f32 %v1546, %v1548
    %s1551 = sld [smem:[#allocation2 + $0xa0]]
    %v1552 = vstv %s1551
    %v1553 = vmul.f32 %v1545, %v1552
    %v1554 = vmul.f32 %v1546, %v1552
    %v1557 = vrot.slane %v1553, 2
    %v1558 = vrot.slane %v1554, 2
    %v1561 = vadd.f32 %v1549, %v1557
    %v1562 = vadd.f32 %v1550, %v1558
    %v1563 = vmul.f32 %v1561, %v745
    %v1564 = vmul.f32 %v1562, %v749
    %v1565 = vadd.f32 %v1538, %v1563
    %v1566 = vadd.f32 %v1539, %v1564
    %1567 = vrot.lane.b32.xlu0 %v573, 110
    %v1568 = vpop.permute.xlu0 %1567
    %1569 = vrot.lane.b32.xlu0 %v574, 110
    %v1570 = vpop.permute.xlu0 %1569
    %vm1571 = vcmp.lt.s32.totalorder %v125, 110
    %v1572 = vsel %vm1571, %v1568, %v1570
    %v1573 = vsel %vm1571, %v1570, %v1568
    %s1574 = sld [smem:[#allocation2 + $0x21]]
    %v1575 = vstv %s1574
    %v1576 = vmul.f32 %v1572, %v1575
    %v1577 = vmul.f32 %v1573, %v1575
    %s1578 = sld [smem:[#allocation2 + $0xa1]]
    %v1579 = vstv %s1578
    %v1580 = vmul.f32 %v1572, %v1579
    %v1581 = vmul.f32 %v1573, %v1579
    %v1584 = vrot.slane %v1580, 2
    %v1585 = vrot.slane %v1581, 2
    %v1588 = vadd.f32 %v1576, %v1584
    %v1589 = vadd.f32 %v1577, %v1585
    %v1590 = vmul.f32 %v1588, %v780
    %v1591 = vmul.f32 %v1589, %v784
    %v1592 = vadd.f32 %v1565, %v1590
    %v1593 = vadd.f32 %v1566, %v1591
    %1594 = vrot.lane.b32.xlu0 %v573, 109
    %v1595 = vpop.permute.xlu0 %1594
    %1596 = vrot.lane.b32.xlu0 %v574, 109
    %v1597 = vpop.permute.xlu0 %1596
    %vm1598 = vcmp.lt.s32.totalorder %v125, 109
    %v1599 = vsel %vm1598, %v1595, %v1597
    %v1600 = vsel %vm1598, %v1597, %v1595
    %s1601 = sld [smem:[#allocation2 + $0x22]]
    %v1602 = vstv %s1601
    %v1603 = vmul.f32 %v1599, %v1602
    %v1604 = vmul.f32 %v1600, %v1602
    %s1605 = sld [smem:[#allocation2 + $0xa2]]
    %v1606 = vstv %s1605
    %v1607 = vmul.f32 %v1599, %v1606
    %v1608 = vmul.f32 %v1600, %v1606
    %v1611 = vrot.slane %v1607, 2
    %v1612 = vrot.slane %v1608, 2
    %v1615 = vadd.f32 %v1603, %v1611
    %v1616 = vadd.f32 %v1604, %v1612
    %v1617 = vmul.f32 %v1615, %v815
    %v1618 = vmul.f32 %v1616, %v819
    %v1619 = vadd.f32 %v1592, %v1617
    %v1620 = vadd.f32 %v1593, %v1618
    %v1621 = vlaneseq
    %v1622 = vshrl.u32 %v1621, 7
    %v1623 = vsub.s32 4, %v1622
    %v1624 = vrot.slane %v575, %v1623
    %v1625 = vlaneseq
    %v1626 = vshrl.u32 %v1625, 7
    %v1627 = vsub.s32 4, %v1626
    %v1628 = vrot.slane %v576, %v1627
    %v1629 = vmul.f32 %v1619, %v1624
    %v1630 = vmul.f32 %v1620, %v1628
    %v1631 = vadd.f32 %v1430, %v1629
    %v1632 = vadd.f32 %v1431, %v1630
    %1633 = vrot.lane.b32.xlu0 %v573, 99
    %v1634 = vpop.permute.xlu0 %1633
    %1635 = vrot.lane.b32.xlu0 %v574, 99
    %v1636 = vpop.permute.xlu0 %1635
    %vm1637 = vcmp.lt.s32.totalorder %v125, 99
    %v1638 = vsel %vm1637, %v1634, %v1636
    %v1639 = vsel %vm1637, %v1636, %v1634
    %s1640 = sld [smem:[#allocation2 + $0x23]]
    %v1641 = vstv %s1640
    %v1642 = vmul.f32 %v1638, %v1641
    %v1643 = vmul.f32 %v1639, %v1641
    %s1644 = sld [smem:[#allocation2 + $0xa3]]
    %v1645 = vstv %s1644
    %v1646 = vmul.f32 %v1638, %v1645
    %v1647 = vmul.f32 %v1639, %v1645
    %v1650 = vrot.slane %v1646, 2
    %v1651 = vrot.slane %v1647, 2
    %v1654 = vadd.f32 %v1642, %v1650
    %v1655 = vadd.f32 %v1643, %v1651
    %v1656 = vmul.f32 %v1654, %v605
    %v1657 = vmul.f32 %v1655, %v609
    %v1658 = vadd.f32 %v1656, 0.0
    %v1659 = vadd.f32 %v1657, 0.0
    %1660 = vrot.lane.b32.xlu0 %v573, 98
    %v1661 = vpop.permute.xlu0 %1660
    %1662 = vrot.lane.b32.xlu0 %v574, 98
    %v1663 = vpop.permute.xlu0 %1662
    %vm1664 = vcmp.lt.s32.totalorder %v125, 98
    %v1665 = vsel %vm1664, %v1661, %v1663
    %v1666 = vsel %vm1664, %v1663, %v1661
    %s1667 = sld [smem:[#allocation2 + $0x24]]
    %v1668 = vstv %s1667
    %v1669 = vmul.f32 %v1665, %v1668
    %v1670 = vmul.f32 %v1666, %v1668
    %s1671 = sld [smem:[#allocation2 + $0xa4]]
    %v1672 = vstv %s1671
    %v1673 = vmul.f32 %v1665, %v1672
    %v1674 = vmul.f32 %v1666, %v1672
    %v1677 = vrot.slane %v1673, 2
    %v1678 = vrot.slane %v1674, 2
    %v1681 = vadd.f32 %v1669, %v1677
    %v1682 = vadd.f32 %v1670, %v1678
    %v1683 = vmul.f32 %v1681, %v640
    %v1684 = vmul.f32 %v1682, %v644
    %v1685 = vadd.f32 %v1658, %v1683
    %v1686 = vadd.f32 %v1659, %v1684
    %1687 = vrot.lane.b32.xlu0 %v573, 97
    %v1688 = vpop.permute.xlu0 %1687
    %1689 = vrot.lane.b32.xlu0 %v574, 97
    %v1690 = vpop.permute.xlu0 %1689
    %vm1691 = vcmp.lt.s32.totalorder %v125, 97
    %v1692 = vsel %vm1691, %v1688, %v1690
    %v1693 = vsel %vm1691, %v1690, %v1688
    %s1694 = sld [smem:[#allocation2 + $0x25]]
    %v1695 = vstv %s1694
    %v1696 = vmul.f32 %v1692, %v1695
    %v1697 = vmul.f32 %v1693, %v1695
    %s1698 = sld [smem:[#allocation2 + $0xa5]]
    %v1699 = vstv %s1698
    %v1700 = vmul.f32 %v1692, %v1699
    %v1701 = vmul.f32 %v1693, %v1699
    %v1704 = vrot.slane %v1700, 2
    %v1705 = vrot.slane %v1701, 2
    %v1708 = vadd.f32 %v1696, %v1704
    %v1709 = vadd.f32 %v1697, %v1705
    %v1710 = vmul.f32 %v1708, %v675
    %v1711 = vmul.f32 %v1709, %v679
    %v1712 = vadd.f32 %v1685, %v1710
    %v1713 = vadd.f32 %v1686, %v1711
    %1714 = vrot.lane.b32.xlu0 %v573, 96
    %v1715 = vpop.permute.xlu0 %1714
    %1716 = vrot.lane.b32.xlu0 %v574, 96
    %v1717 = vpop.permute.xlu0 %1716
    %vm1718 = vcmp.lt.s32.totalorder %v125, 96
    %v1719 = vsel %vm1718, %v1715, %v1717
    %v1720 = vsel %vm1718, %v1717, %v1715
    %s1721 = sld [smem:[#allocation2 + $0x26]]
    %v1722 = vstv %s1721
    %v1723 = vmul.f32 %v1719, %v1722
    %v1724 = vmul.f32 %v1720, %v1722
    %s1725 = sld [smem:[#allocation2 + $0xa6]]
    %v1726 = vstv %s1725
    %v1727 = vmul.f32 %v1719, %v1726
    %v1728 = vmul.f32 %v1720, %v1726
    %v1731 = vrot.slane %v1727, 2
    %v1732 = vrot.slane %v1728, 2
    %v1735 = vadd.f32 %v1723, %v1731
    %v1736 = vadd.f32 %v1724, %v1732
    %v1737 = vmul.f32 %v1735, %v710
    %v1738 = vmul.f32 %v1736, %v714
    %v1739 = vadd.f32 %v1712, %v1737
    %v1740 = vadd.f32 %v1713, %v1738
    %1741 = vrot.lane.b32.xlu0 %v573, 95
    %v1742 = vpop.permute.xlu0 %1741
    %1743 = vrot.lane.b32.xlu0 %v574, 95
    %v1744 = vpop.permute.xlu0 %1743
    %vm1745 = vcmp.lt.s32.totalorder %v125, 95
    %v1746 = vsel %vm1745, %v1742, %v1744
    %v1747 = vsel %vm1745, %v1744, %v1742
    %s1748 = sld [smem:[#allocation2 + $0x27]]
    %v1749 = vstv %s1748
    %v1750 = vmul.f32 %v1746, %v1749
    %v1751 = vmul.f32 %v1747, %v1749
    %s1752 = sld [smem:[#allocation2 + $0xa7]]
    %v1753 = vstv %s1752
    %v1754 = vmul.f32 %v1746, %v1753
    %v1755 = vmul.f32 %v1747, %v1753
    %v1758 = vrot.slane %v1754, 2
    %v1759 = vrot.slane %v1755, 2
    %v1762 = vadd.f32 %v1750, %v1758
    %v1763 = vadd.f32 %v1751, %v1759
    %v1764 = vmul.f32 %v1762, %v745
    %v1765 = vmul.f32 %v1763, %v749
    %v1766 = vadd.f32 %v1739, %v1764
    %v1767 = vadd.f32 %v1740, %v1765
    %1768 = vrot.lane.b32.xlu0 %v573, 94
    %v1769 = vpop.permute.xlu0 %1768
    %1770 = vrot.lane.b32.xlu0 %v574, 94
    %v1771 = vpop.permute.xlu0 %1770
    %vm1772 = vcmp.lt.s32.totalorder %v125, 94
    %v1773 = vsel %vm1772, %v1769, %v1771
    %v1774 = vsel %vm1772, %v1771, %v1769
    %s1775 = sld [smem:[#allocation2 + $0x28]]
    %v1776 = vstv %s1775
    %v1777 = vmul.f32 %v1773, %v1776
    %v1778 = vmul.f32 %v1774, %v1776
    %s1779 = sld [smem:[#allocation2 + $0xa8]]
    %v1780 = vstv %s1779
    %v1781 = vmul.f32 %v1773, %v1780
    %v1782 = vmul.f32 %v1774, %v1780
    %v1785 = vrot.slane %v1781, 2
    %v1786 = vrot.slane %v1782, 2
    %v1789 = vadd.f32 %v1777, %v1785
    %v1790 = vadd.f32 %v1778, %v1786
    %v1791 = vmul.f32 %v1789, %v780
    %v1792 = vmul.f32 %v1790, %v784
    %v1793 = vadd.f32 %v1766, %v1791
    %v1794 = vadd.f32 %v1767, %v1792
    %1795 = vrot.lane.b32.xlu0 %v573, 93
    %v1796 = vpop.permute.xlu0 %1795
    %1797 = vrot.lane.b32.xlu0 %v574, 93
    %v1798 = vpop.permute.xlu0 %1797
    %vm1799 = vcmp.lt.s32.totalorder %v125, 93
    %v1800 = vsel %vm1799, %v1796, %v1798
    %v1801 = vsel %vm1799, %v1798, %v1796
    %s1802 = sld [smem:[#allocation2 + $0x29]]
    %v1803 = vstv %s1802
    %v1804 = vmul.f32 %v1800, %v1803
    %v1805 = vmul.f32 %v1801, %v1803
    %s1806 = sld [smem:[#allocation2 + $0xa9]]
    %v1807 = vstv %s1806
    %v1808 = vmul.f32 %v1800, %v1807
    %v1809 = vmul.f32 %v1801, %v1807
    %v1812 = vrot.slane %v1808, 2
    %v1813 = vrot.slane %v1809, 2
    %v1816 = vadd.f32 %v1804, %v1812
    %v1817 = vadd.f32 %v1805, %v1813
    %v1818 = vmul.f32 %v1816, %v815
    %v1819 = vmul.f32 %v1817, %v819
    %v1820 = vadd.f32 %v1793, %v1818
    %v1821 = vadd.f32 %v1794, %v1819
    %v1822 = vlaneseq
    %v1823 = vshrl.u32 %v1822, 7
    %v1824 = vsub.s32 5, %v1823
    %v1825 = vrot.slane %v575, %v1824
    %v1826 = vlaneseq
    %v1827 = vshrl.u32 %v1826, 7
    %v1828 = vsub.s32 5, %v1827
    %v1829 = vrot.slane %v576, %v1828
    %v1830 = vmul.f32 %v1820, %v1825
    %v1831 = vmul.f32 %v1821, %v1829
    %v1832 = vadd.f32 %v1631, %v1830
    %v1833 = vadd.f32 %v1632, %v1831
    %1834 = vrot.lane.b32.xlu0 %v573, 83
    %v1835 = vpop.permute.xlu0 %1834
    %1836 = vrot.lane.b32.xlu0 %v574, 83
    %v1837 = vpop.permute.xlu0 %1836
    %vm1838 = vcmp.lt.s32.totalorder %v125, 83
    %v1839 = vsel %vm1838, %v1835, %v1837
    %v1840 = vsel %vm1838, %v1837, %v1835
    %s1841 = sld [smem:[#allocation2 + $0x2a]]
    %v1842 = vstv %s1841
    %v1843 = vmul.f32 %v1839, %v1842
    %v1844 = vmul.f32 %v1840, %v1842
    %s1845 = sld [smem:[#allocation2 + $0xaa]]
    %v1846 = vstv %s1845
    %v1847 = vmul.f32 %v1839, %v1846
    %v1848 = vmul.f32 %v1840, %v1846
    %v1851 = vrot.slane %v1847, 2
    %v1852 = vrot.slane %v1848, 2
    %v1855 = vadd.f32 %v1843, %v1851
    %v1856 = vadd.f32 %v1844, %v1852
    %v1857 = vmul.f32 %v1855, %v605
    %v1858 = vmul.f32 %v1856, %v609
    %v1859 = vadd.f32 %v1857, 0.0
    %v1860 = vadd.f32 %v1858, 0.0
    %1861 = vrot.lane.b32.xlu0 %v573, 82
    %v1862 = vpop.permute.xlu0 %1861
    %1863 = vrot.lane.b32.xlu0 %v574, 82
    %v1864 = vpop.permute.xlu0 %1863
    %vm1865 = vcmp.lt.s32.totalorder %v125, 82
    %v1866 = vsel %vm1865, %v1862, %v1864
    %v1867 = vsel %vm1865, %v1864, %v1862
    %s1868 = sld [smem:[#allocation2 + $0x2b]]
    %v1869 = vstv %s1868
    %v1870 = vmul.f32 %v1866, %v1869
    %v1871 = vmul.f32 %v1867, %v1869
    %s1872 = sld [smem:[#allocation2 + $0xab]]
    %v1873 = vstv %s1872
    %v1874 = vmul.f32 %v1866, %v1873
    %v1875 = vmul.f32 %v1867, %v1873
    %v1878 = vrot.slane %v1874, 2
    %v1879 = vrot.slane %v1875, 2
    %v1882 = vadd.f32 %v1870, %v1878
    %v1883 = vadd.f32 %v1871, %v1879
    %v1884 = vmul.f32 %v1882, %v640
    %v1885 = vmul.f32 %v1883, %v644
    %v1886 = vadd.f32 %v1859, %v1884
    %v1887 = vadd.f32 %v1860, %v1885
    %1888 = vrot.lane.b32.xlu0 %v573, 81
    %v1889 = vpop.permute.xlu0 %1888
    %1890 = vrot.lane.b32.xlu0 %v574, 81
    %v1891 = vpop.permute.xlu0 %1890
    %vm1892 = vcmp.lt.s32.totalorder %v125, 81
    %v1893 = vsel %vm1892, %v1889, %v1891
    %v1894 = vsel %vm1892, %v1891, %v1889
    %s1895 = sld [smem:[#allocation2 + $0x2c]]
    %v1896 = vstv %s1895
    %v1897 = vmul.f32 %v1893, %v1896
    %v1898 = vmul.f32 %v1894, %v1896
    %s1899 = sld [smem:[#allocation2 + $0xac]]
    %v1900 = vstv %s1899
    %v1901 = vmul.f32 %v1893, %v1900
    %v1902 = vmul.f32 %v1894, %v1900
    %v1905 = vrot.slane %v1901, 2
    %v1906 = vrot.slane %v1902, 2
    %v1909 = vadd.f32 %v1897, %v1905
    %v1910 = vadd.f32 %v1898, %v1906
    %v1911 = vmul.f32 %v1909, %v675
    %v1912 = vmul.f32 %v1910, %v679
    %v1913 = vadd.f32 %v1886, %v1911
    %v1914 = vadd.f32 %v1887, %v1912
    %1915 = vrot.lane.b32.xlu0 %v573, 80
    %v1916 = vpop.permute.xlu0 %1915
    %1917 = vrot.lane.b32.xlu0 %v574, 80
    %v1918 = vpop.permute.xlu0 %1917
    %vm1919 = vcmp.lt.s32.totalorder %v125, 80
    %v1920 = vsel %vm1919, %v1916, %v1918
    %v1921 = vsel %vm1919, %v1918, %v1916
    %s1922 = sld [smem:[#allocation2 + $0x2d]]
    %v1923 = vstv %s1922
    %v1924 = vmul.f32 %v1920, %v1923
    %v1925 = vmul.f32 %v1921, %v1923
    %s1926 = sld [smem:[#allocation2 + $0xad]]
    %v1927 = vstv %s1926
    %v1928 = vmul.f32 %v1920, %v1927
    %v1929 = vmul.f32 %v1921, %v1927
    %v1932 = vrot.slane %v1928, 2
    %v1933 = vrot.slane %v1929, 2
    %v1936 = vadd.f32 %v1924, %v1932
    %v1937 = vadd.f32 %v1925, %v1933
    %v1938 = vmul.f32 %v1936, %v710
    %v1939 = vmul.f32 %v1937, %v714
    %v1940 = vadd.f32 %v1913, %v1938
    %v1941 = vadd.f32 %v1914, %v1939
    %1942 = vrot.lane.b32.xlu0 %v573, 79
    %v1943 = vpop.permute.xlu0 %1942
    %1944 = vrot.lane.b32.xlu0 %v574, 79
    %v1945 = vpop.permute.xlu0 %1944
    %vm1946 = vcmp.lt.s32.totalorder %v125, 79
    %v1947 = vsel %vm1946, %v1943, %v1945
    %v1948 = vsel %vm1946, %v1945, %v1943
    %s1949 = sld [smem:[#allocation2 + $0x2e]]
    %v1950 = vstv %s1949
    %v1951 = vmul.f32 %v1947, %v1950
    %v1952 = vmul.f32 %v1948, %v1950
    %s1953 = sld [smem:[#allocation2 + $0xae]]
    %v1954 = vstv %s1953
    %v1955 = vmul.f32 %v1947, %v1954
    %v1956 = vmul.f32 %v1948, %v1954
    %v1959 = vrot.slane %v1955, 2
    %v1960 = vrot.slane %v1956, 2
    %v1963 = vadd.f32 %v1951, %v1959
    %v1964 = vadd.f32 %v1952, %v1960
    %v1965 = vmul.f32 %v1963, %v745
    %v1966 = vmul.f32 %v1964, %v749
    %v1967 = vadd.f32 %v1940, %v1965
    %v1968 = vadd.f32 %v1941, %v1966
    %1969 = vrot.lane.b32.xlu0 %v573, 78
    %v1970 = vpop.permute.xlu0 %1969
    %1971 = vrot.lane.b32.xlu0 %v574, 78
    %v1972 = vpop.permute.xlu0 %1971
    %vm1973 = vcmp.lt.s32.totalorder %v125, 78
    %v1974 = vsel %vm1973, %v1970, %v1972
    %v1975 = vsel %vm1973, %v1972, %v1970
    %s1976 = sld [smem:[#allocation2 + $0x2f]]
    %v1977 = vstv %s1976
    %v1978 = vmul.f32 %v1974, %v1977
    %v1979 = vmul.f32 %v1975, %v1977
    %s1980 = sld [smem:[#allocation2 + $0xaf]]
    %v1981 = vstv %s1980
    %v1982 = vmul.f32 %v1974, %v1981
    %v1983 = vmul.f32 %v1975, %v1981
    %v1986 = vrot.slane %v1982, 2
    %v1987 = vrot.slane %v1983, 2
    %v1990 = vadd.f32 %v1978, %v1986
    %v1991 = vadd.f32 %v1979, %v1987
    %v1992 = vmul.f32 %v1990, %v780
    %v1993 = vmul.f32 %v1991, %v784
    %v1994 = vadd.f32 %v1967, %v1992
    %v1995 = vadd.f32 %v1968, %v1993
    %1996 = vrot.lane.b32.xlu0 %v573, 77
    %v1997 = vpop.permute.xlu0 %1996
    %1998 = vrot.lane.b32.xlu0 %v574, 77
    %v1999 = vpop.permute.xlu0 %1998
    %vm2000 = vcmp.lt.s32.totalorder %v125, 77
    %v2001 = vsel %vm2000, %v1997, %v1999
    %v2002 = vsel %vm2000, %v1999, %v1997
    %s2003 = sld [smem:[#allocation2 + $0x30]]
    %v2004 = vstv %s2003
    %v2005 = vmul.f32 %v2001, %v2004
    %v2006 = vmul.f32 %v2002, %v2004
    %s2007 = sld [smem:[#allocation2 + $0xb0]]
    %v2008 = vstv %s2007
    %v2009 = vmul.f32 %v2001, %v2008
    %v2010 = vmul.f32 %v2002, %v2008
    %v2013 = vrot.slane %v2009, 2
    %v2014 = vrot.slane %v2010, 2
    %v2017 = vadd.f32 %v2005, %v2013
    %v2018 = vadd.f32 %v2006, %v2014
    %v2019 = vmul.f32 %v2017, %v815
    %v2020 = vmul.f32 %v2018, %v819
    %v2021 = vadd.f32 %v1994, %v2019
    %v2022 = vadd.f32 %v1995, %v2020
    %v2023 = vlaneseq
    %v2024 = vshrl.u32 %v2023, 7
    %v2025 = vsub.s32 6, %v2024
    %v2026 = vrot.slane %v575, %v2025
    %v2027 = vlaneseq
    %v2028 = vshrl.u32 %v2027, 7
    %v2029 = vsub.s32 6, %v2028
    %v2030 = vrot.slane %v576, %v2029
    %v2031 = vmul.f32 %v2021, %v2026
    %v2032 = vmul.f32 %v2022, %v2030
    %v2033 = vadd.f32 %v1832, %v2031
    %v2034 = vadd.f32 %v1833, %v2032
    %v2037 = vcombine.low %v2033, %v2034
    %v2039 = vunpack.c.l.s4 1983009808
    %v2040 = vunpack.c.0.s8 %v2039
    %v2041 = vlaneseq
    %v2042 = vshrl.u32 %v2041, 7
    %v2043 = vsub.s32 %v2040, %v2042
    %v2044 = vrot.slane %v2037, %v2043
    %2046 = vst [vmem:[%s9] sm:$0xf] %v2044
    // Predicated region
    $region38: #{cbam_pallas.2} parent=1 // pred_check
      _
    $region39: #{cbam_pallas.2} parent=1 // pred_check_branch
      %2048 = sbr.rel (0) target = $region41
    $region40: #{cbam_pallas.2} parent=1 // pred_region
      _
    $region41: #{cbam_pallas.2} parent=1 // pred_fallthru
      _
    // Predicated region
    $region42: #{cbam_pallas.2} parent=1 // pred_check
      _
    $region43: #{cbam_pallas.2} parent=1 // pred_check_branch
      %2050 = sbr.rel (0) target = $region45
    $region44: #{cbam_pallas.2} parent=1 // pred_region
      _
    $region45: #{cbam_pallas.2} parent=1 // pred_fallthru
      _
    // Predicated region
    $region46: #{cbam_pallas.2} parent=1 // pred_check
      _
    $region47: #{cbam_pallas.2} parent=1 // pred_check_branch
      %2052 = sbr.rel (0) target = $region49
    $region48: #{cbam_pallas.2} parent=1 // pred_region
      _
    $region49: #{cbam_pallas.2} parent=1 // pred_fallthru
      _
    // Predicated region
    $region50: #{cbam_pallas.2} parent=1 // pred_check
      _
    $region51: #{cbam_pallas.2} parent=1 // pred_check_branch
      %2054 = sbr.rel (0) target = $region53
    $region52: #{cbam_pallas.2} parent=1 // pred_region
      _
    $region53: #{cbam_pallas.2} parent=1 // pred_fallthru
      _
    %2055 = vsyncpa [#allocation3], 1

</llo_original>
